<compile_context>
chip_gen: v7x
topology: tpu7x:2x2x1
jax: 0.10.0
libtpu: 0.0.40
codegen_flags: <defaults>
</compile_context>

<pallas_src>
import jax
import jax.numpy as jnp
from jax import lax
from jax.experimental import pallas as pl
from jax.experimental.pallas import tpu as pltpu


# ----------------------------- fused forward kernel -----------------------------
def _lstm_cell(gates, h_prev, c_prev, mask, H):
    """All-f32 gate math (v5e has no bf16 VPU/EUP); mask [B,1] broadcasts over H."""
    i_g = jax.nn.sigmoid(gates[:, 0:H])
    f_g = jax.nn.sigmoid(gates[:, H:2 * H])
    g_g = jnp.tanh(gates[:, 2 * H:3 * H])
    o_g = jax.nn.sigmoid(gates[:, 3 * H:4 * H])
    c_new = f_g * c_prev + i_g * g_g
    h_new = o_g * jnp.tanh(c_new)
    h = jnp.where(mask, h_new, h_prev)
    c = jnp.where(mask, c_new, c_prev)
    return h, c


def fused_forward_kernel(
        # VMEM inputs
        ctok_ref, rtok_ref, clen_ref, rlen_ref, csi_ref, rsi_ref,
        emb_ref, wih_c_ref, whh_c_ref, b_c_ref, wih_r_ref, whh_r_ref, b_r_ref,
        pooled_ref, wimg_ref, bimg_ref, bfc_ref,
        # HBM (pl.ANY) inputs: DMA'd manually so their transfer overlaps the recurrence
        wfc_hbm, m_hbm,
        # output
        out_ref,
        # scratch
        gx_c_ref, gx_r_ref, wfc_vmem, m_vmem, dma_sems):
    f32 = jnp.float32
    bf16 = jnp.bfloat16

    TB = ctok_ref.shape[0]
    B = clen_ref.shape[0]
    T = TB // B
    V = emb_ref.shape[0]
    H = whh_c_ref.shape[0]

    # ---- kick off DMAs of the late-used fusion-head weights; wait just before use ----
    cp_wfc = pltpu.make_async_copy(wfc_hbm, wfc_vmem, dma_sems.at[0])
    cp_m = pltpu.make_async_copy(m_hbm, m_vmem, dma_sems.at[1])
    cp_wfc.start()
    cp_m.start()

    # ---- embedding lookup as a one-hot MXU matmul (small-V special case) ----
    # TODO(synk): for realistic vocab sizes replace with a scalar-prefetched row gather
    #             (PrefetchScalarGridSpec + pl.Element / manual DMA); the O(T*B*V) compares and
    #             the resident [V,E] table only make sense at tiny V.
    vocab_iota = lax.broadcasted_iota(jnp.int32, (TB, V), 1)
    onehot_c = (ctok_ref[...] == vocab_iota).astype(bf16)            # [T*B, V]
    onehot_r = (rtok_ref[...] == vocab_iota).astype(bf16)
    emb = emb_ref[...]                                               # [V, E] bf16
    x_c = jnp.dot(onehot_c, emb, preferred_element_type=f32).astype(bf16)   # [T*B, E]
    x_r = jnp.dot(onehot_r, emb, preferred_element_type=f32).astype(bf16)

    # ---- hoisted input projections, staged in VMEM scratch (keeps unrolled loop spill-free) ----
    gx_c_ref[...] = jnp.dot(x_c, wih_c_ref[...], preferred_element_type=f32) + b_c_ref[...]
    gx_r_ref[...] = jnp.dot(x_r, wih_r_ref[...], preferred_element_type=f32) + b_r_ref[...]

    whh_c = whh_c_ref[...]                                           # [H, 4H] bf16
    whh_r = whh_r_ref[...]
    lens_c = clen_ref[...]                                           # [B, 1] int32
    lens_r = rlen_ref[...]

    h_c = jnp.zeros((B, H), f32)
    c_c = jnp.zeros((B, H), f32)
    h_r = jnp.zeros((B, H), f32)
    c_r = jnp.zeros((B, H), f32)

    # ---- fully unrolled (static T), interleaved recurrences: bf16 h@W_hh on MXU + f32 gates ----
    for t in range(T):
        g_c = gx_c_ref[t * B:(t + 1) * B, :] + jnp.dot(
            h_c.astype(bf16), whh_c, preferred_element_type=f32)
        g_r = gx_r_ref[t * B:(t + 1) * B, :] + jnp.dot(
            h_r.astype(bf16), whh_r, preferred_element_type=f32)
        h_c, c_c = _lstm_cell(g_c, h_c, c_c, t < lens_c, H)
        h_r, c_r = _lstm_cell(g_r, h_r, c_r, t < lens_r, H)

    # ---- csi / rsi unsort as tiny permutation matmuls (f32; replaces an XLA scatter) ----
    # sorted_c[csi[i]] = h_c[i]  <=>  sorted_c = P @ h_c with P[j, i] = (csi[i] == j)
    row_iota = lax.broadcasted_iota(jnp.int32, (B, B), 0)
    perm_c = (row_iota == csi_ref[...]).astype(f32)                  # [B, B]
    perm_r = (row_iota == rsi_ref[...]).astype(f32)
    sorted_c = jnp.dot(perm_c, h_c, preferred_element_type=f32)      # [B, H]
    sorted_r = jnp.dot(perm_r, h_r, preferred_element_type=f32)

    # ---- image head: mean-pooled features @ original [C, H] weight (no repeated weight) ----
    img_feat = jnp.dot(pooled_ref[...], wimg_ref[...],
                       preferred_element_type=f32) + bimg_ref[...]   # [B, H] f32

    # ---- concat fusion head: one [B, 2H] @ [2H, H] dot, then @M, bmm-style score, sigmoid ----
    cp_wfc.wait()
    cp_m.wait()
    cat = jnp.concatenate([sorted_c, img_feat], axis=1).astype(bf16)     # [B, 2H]
    z = jnp.dot(cat, wfc_vmem[...], preferred_element_type=f32) + bfc_ref[...]
    ci = jnp.dot(z.astype(bf16), m_vmem[...], preferred_element_type=f32)  # [B, H]
    score = jnp.sum(ci * sorted_r, axis=-1, keepdims=True)               # [B, 1]
    out_ref[...] = jax.nn.sigmoid(score)


# ----------------------------- wrapper (single pallas_call, no grid) -----------------------------
@jax.jit
def text_image_lstm_encoder_forward(params, contexts, contexts_len, csi,
                                    images, responses, responses_len, rsi):
    B, T = contexts.shape
    wih_c, whh_c, b_c = params["ctx_lstm"]
    wih_r, whh_r, b_r = params["rsp_lstm"]
    w_img, b_img = params["img"]
    H = whh_c.shape[0]
    _, C, Hs, Ws = images.shape
    bf16 = jnp.bfloat16

    # time-major flattened token ids so gates_x rows are grouped per timestep (row = t*B + b)
    ctok = contexts.T.reshape(T * B, 1).astype(jnp.int32)
    rtok = responses.T.reshape(T * B, 1).astype(jnp.int32)
    clen = contexts_len.reshape(B, 1).astype(jnp.int32)
    rlen = responses_len.reshape(B, 1).astype(jnp.int32)
    csi2 = csi.reshape(1, B).astype(jnp.int32)
    rsi2 = rsi.reshape(1, B).astype(jnp.int32)

    # Spatial mean-pool: a tiny XLA reduce inside the same jit. The kernel then applies the
    # original [C, H] projection, so no row-repeated [C*S, H] weight is ever materialised.
    pooled = images.reshape(B, C, Hs * Ws).mean(-1)                  # [B, C] f32

    # bf16 MXU operands (halves weight DMA bytes); accumulation + gate math stay f32 in-kernel.
    emb_b = params["emb"].astype(bf16)
    wih_c_b, whh_c_b = wih_c.astype(bf16), whh_c.astype(bf16)
    wih_r_b, whh_r_b = wih_r.astype(bf16), whh_r.astype(bf16)
    wfc_b = params["w_fc"].astype(bf16)
    m_b = params["M"].astype(bf16)

    vmem_operands = (ctok, rtok, clen, rlen, csi2, rsi2, emb_b,
                     wih_c_b, whh_c_b, b_c, wih_r_b, whh_r_b, b_r,
                     pooled, w_img, b_img, params["b_fc"])
    hbm_operands = (wfc_b, m_b)          # late-used: manual DMA overlaps with the recurrence

    vmem_spec = pl.BlockSpec(memory_space=pltpu.MemorySpace.VMEM)
    hbm_spec = pl.BlockSpec(memory_space=pl.ANY)

    return pl.pallas_call(
        fused_forward_kernel,
        out_shape=jax.ShapeDtypeStruct((B, 1), jnp.float32),
        in_specs=[vmem_spec] * len(vmem_operands) + [hbm_spec] * len(hbm_operands),
        out_specs=vmem_spec,
        scratch_shapes=[
            pltpu.VMEM((T * B, 4 * H), jnp.float32),    # gx_c staging (spill-free recurrence)
            pltpu.VMEM((T * B, 4 * H), jnp.float32),    # gx_r staging
            pltpu.VMEM((2 * H, H), bf16),               # W_fc landing buffer
            pltpu.VMEM((H, H), bf16),                   # M landing buffer
            pltpu.SemaphoreType.DMA((2,)),
        ],
    )(*vmem_operands, *hbm_operands)


# ----------------------------- pure-JAX f32 reference -----------------------------
def _lstm_ref(x_bte, lengths, w_ih, w_hh, b):
    B, T, E = x_bte.shape
    H = w_hh.shape[0]
    h = jnp.zeros((B, H), jnp.float32)
    c = jnp.zeros((B, H), jnp.float32)
    for t in range(T):
        gates = x_bte[:, t, :] @ w_ih + h @ w_hh + b
        i_g = jax.nn.sigmoid(gates[:, 0:H])
        f_g = jax.nn.sigmoid(gates[:, H:2 * H])
        g_g = jnp.tanh(gates[:, 2 * H:3 * H])
        o_g = jax.nn.sigmoid(gates[:, 3 * H:4 * H])
        c_new = f_g * c + i_g * g_g
        h_new = o_g * jnp.tanh(c_new)
        mask = (t < lengths)[:, None]
        h = jnp.where(mask, h_new, h)
        c = jnp.where(mask, c_new, c)
    return h


def _forward_ref(params, contexts, contexts_len, csi, images, responses, responses_len, rsi):
    emb = params["emb"]
    c_hidden = _lstm_ref(emb[contexts], contexts_len, *params["ctx_lstm"])
    r_hidden = _lstm_ref(emb[responses], responses_len, *params["rsp_lstm"])
    B, C, Hs, Ws = images.shape
    pooled = images.reshape(B, C, Hs * Ws).mean(-1)
    img_feat = pooled @ params["img"][0] + params["img"][1]
    H = c_hidden.shape[-1]
    sorted_c = jnp.zeros((B, H), jnp.float32).at[csi].set(c_hidden)
    sorted_r = jnp.zeros((B, H), jnp.float32).at[rsi].set(r_hidden)
    z = jnp.concatenate([sorted_c, img_feat], axis=1) @ params["w_fc"] + params["b_fc"]
    ci = z @ params["M"]
    score = jnp.sum(ci * sorted_r, axis=-1, keepdims=True)
    return jax.nn.sigmoid(score)


# ----------------------------- Main -----------------------------
if __name__ == "__main__":
    B, T, E, H, V = 8, 8, 32, 128, 100        # batch, seq, emb_size, hidden_size, vocab_size
    C, Hs, Ws = 4, 16, 16                      # image NCHW dims

    key = jax.random.PRNGKey(0)
    ks = jax.random.split(key, 16)

    def _lstm_params(k1, k2, k3):
        w_ih = 0.1 * jax.random.normal(k1, (E, 4 * H), jnp.float32)
        w_hh = 0.1 * jax.random.normal(k2, (H, 4 * H), jnp.float32)
        b = 0.05 * jax.random.normal(k3, (1, 4 * H), jnp.float32)
        return (w_ih, w_hh, b)

    xavier_std = (2.0 / (H + H)) ** 0.5
    params = {
        "emb": 0.1 * jax.random.normal(ks[0], (V, E), jnp.float32),        # id_to_vec embedding
        "ctx_lstm": _lstm_params(ks[1], ks[2], ks[3]),
        "rsp_lstm": _lstm_params(ks[4], ks[5], ks[6]),
        "img": (0.1 * jax.random.normal(ks[7], (C, H), jnp.float32),       # VGG-head projection
                0.05 * jax.random.normal(ks[8], (1, H), jnp.float32)),
        "w_fc": 0.1 * jax.random.normal(ks[9], (2 * H, H), jnp.float32),   # Linear(2H, H), pre-T
        "b_fc": 0.05 * jax.random.normal(ks[10], (1, H), jnp.float32),
        "M": xavier_std * jax.random.normal(ks[11], (H, H), jnp.float32),  # xavier_normal_
    }

    contexts = jax.random.randint(ks[12], (B, T), 0, V, dtype=jnp.int32)
    responses = jax.random.randint(ks[13], (B, T), 0, V, dtype=jnp.int32)
    contexts_len = jax.random.randint(ks[14], (B,), 1, T + 1, dtype=jnp.int32)
    responses_len = jax.random.randint(ks[15], (B,), 1, T + 1, dtype=jnp.int32)
    csi = jax.random.permutation(jax.random.PRNGKey(1), B).astype(jnp.int32)
    rsi = jax.random.permutation(jax.random.PRNGKey(2), B).astype(jnp.int32)
    images = jax.random.normal(jax.random.PRNGKey(3), (B, C, Hs, Ws), jnp.float32)

    prob = text_image_lstm_encoder_forward(params, contexts, contexts_len, csi,
                                           images, responses, responses_len, rsi)
    prob = jax.block_until_ready(prob)
    assert prob.shape == (B, 1)

    ref = _forward_ref(params, contexts, contexts_len, csi,
                       images, responses, responses_len, rsi)
    # bf16 matmul operands (f32 accumulation / f32 gate math) vs. pure-f32 reference.
    assert jnp.allclose(prob, ref, atol=2e-2, rtol=2e-2), (prob, ref)

    print("KERNEL_OK")
</pallas_src>

<mosaic_0001>
module attributes {stable_mosaic.version = 11 : i64} {
  func.func @fused_forward_kernel(%arg0: memref<64x1xi32, #tpu.memory_space<vmem>>, %arg1: memref<64x1xi32, #tpu.memory_space<vmem>>, %arg2: memref<8x1xi32, #tpu.memory_space<vmem>>, %arg3: memref<8x1xi32, #tpu.memory_space<vmem>>, %arg4: memref<1x8xi32, #tpu.memory_space<vmem>>, %arg5: memref<1x8xi32, #tpu.memory_space<vmem>>, %arg6: memref<100x32xbf16, #tpu.memory_space<vmem>>, %arg7: memref<32x512xbf16, #tpu.memory_space<vmem>>, %arg8: memref<128x512xbf16, #tpu.memory_space<vmem>>, %arg9: memref<1x512xf32, #tpu.memory_space<vmem>>, %arg10: memref<32x512xbf16, #tpu.memory_space<vmem>>, %arg11: memref<128x512xbf16, #tpu.memory_space<vmem>>, %arg12: memref<1x512xf32, #tpu.memory_space<vmem>>, %arg13: memref<8x4xf32, #tpu.memory_space<vmem>>, %arg14: memref<4x128xf32, #tpu.memory_space<vmem>>, %arg15: memref<1x128xf32, #tpu.memory_space<vmem>>, %arg16: memref<1x128xf32, #tpu.memory_space<vmem>>, %arg17: memref<256x128xbf16, #tpu.memory_space<any>>, %arg18: memref<128x128xbf16, #tpu.memory_space<any>>, %arg19: memref<8x1xf32, #tpu.memory_space<vmem>>, %arg20: memref<64x512xf32, #tpu.memory_space<vmem>>, %arg21: memref<64x512xf32, #tpu.memory_space<vmem>>, %arg22: memref<256x128xbf16, #tpu.memory_space<vmem>>, %arg23: memref<128x128xbf16, #tpu.memory_space<vmem>>, %arg24: memref<2x!tpu.dma_semaphore, #tpu.memory_space<semaphore_mem>>) attributes {dimension_semantics = [], scalar_prefetch = 0 : i64, scratch_operands = 5 : i64, tpu.core_type = #tpu.core_type<tc>} {
    %c0_i32 = arith.constant 0 : i32
    %0 = tpu.memref_slice %arg24[%c0_i32] : memref<2x!tpu.dma_semaphore, #tpu.memory_space<semaphore_mem>> -> memref<1x!tpu.dma_semaphore, #tpu.memory_space<semaphore_mem>>
    %1 = tpu.memref_squeeze %0 : memref<1x!tpu.dma_semaphore, #tpu.memory_space<semaphore_mem>> -> memref<!tpu.dma_semaphore, #tpu.memory_space<semaphore_mem>>
    tpu.enqueue_dma source(%arg17 : memref<256x128xbf16, #tpu.memory_space<any>>) target(%arg22 : memref<256x128xbf16, #tpu.memory_space<vmem>>) target_semaphore(%1 : memref<!tpu.dma_semaphore, #tpu.memory_space<semaphore_mem>>)
    %c1_i32 = arith.constant 1 : i32
    %2 = tpu.memref_slice %arg24[%c1_i32] : memref<2x!tpu.dma_semaphore, #tpu.memory_space<semaphore_mem>> -> memref<1x!tpu.dma_semaphore, #tpu.memory_space<semaphore_mem>>
    %3 = tpu.memref_squeeze %2 : memref<1x!tpu.dma_semaphore, #tpu.memory_space<semaphore_mem>> -> memref<!tpu.dma_semaphore, #tpu.memory_space<semaphore_mem>>
    tpu.enqueue_dma source(%arg18 : memref<128x128xbf16, #tpu.memory_space<any>>) target(%arg23 : memref<128x128xbf16, #tpu.memory_space<vmem>>) target_semaphore(%3 : memref<!tpu.dma_semaphore, #tpu.memory_space<semaphore_mem>>)
    %4 = tpu.iota {dimensions = array<i32: 1>} : vector<64x100xi32>
    %c0 = arith.constant 0 : index
    %c0_0 = arith.constant 0 : index
    %5 = vector.load %arg0[%c0, %c0_0] : memref<64x1xi32, #tpu.memory_space<vmem>>, vector<64x1xi32>
    %6 = vector.broadcast %5 : vector<64x1xi32> to vector<64x100xi32>
    %7 = arith.cmpi eq, %6, %4 : vector<64x100xi32>
    %8 = arith.extui %7 : vector<64x100xi1> to vector<64x100xi32>
    %9 = arith.sitofp %8 : vector<64x100xi32> to vector<64x100xf32>
    %10 = arith.truncf %9 : vector<64x100xf32> to vector<64x100xbf16>
    %c0_1 = arith.constant 0 : index
    %c0_2 = arith.constant 0 : index
    %11 = vector.load %arg1[%c0_1, %c0_2] : memref<64x1xi32, #tpu.memory_space<vmem>>, vector<64x1xi32>
    %12 = vector.broadcast %11 : vector<64x1xi32> to vector<64x100xi32>
    %13 = arith.cmpi eq, %12, %4 : vector<64x100xi32>
    %14 = arith.extui %13 : vector<64x100xi1> to vector<64x100xi32>
    %15 = arith.sitofp %14 : vector<64x100xi32> to vector<64x100xf32>
    %16 = arith.truncf %15 : vector<64x100xf32> to vector<64x100xbf16>
    %c0_3 = arith.constant 0 : index
    %c0_4 = arith.constant 0 : index
    %17 = vector.load %arg6[%c0_3, %c0_4] : memref<100x32xbf16, #tpu.memory_space<vmem>>, vector<100x32xbf16>
    %cst = arith.constant dense<0.000000e+00> : vector<64x32xf32>
    %18 = tpu.matmul %10, %17, %cst {dimension_numbers = #tpu.dot_dimension_numbers<[1], [0], [0], [1], [0, 0, 1, 1], [], []>} : vector<64x100xbf16>, vector<100x32xbf16>, vector<64x32xf32> -> vector<64x32xf32>
    %19 = arith.truncf %18 : vector<64x32xf32> to vector<64x32xbf16>
    %cst_5 = arith.constant dense<0.000000e+00> : vector<64x32xf32>
    %20 = tpu.matmul %16, %17, %cst_5 {dimension_numbers = #tpu.dot_dimension_numbers<[1], [0], [0], [1], [0, 0, 1, 1], [], []>} : vector<64x100xbf16>, vector<100x32xbf16>, vector<64x32xf32> -> vector<64x32xf32>
    %21 = arith.truncf %20 : vector<64x32xf32> to vector<64x32xbf16>
    %c0_6 = arith.constant 0 : index
    %c0_7 = arith.constant 0 : index
    %22 = vector.load %arg7[%c0_6, %c0_7] : memref<32x512xbf16, #tpu.memory_space<vmem>>, vector<32x512xbf16>
    %cst_8 = arith.constant dense<0.000000e+00> : vector<64x512xf32>
    %23 = tpu.matmul %19, %22, %cst_8 {dimension_numbers = #tpu.dot_dimension_numbers<[1], [0], [0], [1], [0, 0, 1, 1], [], []>} : vector<64x32xbf16>, vector<32x512xbf16>, vector<64x512xf32> -> vector<64x512xf32>
    %c0_9 = arith.constant 0 : index
    %c0_10 = arith.constant 0 : index
    %24 = vector.load %arg9[%c0_9, %c0_10] : memref<1x512xf32, #tpu.memory_space<vmem>>, vector<1x512xf32>
    %25 = vector.broadcast %24 : vector<1x512xf32> to vector<64x512xf32>
    %26 = arith.addf %23, %25 : vector<64x512xf32>
    %c0_11 = arith.constant 0 : index
    %c0_12 = arith.constant 0 : index
    %27 = vector.load %arg20[%c0_11, %c0_12] : memref<64x512xf32, #tpu.memory_space<vmem>>, vector<64x512xf32>
    tpu.vector_store %arg20[%c0_11, %c0_12], %26 {strides = array<i32>} : memref<64x512xf32, #tpu.memory_space<vmem>>, vector<64x512xf32>,
    %c0_13 = arith.constant 0 : index
    %c0_14 = arith.constant 0 : index
    %28 = vector.load %arg10[%c0_13, %c0_14] : memref<32x512xbf16, #tpu.memory_space<vmem>>, vector<32x512xbf16>
    %cst_15 = arith.constant dense<0.000000e+00> : vector<64x512xf32>
    %29 = tpu.matmul %21, %28, %cst_15 {dimension_numbers = #tpu.dot_dimension_numbers<[1], [0], [0], [1], [0, 0, 1, 1], [], []>} : vector<64x32xbf16>, vector<32x512xbf16>, vector<64x512xf32> -> vector<64x512xf32>
    %c0_16 = arith.constant 0 : index
    %c0_17 = arith.constant 0 : index
    %30 = vector.load %arg12[%c0_16, %c0_17] : memref<1x512xf32, #tpu.memory_space<vmem>>, vector<1x512xf32>
    %31 = vector.broadcast %30 : vector<1x512xf32> to vector<64x512xf32>
    %32 = arith.addf %29, %31 : vector<64x512xf32>
    %c0_18 = arith.constant 0 : index
    %c0_19 = arith.constant 0 : index
    %33 = vector.load %arg21[%c0_18, %c0_19] : memref<64x512xf32, #tpu.memory_space<vmem>>, vector<64x512xf32>
    tpu.vector_store %arg21[%c0_18, %c0_19], %32 {strides = array<i32>} : memref<64x512xf32, #tpu.memory_space<vmem>>, vector<64x512xf32>,
    %c0_20 = arith.constant 0 : index
    %c0_21 = arith.constant 0 : index
    %34 = vector.load %arg8[%c0_20, %c0_21] : memref<128x512xbf16, #tpu.memory_space<vmem>>, vector<128x512xbf16>
    %c0_22 = arith.constant 0 : index
    %c0_23 = arith.constant 0 : index
    %35 = vector.load %arg11[%c0_22, %c0_23] : memref<128x512xbf16, #tpu.memory_space<vmem>>, vector<128x512xbf16>
    %c0_24 = arith.constant 0 : index
    %c0_25 = arith.constant 0 : index
    %36 = vector.load %arg2[%c0_24, %c0_25] : memref<8x1xi32, #tpu.memory_space<vmem>>, vector<8x1xi32>
    %c0_26 = arith.constant 0 : index
    %c0_27 = arith.constant 0 : index
    %37 = vector.load %arg3[%c0_26, %c0_27] : memref<8x1xi32, #tpu.memory_space<vmem>>, vector<8x1xi32>
    %cst_28 = arith.constant 0.000000e+00 : f32
    %38 = vector.broadcast %cst_28 : f32 to vector<8x128xf32>
    %cst_29 = arith.constant 0.000000e+00 : f32
    %39 = vector.broadcast %cst_29 : f32 to vector<8x128xf32>
    %cst_30 = arith.constant 0.000000e+00 : f32
    %40 = vector.broadcast %cst_30 : f32 to vector<8x128xf32>
    %cst_31 = arith.constant 0.000000e+00 : f32
    %41 = vector.broadcast %cst_31 : f32 to vector<8x128xf32>
    %c0_32 = arith.constant 0 : index
    %c0_33 = arith.constant 0 : index
    %42 = vector.load %arg20[%c0_32, %c0_33] : memref<64x512xf32, #tpu.memory_space<vmem>>, vector<8x512xf32>
    %43 = arith.truncf %38 : vector<8x128xf32> to vector<8x128xbf16>
    %cst_34 = arith.constant dense<0.000000e+00> : vector<8x512xf32>
    %44 = tpu.matmul %43, %34, %cst_34 {dimension_numbers = #tpu.dot_dimension_numbers<[1], [0], [0], [1], [0, 0, 1, 1], [], []>} : vector<8x128xbf16>, vector<128x512xbf16>, vector<8x512xf32> -> vector<8x512xf32>
    %45 = arith.addf %42, %44 : vector<8x512xf32>
    %c0_35 = arith.constant 0 : index
    %c0_36 = arith.constant 0 : index
    %46 = vector.load %arg21[%c0_35, %c0_36] : memref<64x512xf32, #tpu.memory_space<vmem>>, vector<8x512xf32>
    %47 = arith.truncf %40 : vector<8x128xf32> to vector<8x128xbf16>
    %cst_37 = arith.constant dense<0.000000e+00> : vector<8x512xf32>
    %48 = tpu.matmul %47, %35, %cst_37 {dimension_numbers = #tpu.dot_dimension_numbers<[1], [0], [0], [1], [0, 0, 1, 1], [], []>} : vector<8x128xbf16>, vector<128x512xbf16>, vector<8x512xf32> -> vector<8x512xf32>
    %49 = arith.addf %46, %48 : vector<8x512xf32>
    %c0_i32_38 = arith.constant 0 : i32
    %50 = vector.broadcast %c0_i32_38 : i32 to vector<8x1xi32>
    %51 = arith.cmpi sgt, %36, %50 : vector<8x1xi32>
    %52 = vector.extract_strided_slice %45 {offsets = [0, 0], sizes = [8, 128], strides = [1, 1]} : vector<8x512xf32> to vector<8x128xf32>
    %53 = arith.negf %52 : vector<8x128xf32>
    %54 = math.exp %53 : vector<8x128xf32>
    %cst_39 = arith.constant 1.000000e+00 : f32
    %55 = vector.broadcast %cst_39 : f32 to vector<8x128xf32>
    %56 = arith.addf %55, %54 : vector<8x128xf32>
    %57 = arith.divf %55, %56 : vector<8x128xf32>
    %58 = vector.extract_strided_slice %45 {offsets = [0, 128], sizes = [8, 128], strides = [1, 1]} : vector<8x512xf32> to vector<8x128xf32>
    %59 = arith.negf %58 : vector<8x128xf32>
    %60 = math.exp %59 : vector<8x128xf32>
    %cst_40 = arith.constant 1.000000e+00 : f32
    %61 = vector.broadcast %cst_40 : f32 to vector<8x128xf32>
    %62 = arith.addf %61, %60 : vector<8x128xf32>
    %63 = arith.divf %61, %62 : vector<8x128xf32>
    %64 = vector.extract_strided_slice %45 {offsets = [0, 256], sizes = [8, 128], strides = [1, 1]} : vector<8x512xf32> to vector<8x128xf32>
    %65 = math.tanh %64 : vector<8x128xf32>
    %66 = vector.extract_strided_slice %45 {offsets = [0, 384], sizes = [8, 128], strides = [1, 1]} : vector<8x512xf32> to vector<8x128xf32>
    %67 = arith.negf %66 : vector<8x128xf32>
    %68 = math.exp %67 : vector<8x128xf32>
    %cst_41 = arith.constant 1.000000e+00 : f32
    %69 = vector.broadcast %cst_41 : f32 to vector<8x128xf32>
    %70 = arith.addf %69, %68 : vector<8x128xf32>
    %71 = arith.divf %69, %70 : vector<8x128xf32>
    %72 = arith.mulf %63, %39 : vector<8x128xf32>
    %73 = arith.mulf %57, %65 : vector<8x128xf32>
    %74 = arith.addf %72, %73 : vector<8x128xf32>
    %75 = math.tanh %74 : vector<8x128xf32>
    %76 = arith.mulf %71, %75 : vector<8x128xf32>
    %77 = vector.shape_cast %51 : vector<8x1xi1> to vector<8x1xi1>
    %78 = vector.broadcast %77 : vector<8x1xi1> to vector<8x128xi1>
    %79 = arith.select %78, %76, %38 : vector<8x128xi1>, vector<8x128xf32>
    %80 = vector.shape_cast %51 : vector<8x1xi1> to vector<8x1xi1>
    %81 = vector.broadcast %80 : vector<8x1xi1> to vector<8x128xi1>
    %82 = arith.select %81, %74, %39 : vector<8x128xi1>, vector<8x128xf32>
    %c0_i32_42 = arith.constant 0 : i32
    %83 = vector.broadcast %c0_i32_42 : i32 to vector<8x1xi32>
    %84 = arith.cmpi sgt, %37, %83 : vector<8x1xi32>
    %85 = vector.extract_strided_slice %49 {offsets = [0, 0], sizes = [8, 128], strides = [1, 1]} : vector<8x512xf32> to vector<8x128xf32>
    %86 = arith.negf %85 : vector<8x128xf32>
    %87 = math.exp %86 : vector<8x128xf32>
    %cst_43 = arith.constant 1.000000e+00 : f32
    %88 = vector.broadcast %cst_43 : f32 to vector<8x128xf32>
    %89 = arith.addf %88, %87 : vector<8x128xf32>
    %90 = arith.divf %88, %89 : vector<8x128xf32>
    %91 = vector.extract_strided_slice %49 {offsets = [0, 128], sizes = [8, 128], strides = [1, 1]} : vector<8x512xf32> to vector<8x128xf32>
    %92 = arith.negf %91 : vector<8x128xf32>
    %93 = math.exp %92 : vector<8x128xf32>
    %cst_44 = arith.constant 1.000000e+00 : f32
    %94 = vector.broadcast %cst_44 : f32 to vector<8x128xf32>
    %95 = arith.addf %94, %93 : vector<8x128xf32>
    %96 = arith.divf %94, %95 : vector<8x128xf32>
    %97 = vector.extract_strided_slice %49 {offsets = [0, 256], sizes = [8, 128], strides = [1, 1]} : vector<8x512xf32> to vector<8x128xf32>
    %98 = math.tanh %97 : vector<8x128xf32>
    %99 = vector.extract_strided_slice %49 {offsets = [0, 384], sizes = [8, 128], strides = [1, 1]} : vector<8x512xf32> to vector<8x128xf32>
    %100 = arith.negf %99 : vector<8x128xf32>
    %101 = math.exp %100 : vector<8x128xf32>
    %cst_45 = arith.constant 1.000000e+00 : f32
    %102 = vector.broadcast %cst_45 : f32 to vector<8x128xf32>
    %103 = arith.addf %102, %101 : vector<8x128xf32>
    %104 = arith.divf %102, %103 : vector<8x128xf32>
    %105 = arith.mulf %96, %41 : vector<8x128xf32>
    %106 = arith.mulf %90, %98 : vector<8x128xf32>
    %107 = arith.addf %105, %106 : vector<8x128xf32>
    %108 = math.tanh %107 : vector<8x128xf32>
    %109 = arith.mulf %104, %108 : vector<8x128xf32>
    %110 = vector.shape_cast %84 : vector<8x1xi1> to vector<8x1xi1>
    %111 = vector.broadcast %110 : vector<8x1xi1> to vector<8x128xi1>
    %112 = arith.select %111, %109, %40 : vector<8x128xi1>, vector<8x128xf32>
    %113 = vector.shape_cast %84 : vector<8x1xi1> to vector<8x1xi1>
    %114 = vector.broadcast %113 : vector<8x1xi1> to vector<8x128xi1>
    %115 = arith.select %114, %107, %41 : vector<8x128xi1>, vector<8x128xf32>
    %c8 = arith.constant 8 : index
    %c0_46 = arith.constant 0 : index
    %116 = vector.load %arg20[%c8, %c0_46] : memref<64x512xf32, #tpu.memory_space<vmem>>, vector<8x512xf32>
    %117 = arith.truncf %79 : vector<8x128xf32> to vector<8x128xbf16>
    %cst_47 = arith.constant dense<0.000000e+00> : vector<8x512xf32>
    %118 = tpu.matmul %117, %34, %cst_47 {dimension_numbers = #tpu.dot_dimension_numbers<[1], [0], [0], [1], [0, 0, 1, 1], [], []>} : vector<8x128xbf16>, vector<128x512xbf16>, vector<8x512xf32> -> vector<8x512xf32>
    %119 = arith.addf %116, %118 : vector<8x512xf32>
    %c8_48 = arith.constant 8 : index
    %c0_49 = arith.constant 0 : index
    %120 = vector.load %arg21[%c8_48, %c0_49] : memref<64x512xf32, #tpu.memory_space<vmem>>, vector<8x512xf32>
    %121 = arith.truncf %112 : vector<8x128xf32> to vector<8x128xbf16>
    %cst_50 = arith.constant dense<0.000000e+00> : vector<8x512xf32>
    %122 = tpu.matmul %121, %35, %cst_50 {dimension_numbers = #tpu.dot_dimension_numbers<[1], [0], [0], [1], [0, 0, 1, 1], [], []>} : vector<8x128xbf16>, vector<128x512xbf16>, vector<8x512xf32> -> vector<8x512xf32>
    %123 = arith.addf %120, %122 : vector<8x512xf32>
    %c1_i32_51 = arith.constant 1 : i32
    %124 = vector.broadcast %c1_i32_51 : i32 to vector<8x1xi32>
    %125 = arith.cmpi sgt, %36, %124 : vector<8x1xi32>
    %126 = vector.extract_strided_slice %119 {offsets = [0, 0], sizes = [8, 128], strides = [1, 1]} : vector<8x512xf32> to vector<8x128xf32>
    %127 = arith.negf %126 : vector<8x128xf32>
    %128 = math.exp %127 : vector<8x128xf32>
    %cst_52 = arith.constant 1.000000e+00 : f32
    %129 = vector.broadcast %cst_52 : f32 to vector<8x128xf32>
    %130 = arith.addf %129, %128 : vector<8x128xf32>
    %131 = arith.divf %129, %130 : vector<8x128xf32>
    %132 = vector.extract_strided_slice %119 {offsets = [0, 128], sizes = [8, 128], strides = [1, 1]} : vector<8x512xf32> to vector<8x128xf32>
    %133 = arith.negf %132 : vector<8x128xf32>
    %134 = math.exp %133 : vector<8x128xf32>
    %cst_53 = arith.constant 1.000000e+00 : f32
    %135 = vector.broadcast %cst_53 : f32 to vector<8x128xf32>
    %136 = arith.addf %135, %134 : vector<8x128xf32>
    %137 = arith.divf %135, %136 : vector<8x128xf32>
    %138 = vector.extract_strided_slice %119 {offsets = [0, 256], sizes = [8, 128], strides = [1, 1]} : vector<8x512xf32> to vector<8x128xf32>
    %139 = math.tanh %138 : vector<8x128xf32>
    %140 = vector.extract_strided_slice %119 {offsets = [0, 384], sizes = [8, 128], strides = [1, 1]} : vector<8x512xf32> to vector<8x128xf32>
    %141 = arith.negf %140 : vector<8x128xf32>
    %142 = math.exp %141 : vector<8x128xf32>
    %cst_54 = arith.constant 1.000000e+00 : f32
    %143 = vector.broadcast %cst_54 : f32 to vector<8x128xf32>
    %144 = arith.addf %143, %142 : vector<8x128xf32>
    %145 = arith.divf %143, %144 : vector<8x128xf32>
    %146 = arith.mulf %137, %82 : vector<8x128xf32>
    %147 = arith.mulf %131, %139 : vector<8x128xf32>
    %148 = arith.addf %146, %147 : vector<8x128xf32>
    %149 = math.tanh %148 : vector<8x128xf32>
    %150 = arith.mulf %145, %149 : vector<8x128xf32>
    %151 = vector.shape_cast %125 : vector<8x1xi1> to vector<8x1xi1>
    %152 = vector.broadcast %151 : vector<8x1xi1> to vector<8x128xi1>
    %153 = arith.select %152, %150, %79 : vector<8x128xi1>, vector<8x128xf32>
    %154 = vector.shape_cast %125 : vector<8x1xi1> to vector<8x1xi1>
    %155 = vector.broadcast %154 : vector<8x1xi1> to vector<8x128xi1>
    %156 = arith.select %155, %148, %82 : vector<8x128xi1>, vector<8x128xf32>
    %c1_i32_55 = arith.constant 1 : i32
    %157 = vector.broadcast %c1_i32_55 : i32 to vector<8x1xi32>
    %158 = arith.cmpi sgt, %37, %157 : vector<8x1xi32>
    %159 = vector.extract_strided_slice %123 {offsets = [0, 0], sizes = [8, 128], strides = [1, 1]} : vector<8x512xf32> to vector<8x128xf32>
    %160 = arith.negf %159 : vector<8x128xf32>
    %161 = math.exp %160 : vector<8x128xf32>
    %cst_56 = arith.constant 1.000000e+00 : f32
    %162 = vector.broadcast %cst_56 : f32 to vector<8x128xf32>
    %163 = arith.addf %162, %161 : vector<8x128xf32>
    %164 = arith.divf %162, %163 : vector<8x128xf32>
    %165 = vector.extract_strided_slice %123 {offsets = [0, 128], sizes = [8, 128], strides = [1, 1]} : vector<8x512xf32> to vector<8x128xf32>
    %166 = arith.negf %165 : vector<8x128xf32>
    %167 = math.exp %166 : vector<8x128xf32>
    %cst_57 = arith.constant 1.000000e+00 : f32
    %168 = vector.broadcast %cst_57 : f32 to vector<8x128xf32>
    %169 = arith.addf %168, %167 : vector<8x128xf32>
    %170 = arith.divf %168, %169 : vector<8x128xf32>
    %171 = vector.extract_strided_slice %123 {offsets = [0, 256], sizes = [8, 128], strides = [1, 1]} : vector<8x512xf32> to vector<8x128xf32>
    %172 = math.tanh %171 : vector<8x128xf32>
    %173 = vector.extract_strided_slice %123 {offsets = [0, 384], sizes = [8, 128], strides = [1, 1]} : vector<8x512xf32> to vector<8x128xf32>
    %174 = arith.negf %173 : vector<8x128xf32>
    %175 = math.exp %174 : vector<8x128xf32>
    %cst_58 = arith.constant 1.000000e+00 : f32
    %176 = vector.broadcast %cst_58 : f32 to vector<8x128xf32>
    %177 = arith.addf %176, %175 : vector<8x128xf32>
    %178 = arith.divf %176, %177 : vector<8x128xf32>
    %179 = arith.mulf %170, %115 : vector<8x128xf32>
    %180 = arith.mulf %164, %172 : vector<8x128xf32>
    %181 = arith.addf %179, %180 : vector<8x128xf32>
    %182 = math.tanh %181 : vector<8x128xf32>
    %183 = arith.mulf %178, %182 : vector<8x128xf32>
    %184 = vector.shape_cast %158 : vector<8x1xi1> to vector<8x1xi1>
    %185 = vector.broadcast %184 : vector<8x1xi1> to vector<8x128xi1>
    %186 = arith.select %185, %183, %112 : vector<8x128xi1>, vector<8x128xf32>
    %187 = vector.shape_cast %158 : vector<8x1xi1> to vector<8x1xi1>
    %188 = vector.broadcast %187 : vector<8x1xi1> to vector<8x128xi1>
    %189 = arith.select %188, %181, %115 : vector<8x128xi1>, vector<8x128xf32>
    %c16 = arith.constant 16 : index
    %c0_59 = arith.constant 0 : index
    %190 = vector.load %arg20[%c16, %c0_59] : memref<64x512xf32, #tpu.memory_space<vmem>>, vector<8x512xf32>
    %191 = arith.truncf %153 : vector<8x128xf32> to vector<8x128xbf16>
    %cst_60 = arith.constant dense<0.000000e+00> : vector<8x512xf32>
    %192 = tpu.matmul %191, %34, %cst_60 {dimension_numbers = #tpu.dot_dimension_numbers<[1], [0], [0], [1], [0, 0, 1, 1], [], []>} : vector<8x128xbf16>, vector<128x512xbf16>, vector<8x512xf32> -> vector<8x512xf32>
    %193 = arith.addf %190, %192 : vector<8x512xf32>
    %c16_61 = arith.constant 16 : index
    %c0_62 = arith.constant 0 : index
    %194 = vector.load %arg21[%c16_61, %c0_62] : memref<64x512xf32, #tpu.memory_space<vmem>>, vector<8x512xf32>
    %195 = arith.truncf %186 : vector<8x128xf32> to vector<8x128xbf16>
    %cst_63 = arith.constant dense<0.000000e+00> : vector<8x512xf32>
    %196 = tpu.matmul %195, %35, %cst_63 {dimension_numbers = #tpu.dot_dimension_numbers<[1], [0], [0], [1], [0, 0, 1, 1], [], []>} : vector<8x128xbf16>, vector<128x512xbf16>, vector<8x512xf32> -> vector<8x512xf32>
    %197 = arith.addf %194, %196 : vector<8x512xf32>
    %c2_i32 = arith.constant 2 : i32
    %198 = vector.broadcast %c2_i32 : i32 to vector<8x1xi32>
    %199 = arith.cmpi sgt, %36, %198 : vector<8x1xi32>
    %200 = vector.extract_strided_slice %193 {offsets = [0, 0], sizes = [8, 128], strides = [1, 1]} : vector<8x512xf32> to vector<8x128xf32>
    %201 = arith.negf %200 : vector<8x128xf32>
    %202 = math.exp %201 : vector<8x128xf32>
    %cst_64 = arith.constant 1.000000e+00 : f32
    %203 = vector.broadcast %cst_64 : f32 to vector<8x128xf32>
    %204 = arith.addf %203, %202 : vector<8x128xf32>
    %205 = arith.divf %203, %204 : vector<8x128xf32>
    %206 = vector.extract_strided_slice %193 {offsets = [0, 128], sizes = [8, 128], strides = [1, 1]} : vector<8x512xf32> to vector<8x128xf32>
    %207 = arith.negf %206 : vector<8x128xf32>
    %208 = math.exp %207 : vector<8x128xf32>
    %cst_65 = arith.constant 1.000000e+00 : f32
    %209 = vector.broadcast %cst_65 : f32 to vector<8x128xf32>
    %210 = arith.addf %209, %208 : vector<8x128xf32>
    %211 = arith.divf %209, %210 : vector<8x128xf32>
    %212 = vector.extract_strided_slice %193 {offsets = [0, 256], sizes = [8, 128], strides = [1, 1]} : vector<8x512xf32> to vector<8x128xf32>
    %213 = math.tanh %212 : vector<8x128xf32>
    %214 = vector.extract_strided_slice %193 {offsets = [0, 384], sizes = [8, 128], strides = [1, 1]} : vector<8x512xf32> to vector<8x128xf32>
    %215 = arith.negf %214 : vector<8x128xf32>
    %216 = math.exp %215 : vector<8x128xf32>
    %cst_66 = arith.constant 1.000000e+00 : f32
    %217 = vector.broadcast %cst_66 : f32 to vector<8x128xf32>
    %218 = arith.addf %217, %216 : vector<8x128xf32>
    %219 = arith.divf %217, %218 : vector<8x128xf32>
    %220 = arith.mulf %211, %156 : vector<8x128xf32>
    %221 = arith.mulf %205, %213 : vector<8x128xf32>
    %222 = arith.addf %220, %221 : vector<8x128xf32>
    %223 = math.tanh %222 : vector<8x128xf32>
    %224 = arith.mulf %219, %223 : vector<8x128xf32>
    %225 = vector.shape_cast %199 : vector<8x1xi1> to vector<8x1xi1>
    %226 = vector.broadcast %225 : vector<8x1xi1> to vector<8x128xi1>
    %227 = arith.select %226, %224, %153 : vector<8x128xi1>, vector<8x128xf32>
    %228 = vector.shape_cast %199 : vector<8x1xi1> to vector<8x1xi1>
    %229 = vector.broadcast %228 : vector<8x1xi1> to vector<8x128xi1>
    %230 = arith.select %229, %222, %156 : vector<8x128xi1>, vector<8x128xf32>
    %c2_i32_67 = arith.constant 2 : i32
    %231 = vector.broadcast %c2_i32_67 : i32 to vector<8x1xi32>
    %232 = arith.cmpi sgt, %37, %231 : vector<8x1xi32>
    %233 = vector.extract_strided_slice %197 {offsets = [0, 0], sizes = [8, 128], strides = [1, 1]} : vector<8x512xf32> to vector<8x128xf32>
    %234 = arith.negf %233 : vector<8x128xf32>
    %235 = math.exp %234 : vector<8x128xf32>
    %cst_68 = arith.constant 1.000000e+00 : f32
    %236 = vector.broadcast %cst_68 : f32 to vector<8x128xf32>
    %237 = arith.addf %236, %235 : vector<8x128xf32>
    %238 = arith.divf %236, %237 : vector<8x128xf32>
    %239 = vector.extract_strided_slice %197 {offsets = [0, 128], sizes = [8, 128], strides = [1, 1]} : vector<8x512xf32> to vector<8x128xf32>
    %240 = arith.negf %239 : vector<8x128xf32>
    %241 = math.exp %240 : vector<8x128xf32>
    %cst_69 = arith.constant 1.000000e+00 : f32
    %242 = vector.broadcast %cst_69 : f32 to vector<8x128xf32>
    %243 = arith.addf %242, %241 : vector<8x128xf32>
    %244 = arith.divf %242, %243 : vector<8x128xf32>
    %245 = vector.extract_strided_slice %197 {offsets = [0, 256], sizes = [8, 128], strides = [1, 1]} : vector<8x512xf32> to vector<8x128xf32>
    %246 = math.tanh %245 : vector<8x128xf32>
    %247 = vector.extract_strided_slice %197 {offsets = [0, 384], sizes = [8, 128], strides = [1, 1]} : vector<8x512xf32> to vector<8x128xf32>
    %248 = arith.negf %247 : vector<8x128xf32>
    %249 = math.exp %248 : vector<8x128xf32>
    %cst_70 = arith.constant 1.000000e+00 : f32
    %250 = vector.broadcast %cst_70 : f32 to vector<8x128xf32>
    %251 = arith.addf %250, %249 : vector<8x128xf32>
    %252 = arith.divf %250, %251 : vector<8x128xf32>
    %253 = arith.mulf %244, %189 : vector<8x128xf32>
    %254 = arith.mulf %238, %246 : vector<8x128xf32>
    %255 = arith.addf %253, %254 : vector<8x128xf32>
    %256 = math.tanh %255 : vector<8x128xf32>
    %257 = arith.mulf %252, %256 : vector<8x128xf32>
    %258 = vector.shape_cast %232 : vector<8x1xi1> to vector<8x1xi1>
    %259 = vector.broadcast %258 : vector<8x1xi1> to vector<8x128xi1>
    %260 = arith.select %259, %257, %186 : vector<8x128xi1>, vector<8x128xf32>
    %261 = vector.shape_cast %232 : vector<8x1xi1> to vector<8x1xi1>
    %262 = vector.broadcast %261 : vector<8x1xi1> to vector<8x128xi1>
    %263 = arith.select %262, %255, %189 : vector<8x128xi1>, vector<8x128xf32>
    %c24 = arith.constant 24 : index
    %c0_71 = arith.constant 0 : index
    %264 = vector.load %arg20[%c24, %c0_71] : memref<64x512xf32, #tpu.memory_space<vmem>>, vector<8x512xf32>
    %265 = arith.truncf %227 : vector<8x128xf32> to vector<8x128xbf16>
    %cst_72 = arith.constant dense<0.000000e+00> : vector<8x512xf32>
    %266 = tpu.matmul %265, %34, %cst_72 {dimension_numbers = #tpu.dot_dimension_numbers<[1], [0], [0], [1], [0, 0, 1, 1], [], []>} : vector<8x128xbf16>, vector<128x512xbf16>, vector<8x512xf32> -> vector<8x512xf32>
    %267 = arith.addf %264, %266 : vector<8x512xf32>
    %c24_73 = arith.constant 24 : index
    %c0_74 = arith.constant 0 : index
    %268 = vector.load %arg21[%c24_73, %c0_74] : memref<64x512xf32, #tpu.memory_space<vmem>>, vector<8x512xf32>
    %269 = arith.truncf %260 : vector<8x128xf32> to vector<8x128xbf16>
    %cst_75 = arith.constant dense<0.000000e+00> : vector<8x512xf32>
    %270 = tpu.matmul %269, %35, %cst_75 {dimension_numbers = #tpu.dot_dimension_numbers<[1], [0], [0], [1], [0, 0, 1, 1], [], []>} : vector<8x128xbf16>, vector<128x512xbf16>, vector<8x512xf32> -> vector<8x512xf32>
    %271 = arith.addf %268, %270 : vector<8x512xf32>
    %c3_i32 = arith.constant 3 : i32
    %272 = vector.broadcast %c3_i32 : i32 to vector<8x1xi32>
    %273 = arith.cmpi sgt, %36, %272 : vector<8x1xi32>
    %274 = vector.extract_strided_slice %267 {offsets = [0, 0], sizes = [8, 128], strides = [1, 1]} : vector<8x512xf32> to vector<8x128xf32>
    %275 = arith.negf %274 : vector<8x128xf32>
    %276 = math.exp %275 : vector<8x128xf32>
    %cst_76 = arith.constant 1.000000e+00 : f32
    %277 = vector.broadcast %cst_76 : f32 to vector<8x128xf32>
    %278 = arith.addf %277, %276 : vector<8x128xf32>
    %279 = arith.divf %277, %278 : vector<8x128xf32>
    %280 = vector.extract_strided_slice %267 {offsets = [0, 128], sizes = [8, 128], strides = [1, 1]} : vector<8x512xf32> to vector<8x128xf32>
    %281 = arith.negf %280 : vector<8x128xf32>
    %282 = math.exp %281 : vector<8x128xf32>
    %cst_77 = arith.constant 1.000000e+00 : f32
    %283 = vector.broadcast %cst_77 : f32 to vector<8x128xf32>
    %284 = arith.addf %283, %282 : vector<8x128xf32>
    %285 = arith.divf %283, %284 : vector<8x128xf32>
    %286 = vector.extract_strided_slice %267 {offsets = [0, 256], sizes = [8, 128], strides = [1, 1]} : vector<8x512xf32> to vector<8x128xf32>
    %287 = math.tanh %286 : vector<8x128xf32>
    %288 = vector.extract_strided_slice %267 {offsets = [0, 384], sizes = [8, 128], strides = [1, 1]} : vector<8x512xf32> to vector<8x128xf32>
    %289 = arith.negf %288 : vector<8x128xf32>
    %290 = math.exp %289 : vector<8x128xf32>
    %cst_78 = arith.constant 1.000000e+00 : f32
    %291 = vector.broadcast %cst_78 : f32 to vector<8x128xf32>
    %292 = arith.addf %291, %290 : vector<8x128xf32>
    %293 = arith.divf %291, %292 : vector<8x128xf32>
    %294 = arith.mulf %285, %230 : vector<8x128xf32>
    %295 = arith.mulf %279, %287 : vector<8x128xf32>
    %296 = arith.addf %294, %295 : vector<8x128xf32>
    %297 = math.tanh %296 : vector<8x128xf32>
    %298 = arith.mulf %293, %297 : vector<8x128xf32>
    %299 = vector.shape_cast %273 : vector<8x1xi1> to vector<8x1xi1>
    %300 = vector.broadcast %299 : vector<8x1xi1> to vector<8x128xi1>
    %301 = arith.select %300, %298, %227 : vector<8x128xi1>, vector<8x128xf32>
    %302 = vector.shape_cast %273 : vector<8x1xi1> to vector<8x1xi1>
    %303 = vector.broadcast %302 : vector<8x1xi1> to vector<8x128xi1>
    %304 = arith.select %303, %296, %230 : vector<8x128xi1>, vector<8x128xf32>
    %c3_i32_79 = arith.constant 3 : i32
    %305 = vector.broadcast %c3_i32_79 : i32 to vector<8x1xi32>
    %306 = arith.cmpi sgt, %37, %305 : vector<8x1xi32>
    %307 = vector.extract_strided_slice %271 {offsets = [0, 0], sizes = [8, 128], strides = [1, 1]} : vector<8x512xf32> to vector<8x128xf32>
    %308 = arith.negf %307 : vector<8x128xf32>
    %309 = math.exp %308 : vector<8x128xf32>
    %cst_80 = arith.constant 1.000000e+00 : f32
    %310 = vector.broadcast %cst_80 : f32 to vector<8x128xf32>
    %311 = arith.addf %310, %309 : vector<8x128xf32>
    %312 = arith.divf %310, %311 : vector<8x128xf32>
    %313 = vector.extract_strided_slice %271 {offsets = [0, 128], sizes = [8, 128], strides = [1, 1]} : vector<8x512xf32> to vector<8x128xf32>
    %314 = arith.negf %313 : vector<8x128xf32>
    %315 = math.exp %314 : vector<8x128xf32>
    %cst_81 = arith.constant 1.000000e+00 : f32
    %316 = vector.broadcast %cst_81 : f32 to vector<8x128xf32>
    %317 = arith.addf %316, %315 : vector<8x128xf32>
    %318 = arith.divf %316, %317 : vector<8x128xf32>
    %319 = vector.extract_strided_slice %271 {offsets = [0, 256], sizes = [8, 128], strides = [1, 1]} : vector<8x512xf32> to vector<8x128xf32>
    %320 = math.tanh %319 : vector<8x128xf32>
    %321 = vector.extract_strided_slice %271 {offsets = [0, 384], sizes = [8, 128], strides = [1, 1]} : vector<8x512xf32> to vector<8x128xf32>
    %322 = arith.negf %321 : vector<8x128xf32>
    %323 = math.exp %322 : vector<8x128xf32>
    %cst_82 = arith.constant 1.000000e+00 : f32
    %324 = vector.broadcast %cst_82 : f32 to vector<8x128xf32>
    %325 = arith.addf %324, %323 : vector<8x128xf32>
    %326 = arith.divf %324, %325 : vector<8x128xf32>
    %327 = arith.mulf %318, %263 : vector<8x128xf32>
    %328 = arith.mulf %312, %320 : vector<8x128xf32>
    %329 = arith.addf %327, %328 : vector<8x128xf32>
    %330 = math.tanh %329 : vector<8x128xf32>
    %331 = arith.mulf %326, %330 : vector<8x128xf32>
    %332 = vector.shape_cast %306 : vector<8x1xi1> to vector<8x1xi1>
    %333 = vector.broadcast %332 : vector<8x1xi1> to vector<8x128xi1>
    %334 = arith.select %333, %331, %260 : vector<8x128xi1>, vector<8x128xf32>
    %335 = vector.shape_cast %306 : vector<8x1xi1> to vector<8x1xi1>
    %336 = vector.broadcast %335 : vector<8x1xi1> to vector<8x128xi1>
    %337 = arith.select %336, %329, %263 : vector<8x128xi1>, vector<8x128xf32>
    %c32 = arith.constant 32 : index
    %c0_83 = arith.constant 0 : index
    %338 = vector.load %arg20[%c32, %c0_83] : memref<64x512xf32, #tpu.memory_space<vmem>>, vector<8x512xf32>
    %339 = arith.truncf %301 : vector<8x128xf32> to vector<8x128xbf16>
    %cst_84 = arith.constant dense<0.000000e+00> : vector<8x512xf32>
    %340 = tpu.matmul %339, %34, %cst_84 {dimension_numbers = #tpu.dot_dimension_numbers<[1], [0], [0], [1], [0, 0, 1, 1], [], []>} : vector<8x128xbf16>, vector<128x512xbf16>, vector<8x512xf32> -> vector<8x512xf32>
    %341 = arith.addf %338, %340 : vector<8x512xf32>
    %c32_85 = arith.constant 32 : index
    %c0_86 = arith.constant 0 : index
    %342 = vector.load %arg21[%c32_85, %c0_86] : memref<64x512xf32, #tpu.memory_space<vmem>>, vector<8x512xf32>
    %343 = arith.truncf %334 : vector<8x128xf32> to vector<8x128xbf16>
    %cst_87 = arith.constant dense<0.000000e+00> : vector<8x512xf32>
    %344 = tpu.matmul %343, %35, %cst_87 {dimension_numbers = #tpu.dot_dimension_numbers<[1], [0], [0], [1], [0, 0, 1, 1], [], []>} : vector<8x128xbf16>, vector<128x512xbf16>, vector<8x512xf32> -> vector<8x512xf32>
    %345 = arith.addf %342, %344 : vector<8x512xf32>
    %c4_i32 = arith.constant 4 : i32
    %346 = vector.broadcast %c4_i32 : i32 to vector<8x1xi32>
    %347 = arith.cmpi sgt, %36, %346 : vector<8x1xi32>
    %348 = vector.extract_strided_slice %341 {offsets = [0, 0], sizes = [8, 128], strides = [1, 1]} : vector<8x512xf32> to vector<8x128xf32>
    %349 = arith.negf %348 : vector<8x128xf32>
    %350 = math.exp %349 : vector<8x128xf32>
    %cst_88 = arith.constant 1.000000e+00 : f32
    %351 = vector.broadcast %cst_88 : f32 to vector<8x128xf32>
    %352 = arith.addf %351, %350 : vector<8x128xf32>
    %353 = arith.divf %351, %352 : vector<8x128xf32>
    %354 = vector.extract_strided_slice %341 {offsets = [0, 128], sizes = [8, 128], strides = [1, 1]} : vector<8x512xf32> to vector<8x128xf32>
    %355 = arith.negf %354 : vector<8x128xf32>
    %356 = math.exp %355 : vector<8x128xf32>
    %cst_89 = arith.constant 1.000000e+00 : f32
    %357 = vector.broadcast %cst_89 : f32 to vector<8x128xf32>
    %358 = arith.addf %357, %356 : vector<8x128xf32>
    %359 = arith.divf %357, %358 : vector<8x128xf32>
    %360 = vector.extract_strided_slice %341 {offsets = [0, 256], sizes = [8, 128], strides = [1, 1]} : vector<8x512xf32> to vector<8x128xf32>
    %361 = math.tanh %360 : vector<8x128xf32>
    %362 = vector.extract_strided_slice %341 {offsets = [0, 384], sizes = [8, 128], strides = [1, 1]} : vector<8x512xf32> to vector<8x128xf32>
    %363 = arith.negf %362 : vector<8x128xf32>
    %364 = math.exp %363 : vector<8x128xf32>
    %cst_90 = arith.constant 1.000000e+00 : f32
    %365 = vector.broadcast %cst_90 : f32 to vector<8x128xf32>
    %366 = arith.addf %365, %364 : vector<8x128xf32>
    %367 = arith.divf %365, %366 : vector<8x128xf32>
    %368 = arith.mulf %359, %304 : vector<8x128xf32>
    %369 = arith.mulf %353, %361 : vector<8x128xf32>
    %370 = arith.addf %368, %369 : vector<8x128xf32>
    %371 = math.tanh %370 : vector<8x128xf32>
    %372 = arith.mulf %367, %371 : vector<8x128xf32>
    %373 = vector.shape_cast %347 : vector<8x1xi1> to vector<8x1xi1>
    %374 = vector.broadcast %373 : vector<8x1xi1> to vector<8x128xi1>
    %375 = arith.select %374, %372, %301 : vector<8x128xi1>, vector<8x128xf32>
    %376 = vector.shape_cast %347 : vector<8x1xi1> to vector<8x1xi1>
    %377 = vector.broadcast %376 : vector<8x1xi1> to vector<8x128xi1>
    %378 = arith.select %377, %370, %304 : vector<8x128xi1>, vector<8x128xf32>
    %c4_i32_91 = arith.constant 4 : i32
    %379 = vector.broadcast %c4_i32_91 : i32 to vector<8x1xi32>
    %380 = arith.cmpi sgt, %37, %379 : vector<8x1xi32>
    %381 = vector.extract_strided_slice %345 {offsets = [0, 0], sizes = [8, 128], strides = [1, 1]} : vector<8x512xf32> to vector<8x128xf32>
    %382 = arith.negf %381 : vector<8x128xf32>
    %383 = math.exp %382 : vector<8x128xf32>
    %cst_92 = arith.constant 1.000000e+00 : f32
    %384 = vector.broadcast %cst_92 : f32 to vector<8x128xf32>
    %385 = arith.addf %384, %383 : vector<8x128xf32>
    %386 = arith.divf %384, %385 : vector<8x128xf32>
    %387 = vector.extract_strided_slice %345 {offsets = [0, 128], sizes = [8, 128], strides = [1, 1]} : vector<8x512xf32> to vector<8x128xf32>
    %388 = arith.negf %387 : vector<8x128xf32>
    %389 = math.exp %388 : vector<8x128xf32>
    %cst_93 = arith.constant 1.000000e+00 : f32
    %390 = vector.broadcast %cst_93 : f32 to vector<8x128xf32>
    %391 = arith.addf %390, %389 : vector<8x128xf32>
    %392 = arith.divf %390, %391 : vector<8x128xf32>
    %393 = vector.extract_strided_slice %345 {offsets = [0, 256], sizes = [8, 128], strides = [1, 1]} : vector<8x512xf32> to vector<8x128xf32>
    %394 = math.tanh %393 : vector<8x128xf32>
    %395 = vector.extract_strided_slice %345 {offsets = [0, 384], sizes = [8, 128], strides = [1, 1]} : vector<8x512xf32> to vector<8x128xf32>
    %396 = arith.negf %395 : vector<8x128xf32>
    %397 = math.exp %396 : vector<8x128xf32>
    %cst_94 = arith.constant 1.000000e+00 : f32
    %398 = vector.broadcast %cst_94 : f32 to vector<8x128xf32>
    %399 = arith.addf %398, %397 : vector<8x128xf32>
    %400 = arith.divf %398, %399 : vector<8x128xf32>
    %401 = arith.mulf %392, %337 : vector<8x128xf32>
    %402 = arith.mulf %386, %394 : vector<8x128xf32>
    %403 = arith.addf %401, %402 : vector<8x128xf32>
    %404 = math.tanh %403 : vector<8x128xf32>
    %405 = arith.mulf %400, %404 : vector<8x128xf32>
    %406 = vector.shape_cast %380 : vector<8x1xi1> to vector<8x1xi1>
    %407 = vector.broadcast %406 : vector<8x1xi1> to vector<8x128xi1>
    %408 = arith.select %407, %405, %334 : vector<8x128xi1>, vector<8x128xf32>
    %409 = vector.shape_cast %380 : vector<8x1xi1> to vector<8x1xi1>
    %410 = vector.broadcast %409 : vector<8x1xi1> to vector<8x128xi1>
    %411 = arith.select %410, %403, %337 : vector<8x128xi1>, vector<8x128xf32>
    %c40 = arith.constant 40 : index
    %c0_95 = arith.constant 0 : index
    %412 = vector.load %arg20[%c40, %c0_95] : memref<64x512xf32, #tpu.memory_space<vmem>>, vector<8x512xf32>
    %413 = arith.truncf %375 : vector<8x128xf32> to vector<8x128xbf16>
    %cst_96 = arith.constant dense<0.000000e+00> : vector<8x512xf32>
    %414 = tpu.matmul %413, %34, %cst_96 {dimension_numbers = #tpu.dot_dimension_numbers<[1], [0], [0], [1], [0, 0, 1, 1], [], []>} : vector<8x128xbf16>, vector<128x512xbf16>, vector<8x512xf32> -> vector<8x512xf32>
    %415 = arith.addf %412, %414 : vector<8x512xf32>
    %c40_97 = arith.constant 40 : index
    %c0_98 = arith.constant 0 : index
    %416 = vector.load %arg21[%c40_97, %c0_98] : memref<64x512xf32, #tpu.memory_space<vmem>>, vector<8x512xf32>
    %417 = arith.truncf %408 : vector<8x128xf32> to vector<8x128xbf16>
    %cst_99 = arith.constant dense<0.000000e+00> : vector<8x512xf32>
    %418 = tpu.matmul %417, %35, %cst_99 {dimension_numbers = #tpu.dot_dimension_numbers<[1], [0], [0], [1], [0, 0, 1, 1], [], []>} : vector<8x128xbf16>, vector<128x512xbf16>, vector<8x512xf32> -> vector<8x512xf32>
    %419 = arith.addf %416, %418 : vector<8x512xf32>
    %c5_i32 = arith.constant 5 : i32
    %420 = vector.broadcast %c5_i32 : i32 to vector<8x1xi32>
    %421 = arith.cmpi sgt, %36, %420 : vector<8x1xi32>
    %422 = vector.extract_strided_slice %415 {offsets = [0, 0], sizes = [8, 128], strides = [1, 1]} : vector<8x512xf32> to vector<8x128xf32>
    %423 = arith.negf %422 : vector<8x128xf32>
    %424 = math.exp %423 : vector<8x128xf32>
    %cst_100 = arith.constant 1.000000e+00 : f32
    %425 = vector.broadcast %cst_100 : f32 to vector<8x128xf32>
    %426 = arith.addf %425, %424 : vector<8x128xf32>
    %427 = arith.divf %425, %426 : vector<8x128xf32>
    %428 = vector.extract_strided_slice %415 {offsets = [0, 128], sizes = [8, 128], strides = [1, 1]} : vector<8x512xf32> to vector<8x128xf32>
    %429 = arith.negf %428 : vector<8x128xf32>
    %430 = math.exp %429 : vector<8x128xf32>
    %cst_101 = arith.constant 1.000000e+00 : f32
    %431 = vector.broadcast %cst_101 : f32 to vector<8x128xf32>
    %432 = arith.addf %431, %430 : vector<8x128xf32>
    %433 = arith.divf %431, %432 : vector<8x128xf32>
    %434 = vector.extract_strided_slice %415 {offsets = [0, 256], sizes = [8, 128], strides = [1, 1]} : vector<8x512xf32> to vector<8x128xf32>
    %435 = math.tanh %434 : vector<8x128xf32>
    %436 = vector.extract_strided_slice %415 {offsets = [0, 384], sizes = [8, 128], strides = [1, 1]} : vector<8x512xf32> to vector<8x128xf32>
    %437 = arith.negf %436 : vector<8x128xf32>
    %438 = math.exp %437 : vector<8x128xf32>
    %cst_102 = arith.constant 1.000000e+00 : f32
    %439 = vector.broadcast %cst_102 : f32 to vector<8x128xf32>
    %440 = arith.addf %439, %438 : vector<8x128xf32>
    %441 = arith.divf %439, %440 : vector<8x128xf32>
    %442 = arith.mulf %433, %378 : vector<8x128xf32>
    %443 = arith.mulf %427, %435 : vector<8x128xf32>
    %444 = arith.addf %442, %443 : vector<8x128xf32>
    %445 = math.tanh %444 : vector<8x128xf32>
    %446 = arith.mulf %441, %445 : vector<8x128xf32>
    %447 = vector.shape_cast %421 : vector<8x1xi1> to vector<8x1xi1>
    %448 = vector.broadcast %447 : vector<8x1xi1> to vector<8x128xi1>
    %449 = arith.select %448, %446, %375 : vector<8x128xi1>, vector<8x128xf32>
    %450 = vector.shape_cast %421 : vector<8x1xi1> to vector<8x1xi1>
    %451 = vector.broadcast %450 : vector<8x1xi1> to vector<8x128xi1>
    %452 = arith.select %451, %444, %378 : vector<8x128xi1>, vector<8x128xf32>
    %c5_i32_103 = arith.constant 5 : i32
    %453 = vector.broadcast %c5_i32_103 : i32 to vector<8x1xi32>
    %454 = arith.cmpi sgt, %37, %453 : vector<8x1xi32>
    %455 = vector.extract_strided_slice %419 {offsets = [0, 0], sizes = [8, 128], strides = [1, 1]} : vector<8x512xf32> to vector<8x128xf32>
    %456 = arith.negf %455 : vector<8x128xf32>
    %457 = math.exp %456 : vector<8x128xf32>
    %cst_104 = arith.constant 1.000000e+00 : f32
    %458 = vector.broadcast %cst_104 : f32 to vector<8x128xf32>
    %459 = arith.addf %458, %457 : vector<8x128xf32>
    %460 = arith.divf %458, %459 : vector<8x128xf32>
    %461 = vector.extract_strided_slice %419 {offsets = [0, 128], sizes = [8, 128], strides = [1, 1]} : vector<8x512xf32> to vector<8x128xf32>
    %462 = arith.negf %461 : vector<8x128xf32>
    %463 = math.exp %462 : vector<8x128xf32>
    %cst_105 = arith.constant 1.000000e+00 : f32
    %464 = vector.broadcast %cst_105 : f32 to vector<8x128xf32>
    %465 = arith.addf %464, %463 : vector<8x128xf32>
    %466 = arith.divf %464, %465 : vector<8x128xf32>
    %467 = vector.extract_strided_slice %419 {offsets = [0, 256], sizes = [8, 128], strides = [1, 1]} : vector<8x512xf32> to vector<8x128xf32>
    %468 = math.tanh %467 : vector<8x128xf32>
    %469 = vector.extract_strided_slice %419 {offsets = [0, 384], sizes = [8, 128], strides = [1, 1]} : vector<8x512xf32> to vector<8x128xf32>
    %470 = arith.negf %469 : vector<8x128xf32>
    %471 = math.exp %470 : vector<8x128xf32>
    %cst_106 = arith.constant 1.000000e+00 : f32
    %472 = vector.broadcast %cst_106 : f32 to vector<8x128xf32>
    %473 = arith.addf %472, %471 : vector<8x128xf32>
    %474 = arith.divf %472, %473 : vector<8x128xf32>
    %475 = arith.mulf %466, %411 : vector<8x128xf32>
    %476 = arith.mulf %460, %468 : vector<8x128xf32>
    %477 = arith.addf %475, %476 : vector<8x128xf32>
    %478 = math.tanh %477 : vector<8x128xf32>
    %479 = arith.mulf %474, %478 : vector<8x128xf32>
    %480 = vector.shape_cast %454 : vector<8x1xi1> to vector<8x1xi1>
    %481 = vector.broadcast %480 : vector<8x1xi1> to vector<8x128xi1>
    %482 = arith.select %481, %479, %408 : vector<8x128xi1>, vector<8x128xf32>
    %483 = vector.shape_cast %454 : vector<8x1xi1> to vector<8x1xi1>
    %484 = vector.broadcast %483 : vector<8x1xi1> to vector<8x128xi1>
    %485 = arith.select %484, %477, %411 : vector<8x128xi1>, vector<8x128xf32>
    %c48 = arith.constant 48 : index
    %c0_107 = arith.constant 0 : index
    %486 = vector.load %arg20[%c48, %c0_107] : memref<64x512xf32, #tpu.memory_space<vmem>>, vector<8x512xf32>
    %487 = arith.truncf %449 : vector<8x128xf32> to vector<8x128xbf16>
    %cst_108 = arith.constant dense<0.000000e+00> : vector<8x512xf32>
    %488 = tpu.matmul %487, %34, %cst_108 {dimension_numbers = #tpu.dot_dimension_numbers<[1], [0], [0], [1], [0, 0, 1, 1], [], []>} : vector<8x128xbf16>, vector<128x512xbf16>, vector<8x512xf32> -> vector<8x512xf32>
    %489 = arith.addf %486, %488 : vector<8x512xf32>
    %c48_109 = arith.constant 48 : index
    %c0_110 = arith.constant 0 : index
    %490 = vector.load %arg21[%c48_109, %c0_110] : memref<64x512xf32, #tpu.memory_space<vmem>>, vector<8x512xf32>
    %491 = arith.truncf %482 : vector<8x128xf32> to vector<8x128xbf16>
    %cst_111 = arith.constant dense<0.000000e+00> : vector<8x512xf32>
    %492 = tpu.matmul %491, %35, %cst_111 {dimension_numbers = #tpu.dot_dimension_numbers<[1], [0], [0], [1], [0, 0, 1, 1], [], []>} : vector<8x128xbf16>, vector<128x512xbf16>, vector<8x512xf32> -> vector<8x512xf32>
    %493 = arith.addf %490, %492 : vector<8x512xf32>
    %c6_i32 = arith.constant 6 : i32
    %494 = vector.broadcast %c6_i32 : i32 to vector<8x1xi32>
    %495 = arith.cmpi sgt, %36, %494 : vector<8x1xi32>
    %496 = vector.extract_strided_slice %489 {offsets = [0, 0], sizes = [8, 128], strides = [1, 1]} : vector<8x512xf32> to vector<8x128xf32>
    %497 = arith.negf %496 : vector<8x128xf32>
    %498 = math.exp %497 : vector<8x128xf32>
    %cst_112 = arith.constant 1.000000e+00 : f32
    %499 = vector.broadcast %cst_112 : f32 to vector<8x128xf32>
    %500 = arith.addf %499, %498 : vector<8x128xf32>
    %501 = arith.divf %499, %500 : vector<8x128xf32>
    %502 = vector.extract_strided_slice %489 {offsets = [0, 128], sizes = [8, 128], strides = [1, 1]} : vector<8x512xf32> to vector<8x128xf32>
    %503 = arith.negf %502 : vector<8x128xf32>
    %504 = math.exp %503 : vector<8x128xf32>
    %cst_113 = arith.constant 1.000000e+00 : f32
    %505 = vector.broadcast %cst_113 : f32 to vector<8x128xf32>
    %506 = arith.addf %505, %504 : vector<8x128xf32>
    %507 = arith.divf %505, %506 : vector<8x128xf32>
    %508 = vector.extract_strided_slice %489 {offsets = [0, 256], sizes = [8, 128], strides = [1, 1]} : vector<8x512xf32> to vector<8x128xf32>
    %509 = math.tanh %508 : vector<8x128xf32>
    %510 = vector.extract_strided_slice %489 {offsets = [0, 384], sizes = [8, 128], strides = [1, 1]} : vector<8x512xf32> to vector<8x128xf32>
    %511 = arith.negf %510 : vector<8x128xf32>
    %512 = math.exp %511 : vector<8x128xf32>
    %cst_114 = arith.constant 1.000000e+00 : f32
    %513 = vector.broadcast %cst_114 : f32 to vector<8x128xf32>
    %514 = arith.addf %513, %512 : vector<8x128xf32>
    %515 = arith.divf %513, %514 : vector<8x128xf32>
    %516 = arith.mulf %507, %452 : vector<8x128xf32>
    %517 = arith.mulf %501, %509 : vector<8x128xf32>
    %518 = arith.addf %516, %517 : vector<8x128xf32>
    %519 = math.tanh %518 : vector<8x128xf32>
    %520 = arith.mulf %515, %519 : vector<8x128xf32>
    %521 = vector.shape_cast %495 : vector<8x1xi1> to vector<8x1xi1>
    %522 = vector.broadcast %521 : vector<8x1xi1> to vector<8x128xi1>
    %523 = arith.select %522, %520, %449 : vector<8x128xi1>, vector<8x128xf32>
    %524 = vector.shape_cast %495 : vector<8x1xi1> to vector<8x1xi1>
    %525 = vector.broadcast %524 : vector<8x1xi1> to vector<8x128xi1>
    %526 = arith.select %525, %518, %452 : vector<8x128xi1>, vector<8x128xf32>
    %c6_i32_115 = arith.constant 6 : i32
    %527 = vector.broadcast %c6_i32_115 : i32 to vector<8x1xi32>
    %528 = arith.cmpi sgt, %37, %527 : vector<8x1xi32>
    %529 = vector.extract_strided_slice %493 {offsets = [0, 0], sizes = [8, 128], strides = [1, 1]} : vector<8x512xf32> to vector<8x128xf32>
    %530 = arith.negf %529 : vector<8x128xf32>
    %531 = math.exp %530 : vector<8x128xf32>
    %cst_116 = arith.constant 1.000000e+00 : f32
    %532 = vector.broadcast %cst_116 : f32 to vector<8x128xf32>
    %533 = arith.addf %532, %531 : vector<8x128xf32>
    %534 = arith.divf %532, %533 : vector<8x128xf32>
    %535 = vector.extract_strided_slice %493 {offsets = [0, 128], sizes = [8, 128], strides = [1, 1]} : vector<8x512xf32> to vector<8x128xf32>
    %536 = arith.negf %535 : vector<8x128xf32>
    %537 = math.exp %536 : vector<8x128xf32>
    %cst_117 = arith.constant 1.000000e+00 : f32
    %538 = vector.broadcast %cst_117 : f32 to vector<8x128xf32>
    %539 = arith.addf %538, %537 : vector<8x128xf32>
    %540 = arith.divf %538, %539 : vector<8x128xf32>
    %541 = vector.extract_strided_slice %493 {offsets = [0, 256], sizes = [8, 128], strides = [1, 1]} : vector<8x512xf32> to vector<8x128xf32>
    %542 = math.tanh %541 : vector<8x128xf32>
    %543 = vector.extract_strided_slice %493 {offsets = [0, 384], sizes = [8, 128], strides = [1, 1]} : vector<8x512xf32> to vector<8x128xf32>
    %544 = arith.negf %543 : vector<8x128xf32>
    %545 = math.exp %544 : vector<8x128xf32>
    %cst_118 = arith.constant 1.000000e+00 : f32
    %546 = vector.broadcast %cst_118 : f32 to vector<8x128xf32>
    %547 = arith.addf %546, %545 : vector<8x128xf32>
    %548 = arith.divf %546, %547 : vector<8x128xf32>
    %549 = arith.mulf %540, %485 : vector<8x128xf32>
    %550 = arith.mulf %534, %542 : vector<8x128xf32>
    %551 = arith.addf %549, %550 : vector<8x128xf32>
    %552 = math.tanh %551 : vector<8x128xf32>
    %553 = arith.mulf %548, %552 : vector<8x128xf32>
    %554 = vector.shape_cast %528 : vector<8x1xi1> to vector<8x1xi1>
    %555 = vector.broadcast %554 : vector<8x1xi1> to vector<8x128xi1>
    %556 = arith.select %555, %553, %482 : vector<8x128xi1>, vector<8x128xf32>
    %557 = vector.shape_cast %528 : vector<8x1xi1> to vector<8x1xi1>
    %558 = vector.broadcast %557 : vector<8x1xi1> to vector<8x128xi1>
    %559 = arith.select %558, %551, %485 : vector<8x128xi1>, vector<8x128xf32>
    %c56 = arith.constant 56 : index
    %c0_119 = arith.constant 0 : index
    %560 = vector.load %arg20[%c56, %c0_119] : memref<64x512xf32, #tpu.memory_space<vmem>>, vector<8x512xf32>
    %561 = arith.truncf %523 : vector<8x128xf32> to vector<8x128xbf16>
    %cst_120 = arith.constant dense<0.000000e+00> : vector<8x512xf32>
    %562 = tpu.matmul %561, %34, %cst_120 {dimension_numbers = #tpu.dot_dimension_numbers<[1], [0], [0], [1], [0, 0, 1, 1], [], []>} : vector<8x128xbf16>, vector<128x512xbf16>, vector<8x512xf32> -> vector<8x512xf32>
    %563 = arith.addf %560, %562 : vector<8x512xf32>
    %c56_121 = arith.constant 56 : index
    %c0_122 = arith.constant 0 : index
    %564 = vector.load %arg21[%c56_121, %c0_122] : memref<64x512xf32, #tpu.memory_space<vmem>>, vector<8x512xf32>
    %565 = arith.truncf %556 : vector<8x128xf32> to vector<8x128xbf16>
    %cst_123 = arith.constant dense<0.000000e+00> : vector<8x512xf32>
    %566 = tpu.matmul %565, %35, %cst_123 {dimension_numbers = #tpu.dot_dimension_numbers<[1], [0], [0], [1], [0, 0, 1, 1], [], []>} : vector<8x128xbf16>, vector<128x512xbf16>, vector<8x512xf32> -> vector<8x512xf32>
    %567 = arith.addf %564, %566 : vector<8x512xf32>
    %c7_i32 = arith.constant 7 : i32
    %568 = vector.broadcast %c7_i32 : i32 to vector<8x1xi32>
    %569 = arith.cmpi sgt, %36, %568 : vector<8x1xi32>
    %570 = vector.extract_strided_slice %563 {offsets = [0, 0], sizes = [8, 128], strides = [1, 1]} : vector<8x512xf32> to vector<8x128xf32>
    %571 = arith.negf %570 : vector<8x128xf32>
    %572 = math.exp %571 : vector<8x128xf32>
    %cst_124 = arith.constant 1.000000e+00 : f32
    %573 = vector.broadcast %cst_124 : f32 to vector<8x128xf32>
    %574 = arith.addf %573, %572 : vector<8x128xf32>
    %575 = arith.divf %573, %574 : vector<8x128xf32>
    %576 = vector.extract_strided_slice %563 {offsets = [0, 128], sizes = [8, 128], strides = [1, 1]} : vector<8x512xf32> to vector<8x128xf32>
    %577 = arith.negf %576 : vector<8x128xf32>
    %578 = math.exp %577 : vector<8x128xf32>
    %cst_125 = arith.constant 1.000000e+00 : f32
    %579 = vector.broadcast %cst_125 : f32 to vector<8x128xf32>
    %580 = arith.addf %579, %578 : vector<8x128xf32>
    %581 = arith.divf %579, %580 : vector<8x128xf32>
    %582 = vector.extract_strided_slice %563 {offsets = [0, 256], sizes = [8, 128], strides = [1, 1]} : vector<8x512xf32> to vector<8x128xf32>
    %583 = math.tanh %582 : vector<8x128xf32>
    %584 = vector.extract_strided_slice %563 {offsets = [0, 384], sizes = [8, 128], strides = [1, 1]} : vector<8x512xf32> to vector<8x128xf32>
    %585 = arith.negf %584 : vector<8x128xf32>
    %586 = math.exp %585 : vector<8x128xf32>
    %cst_126 = arith.constant 1.000000e+00 : f32
    %587 = vector.broadcast %cst_126 : f32 to vector<8x128xf32>
    %588 = arith.addf %587, %586 : vector<8x128xf32>
    %589 = arith.divf %587, %588 : vector<8x128xf32>
    %590 = arith.mulf %581, %526 : vector<8x128xf32>
    %591 = arith.mulf %575, %583 : vector<8x128xf32>
    %592 = arith.addf %590, %591 : vector<8x128xf32>
    %593 = math.tanh %592 : vector<8x128xf32>
    %594 = arith.mulf %589, %593 : vector<8x128xf32>
    %595 = vector.shape_cast %569 : vector<8x1xi1> to vector<8x1xi1>
    %596 = vector.broadcast %595 : vector<8x1xi1> to vector<8x128xi1>
    %597 = arith.select %596, %594, %523 : vector<8x128xi1>, vector<8x128xf32>
    %c7_i32_127 = arith.constant 7 : i32
    %598 = vector.broadcast %c7_i32_127 : i32 to vector<8x1xi32>
    %599 = arith.cmpi sgt, %37, %598 : vector<8x1xi32>
    %600 = vector.extract_strided_slice %567 {offsets = [0, 0], sizes = [8, 128], strides = [1, 1]} : vector<8x512xf32> to vector<8x128xf32>
    %601 = arith.negf %600 : vector<8x128xf32>
    %602 = math.exp %601 : vector<8x128xf32>
    %cst_128 = arith.constant 1.000000e+00 : f32
    %603 = vector.broadcast %cst_128 : f32 to vector<8x128xf32>
    %604 = arith.addf %603, %602 : vector<8x128xf32>
    %605 = arith.divf %603, %604 : vector<8x128xf32>
    %606 = vector.extract_strided_slice %567 {offsets = [0, 128], sizes = [8, 128], strides = [1, 1]} : vector<8x512xf32> to vector<8x128xf32>
    %607 = arith.negf %606 : vector<8x128xf32>
    %608 = math.exp %607 : vector<8x128xf32>
    %cst_129 = arith.constant 1.000000e+00 : f32
    %609 = vector.broadcast %cst_129 : f32 to vector<8x128xf32>
    %610 = arith.addf %609, %608 : vector<8x128xf32>
    %611 = arith.divf %609, %610 : vector<8x128xf32>
    %612 = vector.extract_strided_slice %567 {offsets = [0, 256], sizes = [8, 128], strides = [1, 1]} : vector<8x512xf32> to vector<8x128xf32>
    %613 = math.tanh %612 : vector<8x128xf32>
    %614 = vector.extract_strided_slice %567 {offsets = [0, 384], sizes = [8, 128], strides = [1, 1]} : vector<8x512xf32> to vector<8x128xf32>
    %615 = arith.negf %614 : vector<8x128xf32>
    %616 = math.exp %615 : vector<8x128xf32>
    %cst_130 = arith.constant 1.000000e+00 : f32
    %617 = vector.broadcast %cst_130 : f32 to vector<8x128xf32>
    %618 = arith.addf %617, %616 : vector<8x128xf32>
    %619 = arith.divf %617, %618 : vector<8x128xf32>
    %620 = arith.mulf %611, %559 : vector<8x128xf32>
    %621 = arith.mulf %605, %613 : vector<8x128xf32>
    %622 = arith.addf %620, %621 : vector<8x128xf32>
    %623 = math.tanh %622 : vector<8x128xf32>
    %624 = arith.mulf %619, %623 : vector<8x128xf32>
    %625 = vector.shape_cast %599 : vector<8x1xi1> to vector<8x1xi1>
    %626 = vector.broadcast %625 : vector<8x1xi1> to vector<8x128xi1>
    %627 = arith.select %626, %624, %556 : vector<8x128xi1>, vector<8x128xf32>
    %628 = tpu.iota {dimensions = array<i32: 0>} : vector<8x8xi32>
    %c0_131 = arith.constant 0 : index
    %c0_132 = arith.constant 0 : index
    %629 = vector.load %arg4[%c0_131, %c0_132] : memref<1x8xi32, #tpu.memory_space<vmem>>, vector<1x8xi32>
    %630 = vector.broadcast %629 : vector<1x8xi32> to vector<8x8xi32>
    %631 = arith.cmpi eq, %628, %630 : vector<8x8xi32>
    %632 = arith.extui %631 : vector<8x8xi1> to vector<8x8xi32>
    %633 = arith.sitofp %632 : vector<8x8xi32> to vector<8x8xf32>
    %c0_133 = arith.constant 0 : index
    %c0_134 = arith.constant 0 : index
    %634 = vector.load %arg5[%c0_133, %c0_134] : memref<1x8xi32, #tpu.memory_space<vmem>>, vector<1x8xi32>
    %635 = vector.broadcast %634 : vector<1x8xi32> to vector<8x8xi32>
    %636 = arith.cmpi eq, %628, %635 : vector<8x8xi32>
    %637 = arith.extui %636 : vector<8x8xi1> to vector<8x8xi32>
    %638 = arith.sitofp %637 : vector<8x8xi32> to vector<8x8xf32>
    %cst_135 = arith.constant dense<0.000000e+00> : vector<8x128xf32>
    %639 = tpu.matmul %633, %597, %cst_135 {dimension_numbers = #tpu.dot_dimension_numbers<[1], [0], [0], [1], [0, 0, 1, 1], [], []>} : vector<8x8xf32>, vector<8x128xf32>, vector<8x128xf32> -> vector<8x128xf32>
    %cst_136 = arith.constant dense<0.000000e+00> : vector<8x128xf32>
    %640 = tpu.matmul %638, %627, %cst_136 {dimension_numbers = #tpu.dot_dimension_numbers<[1], [0], [0], [1], [0, 0, 1, 1], [], []>} : vector<8x8xf32>, vector<8x128xf32>, vector<8x128xf32> -> vector<8x128xf32>
    %c0_137 = arith.constant 0 : index
    %c0_138 = arith.constant 0 : index
    %641 = vector.load %arg13[%c0_137, %c0_138] : memref<8x4xf32, #tpu.memory_space<vmem>>, vector<8x4xf32>
    %c0_139 = arith.constant 0 : index
    %c0_140 = arith.constant 0 : index
    %642 = vector.load %arg14[%c0_139, %c0_140] : memref<4x128xf32, #tpu.memory_space<vmem>>, vector<4x128xf32>
    %cst_141 = arith.constant dense<0.000000e+00> : vector<8x128xf32>
    %643 = tpu.matmul %641, %642, %cst_141 {dimension_numbers = #tpu.dot_dimension_numbers<[1], [0], [0], [1], [0, 0, 1, 1], [], []>} : vector<8x4xf32>, vector<4x128xf32>, vector<8x128xf32> -> vector<8x128xf32>
    %c0_142 = arith.constant 0 : index
    %c0_143 = arith.constant 0 : index
    %644 = vector.load %arg15[%c0_142, %c0_143] : memref<1x128xf32, #tpu.memory_space<vmem>>, vector<1x128xf32>
    %645 = vector.broadcast %644 : vector<1x128xf32> to vector<8x128xf32>
    %646 = arith.addf %643, %645 : vector<8x128xf32>
    %c0_i32_144 = arith.constant 0 : i32
    %647 = tpu.memref_slice %arg24[%c0_i32_144] : memref<2x!tpu.dma_semaphore, #tpu.memory_space<semaphore_mem>> -> memref<1x!tpu.dma_semaphore, #tpu.memory_space<semaphore_mem>>
    %648 = tpu.memref_squeeze %647 : memref<1x!tpu.dma_semaphore, #tpu.memory_space<semaphore_mem>> -> memref<!tpu.dma_semaphore, #tpu.memory_space<semaphore_mem>>
    tpu.wait_dma2 semaphore(%648 : memref<!tpu.dma_semaphore, #tpu.memory_space<semaphore_mem>>) src(%arg17 : memref<256x128xbf16, #tpu.memory_space<any>>) dst(%arg22 : memref<256x128xbf16, #tpu.memory_space<vmem>>)
    %c1_i32_145 = arith.constant 1 : i32
    %649 = tpu.memref_slice %arg24[%c1_i32_145] : memref<2x!tpu.dma_semaphore, #tpu.memory_space<semaphore_mem>> -> memref<1x!tpu.dma_semaphore, #tpu.memory_space<semaphore_mem>>
    %650 = tpu.memref_squeeze %649 : memref<1x!tpu.dma_semaphore, #tpu.memory_space<semaphore_mem>> -> memref<!tpu.dma_semaphore, #tpu.memory_space<semaphore_mem>>
    tpu.wait_dma2 semaphore(%650 : memref<!tpu.dma_semaphore, #tpu.memory_space<semaphore_mem>>) src(%arg18 : memref<128x128xbf16, #tpu.memory_space<any>>) dst(%arg23 : memref<128x128xbf16, #tpu.memory_space<vmem>>)
    %651 = tpu.concatenate %639, %646 in 1 : vector<8x128xf32>, vector<8x128xf32> -> vector<8x256xf32>
    %652 = arith.truncf %651 : vector<8x256xf32> to vector<8x256xbf16>
    %c0_146 = arith.constant 0 : index
    %c0_147 = arith.constant 0 : index
    %653 = vector.load %arg22[%c0_146, %c0_147] : memref<256x128xbf16, #tpu.memory_space<vmem>>, vector<256x128xbf16>
    %cst_148 = arith.constant dense<0.000000e+00> : vector<8x128xf32>
    %654 = tpu.matmul %652, %653, %cst_148 {dimension_numbers = #tpu.dot_dimension_numbers<[1], [0], [0], [1], [0, 0, 1, 1], [], []>} : vector<8x256xbf16>, vector<256x128xbf16>, vector<8x128xf32> -> vector<8x128xf32>
    %c0_149 = arith.constant 0 : index
    %c0_150 = arith.constant 0 : index
    %655 = vector.load %arg16[%c0_149, %c0_150] : memref<1x128xf32, #tpu.memory_space<vmem>>, vector<1x128xf32>
    %656 = vector.broadcast %655 : vector<1x128xf32> to vector<8x128xf32>
    %657 = arith.addf %654, %656 : vector<8x128xf32>
    %658 = arith.truncf %657 : vector<8x128xf32> to vector<8x128xbf16>
    %c0_151 = arith.constant 0 : index
    %c0_152 = arith.constant 0 : index
    %659 = vector.load %arg23[%c0_151, %c0_152] : memref<128x128xbf16, #tpu.memory_space<vmem>>, vector<128x128xbf16>
    %cst_153 = arith.constant dense<0.000000e+00> : vector<8x128xf32>
    %660 = tpu.matmul %658, %659, %cst_153 {dimension_numbers = #tpu.dot_dimension_numbers<[1], [0], [0], [1], [0, 0, 1, 1], [], []>} : vector<8x128xbf16>, vector<128x128xbf16>, vector<8x128xf32> -> vector<8x128xf32>
    %661 = arith.mulf %660, %640 : vector<8x128xf32>
    %cst_154 = arith.constant dense<0.000000e+00> : vector<8xf32>
    %662 = vector.multi_reduction <add>, %661, %cst_154 [1] : vector<8x128xf32> to vector<8xf32>
    %663 = vector.shape_cast %662 : vector<8xf32> to vector<8x1xf32>
    %664 = arith.negf %663 : vector<8x1xf32>
    %665 = math.exp %664 : vector<8x1xf32>
    %cst_155 = arith.constant 1.000000e+00 : f32
    %666 = vector.broadcast %cst_155 : f32 to vector<8x1xf32>
    %667 = arith.addf %666, %665 : vector<8x1xf32>
    %668 = arith.divf %666, %667 : vector<8x1xf32>
    %c0_156 = arith.constant 0 : index
    %c0_157 = arith.constant 0 : index
    %669 = vector.load %arg19[%c0_156, %c0_157] : memref<8x1xf32, #tpu.memory_space<vmem>>, vector<8x1xf32>
    tpu.vector_store %arg19[%c0_156, %c0_157], %668 {strides = array<i32>} : memref<8x1xf32, #tpu.memory_space<vmem>>, vector<8x1xf32>,
    return
  }
}

</mosaic_0001>

<llo_original>
// kernel: text_image_lstm_encoder_forward.1
$region0: #{text_image_lstm_encoder_forward.1}
  #allocation0 [shape = 'u32[]', space=smem, size = 0x4, offset = 0x4, fixed_abs, tag = 'smem constant byte address 0x4 - core index']
  #allocation1 [shape = 'u32[144,128]{1,0:T(1,128)}', space=vmem, size = 0x12000, scoped, tag = 'internal scratch']
  #allocation2 [shape = 'f32[64,512]{1,0:T(8,128)}', space=vmem, size = 0x20000, scoped, tag = 'scratch operand']
  #allocation3 [shape = 'f32[64,512]{1,0:T(8,128)}', space=vmem, size = 0x20000, scoped, tag = 'scratch operand']
  #allocation4 [shape = 'bf16[256,128]{1,0:T(16,128)(2,1)}', space=vmem, size = 0x10000, scoped, tag = 'scratch operand']
  #allocation5 [shape = 'bf16[128,128]{1,0:T(16,128)(2,1)}', space=vmem, size = 0x8000, scoped, tag = 'scratch operand']
  #allocation6 [shape = 's32[2]{0}', space=sflag, size = 0x8, scoped, tag = 'scratch operand']
  #allocation7 [shape = 's32[]', space=sflag, size = 0x4, offset = 0, fixed_abs, tag = 'sflag constant byte address 0x0 - dummy sync flag']
  #allocation8 [shape = 's32[]', space=sflag, size = 0x4, offset = 0, fixed_abs, tag = 'sflag constant byte address 0x0 - dummy sync flag']
  %s0 = inlined_call_operand.vmem [shape: s32[64,1], index: 0, kind: input, shape index: {}]
  %s1 = inlined_call_operand.vmem [shape: s32[64,1], index: 1, kind: input, shape index: {}]
  %s2 = inlined_call_operand.vmem [shape: s32[8,1], index: 2, kind: input, shape index: {}]
  %s3 = inlined_call_operand.vmem [shape: s32[8,1], index: 3, kind: input, shape index: {}]
  %s4 = inlined_call_operand.vmem [shape: s32[1,8], index: 4, kind: input, shape index: {}]
  %s5 = inlined_call_operand.vmem [shape: s32[1,8], index: 5, kind: input, shape index: {}]
  %s6 = inlined_call_operand.vmem [shape: bf16[100,32], index: 6, kind: input, shape index: {}]
  %s7 = inlined_call_operand.vmem [shape: bf16[32,512], index: 7, kind: input, shape index: {}]
  %s8 = inlined_call_operand.vmem [shape: bf16[128,512], index: 8, kind: input, shape index: {}]
  %s9 = inlined_call_operand.vmem [shape: f32[1,512], index: 9, kind: input, shape index: {}]
  %s10 = inlined_call_operand.vmem [shape: bf16[32,512], index: 10, kind: input, shape index: {}]
  %s11 = inlined_call_operand.vmem [shape: bf16[128,512], index: 11, kind: input, shape index: {}]
  %s12 = inlined_call_operand.vmem [shape: f32[1,512], index: 12, kind: input, shape index: {}]
  %s13 = inlined_call_operand.vmem [shape: f32[8,4], index: 13, kind: input, shape index: {}]
  %s14 = inlined_call_operand.vmem [shape: f32[4,128], index: 14, kind: input, shape index: {}]
  %s15 = inlined_call_operand.vmem [shape: f32[1,128], index: 15, kind: input, shape index: {}]
  %s16 = inlined_call_operand.vmem [shape: f32[1,128], index: 16, kind: input, shape index: {}]
  %s17 = inlined_call_operand.vmem [shape: bf16[256,128], index: 17, kind: input, shape index: {}]
  %s18 = inlined_call_operand.vmem [shape: bf16[128,128], index: 18, kind: input, shape index: {}]
  %s19 = inlined_call_operand.vmem [shape: f32[8,1], index: 19, kind: output, shape index: {}]
  %s20 = sld [smem:[#allocation0]]
  $region146: #{text_image_lstm_encoder_forward.1} parent=0
    _
  %s22 = ssub.s32 1, %s20
  %s23 = scalar_select 0, %s22, %s20
  // Predicated region
  $region2: #{text_image_lstm_encoder_forward.1} parent=0 // pred_check
    _
  $region3: #{text_image_lstm_encoder_forward.1} parent=0 // pred_check_branch
    %25 = sbr.rel (0) target = $region5
  $region4: #{text_image_lstm_encoder_forward.1} parent=0 // pred_region
    _
  $region5: #{text_image_lstm_encoder_forward.1} parent=0 // pred_fallthru
    _
  // Predicated region
  $region6: #{text_image_lstm_encoder_forward.1} parent=0 // pred_check
    _
  $region7: #{text_image_lstm_encoder_forward.1} parent=0 // pred_check_branch
    %27 = sbr.rel (0) target = $region9
  $region8: #{text_image_lstm_encoder_forward.1} parent=0 // pred_region
    _
  $region9: #{text_image_lstm_encoder_forward.1} parent=0 // pred_fallthru
    _
  // Predicated region
  $region10: #{text_image_lstm_encoder_forward.1} parent=0 // pred_check
    _
  $region11: #{text_image_lstm_encoder_forward.1} parent=0 // pred_check_branch
    %29 = sbr.rel (0) target = $region13
  $region12: #{text_image_lstm_encoder_forward.1} parent=0 // pred_region
    _
  $region13: #{text_image_lstm_encoder_forward.1} parent=0 // pred_fallthru
    _
  // Predicated region
  $region14: #{text_image_lstm_encoder_forward.1} parent=0 // pred_check
    _
  $region15: #{text_image_lstm_encoder_forward.1} parent=0 // pred_check_branch
    %31 = sbr.rel (0) target = $region17
  $region16: #{text_image_lstm_encoder_forward.1} parent=0 // pred_region
    _
  $region17: #{text_image_lstm_encoder_forward.1} parent=0 // pred_fallthru
    _
  // Predicated region
  $region18: #{text_image_lstm_encoder_forward.1} parent=0 // pred_check
    _
  $region19: #{text_image_lstm_encoder_forward.1} parent=0 // pred_check_branch
    %33 = sbr.rel (0) target = $region21
  $region20: #{text_image_lstm_encoder_forward.1} parent=0 // pred_region
    _
  $region21: #{text_image_lstm_encoder_forward.1} parent=0 // pred_fallthru
    _
  // Predicated region
  $region22: #{text_image_lstm_encoder_forward.1} parent=0 // pred_check
    _
  $region23: #{text_image_lstm_encoder_forward.1} parent=0 // pred_check_branch
    %35 = sbr.rel (0) target = $region25
  $region24: #{text_image_lstm_encoder_forward.1} parent=0 // pred_region
    _
  $region25: #{text_image_lstm_encoder_forward.1} parent=0 // pred_fallthru
    _
  // Predicated region
  $region26: #{text_image_lstm_encoder_forward.1} parent=0 // pred_check
    _
  $region27: #{text_image_lstm_encoder_forward.1} parent=0 // pred_check_branch
    %37 = sbr.rel (0) target = $region29
  $region28: #{text_image_lstm_encoder_forward.1} parent=0 // pred_region
    _
  $region29: #{text_image_lstm_encoder_forward.1} parent=0 // pred_fallthru
    _
  // Predicated region
  $region30: #{text_image_lstm_encoder_forward.1} parent=0 // pred_check
    _
  $region31: #{text_image_lstm_encoder_forward.1} parent=0 // pred_check_branch
    %39 = sbr.rel (0) target = $region33
  $region32: #{text_image_lstm_encoder_forward.1} parent=0 // pred_region
    _
  $region33: #{text_image_lstm_encoder_forward.1} parent=0 // pred_fallthru
    _
  // Predicated region
  $region34: #{text_image_lstm_encoder_forward.1} parent=0 // pred_check
    _
  $region35: #{text_image_lstm_encoder_forward.1} parent=0 // pred_check_branch
    %41 = sbr.rel (0) target = $region37
  $region36: #{text_image_lstm_encoder_forward.1} parent=0 // pred_region
    _
  $region37: #{text_image_lstm_encoder_forward.1} parent=0 // pred_fallthru
    _
  // Predicated region
  $region38: #{text_image_lstm_encoder_forward.1} parent=0 // pred_check
    _
  $region39: #{text_image_lstm_encoder_forward.1} parent=0 // pred_check_branch
    %43 = sbr.rel (0) target = $region41
  $region40: #{text_image_lstm_encoder_forward.1} parent=0 // pred_region
    _
  $region41: #{text_image_lstm_encoder_forward.1} parent=0 // pred_fallthru
    _
  // Predicated region
  $region42: #{text_image_lstm_encoder_forward.1} parent=0 // pred_check
    _
  $region43: #{text_image_lstm_encoder_forward.1} parent=0 // pred_check_branch
    %45 = sbr.rel (0) target = $region45
  $region44: #{text_image_lstm_encoder_forward.1} parent=0 // pred_region
    _
  $region45: #{text_image_lstm_encoder_forward.1} parent=0 // pred_fallthru
    _
  // Predicated region
  $region46: #{text_image_lstm_encoder_forward.1} parent=0 // pred_check
    _
  $region47: #{text_image_lstm_encoder_forward.1} parent=0 // pred_check_branch
    %47 = sbr.rel (0) target = $region49
  $region48: #{text_image_lstm_encoder_forward.1} parent=0 // pred_region
    _
  $region49: #{text_image_lstm_encoder_forward.1} parent=0 // pred_fallthru
    _
  // Predicated region
  $region50: #{text_image_lstm_encoder_forward.1} parent=0 // pred_check
    _
  $region51: #{text_image_lstm_encoder_forward.1} parent=0 // pred_check_branch
    %49 = sbr.rel (0) target = $region53
  $region52: #{text_image_lstm_encoder_forward.1} parent=0 // pred_region
    _
  $region53: #{text_image_lstm_encoder_forward.1} parent=0 // pred_fallthru
    _
  // Predicated region
  $region54: #{text_image_lstm_encoder_forward.1} parent=0 // pred_check
    _
  $region55: #{text_image_lstm_encoder_forward.1} parent=0 // pred_check_branch
    %51 = sbr.rel (0) target = $region57
  $region56: #{text_image_lstm_encoder_forward.1} parent=0 // pred_region
    _
  $region57: #{text_image_lstm_encoder_forward.1} parent=0 // pred_fallthru
    _
  // Predicated region
  $region58: #{text_image_lstm_encoder_forward.1} parent=0 // pred_check
    _
  $region59: #{text_image_lstm_encoder_forward.1} parent=0 // pred_check_branch
    %53 = sbr.rel (0) target = $region61
  $region60: #{text_image_lstm_encoder_forward.1} parent=0 // pred_region
    _
  $region61: #{text_image_lstm_encoder_forward.1} parent=0 // pred_fallthru
    _
  // Predicated region
  $region62: #{text_image_lstm_encoder_forward.1} parent=0 // pred_check
    _
  $region63: #{text_image_lstm_encoder_forward.1} parent=0 // pred_check_branch
    %55 = sbr.rel (0) target = $region65
  $region64: #{text_image_lstm_encoder_forward.1} parent=0 // pred_region
    _
  $region65: #{text_image_lstm_encoder_forward.1} parent=0 // pred_fallthru
    _
  // Predicated region
  $region66: #{text_image_lstm_encoder_forward.1} parent=0 // pred_check
    _
  $region67: #{text_image_lstm_encoder_forward.1} parent=0 // pred_check_branch
    %57 = sbr.rel (0) target = $region69
  $region68: #{text_image_lstm_encoder_forward.1} parent=0 // pred_region
    _
  $region69: #{text_image_lstm_encoder_forward.1} parent=0 // pred_fallthru
    _
  %p60 = scmp.lt.u32.totalorder 128, 8
  %p61 = pneg %p60
  // Predicated region
  $region70: #{text_image_lstm_encoder_forward.1} parent=0 // pred_check
    _
  $region71: #{text_image_lstm_encoder_forward.1} parent=0 // pred_check_branch
    %63 = sbr.rel (%p60) target = $region73
  $region72: #{text_image_lstm_encoder_forward.1} parent=0 // pred_region
    %s78 = sand.u32 128, 7
    %p79 = scmp.eq.s32.totalorder %s78, 0
    // Predicated region
    $region85: #{text_image_lstm_encoder_forward.1} parent=72 // pred_check
      %p80 = pneg %p79
    $region86: #{text_image_lstm_encoder_forward.1} parent=72 // pred_check_branch
      %82 = sbr.rel (%p80) target = $region88
    $region87: #{text_image_lstm_encoder_forward.1} parent=72 // pred_region
      loop: start=0, step=1, limit=1
      $region89: #{text_image_lstm_encoder_forward.1} parent=87 // loop_pre_header
        _
      $region90: #{text_image_lstm_encoder_forward.1} parent=87 // loop_header
        %s84 = sphi 0, %s88
        %p85 = scmp.ge.s32.totalorder %s84, 1
        %s89 = sphi %s17, %s17
        %s90 = sphi [#allocation4], [#allocation4]
      $region91: #{text_image_lstm_encoder_forward.1} parent=87 // loop_header_branch
        %87 = sbr.rel (%p85) target = $region95
      $region92: #{text_image_lstm_encoder_forward.1} parent=87 // loop_body
        %v91 = vld [vmem:[%s89] sm:$0xff]
        %92 = vst [vmem:[%s90] sm:$0xff] %v91
        %v93 = vld [vmem:[%s89 + $0x8] sm:$0xff]
        %94 = vst [vmem:[%s90 + $0x8] sm:$0xff] %v93
        %v95 = vld [vmem:[%s89 + $0x10] sm:$0xff]
        %96 = vst [vmem:[%s90 + $0x10] sm:$0xff] %v95
        %v97 = vld [vmem:[%s89 + $0x18] sm:$0xff]
        %98 = vst [vmem:[%s90 + $0x18] sm:$0xff] %v97
        %v99 = vld [vmem:[%s89 + $0x20] sm:$0xff]
        %100 = vst [vmem:[%s90 + $0x20] sm:$0xff] %v99
        %v101 = vld [vmem:[%s89 + $0x28] sm:$0xff]
        %102 = vst [vmem:[%s90 + $0x28] sm:$0xff] %v101
        %v103 = vld [vmem:[%s89 + $0x30] sm:$0xff]
        %104 = vst [vmem:[%s90 + $0x30] sm:$0xff] %v103
        %v105 = vld [vmem:[%s89 + $0x38] sm:$0xff]
        %106 = vst [vmem:[%s90 + $0x38] sm:$0xff] %v105
        %v107 = vld [vmem:[%s89 + $0x40] sm:$0xff]
        %108 = vst [vmem:[%s90 + $0x40] sm:$0xff] %v107
        %v109 = vld [vmem:[%s89 + $0x48] sm:$0xff]
        %110 = vst [vmem:[%s90 + $0x48] sm:$0xff] %v109
        %v111 = vld [vmem:[%s89 + $0x50] sm:$0xff]
        %112 = vst [vmem:[%s90 + $0x50] sm:$0xff] %v111
        %v113 = vld [vmem:[%s89 + $0x58] sm:$0xff]
        %114 = vst [vmem:[%s90 + $0x58] sm:$0xff] %v113
        %v115 = vld [vmem:[%s89 + $0x60] sm:$0xff]
        %116 = vst [vmem:[%s90 + $0x60] sm:$0xff] %v115
        %v117 = vld [vmem:[%s89 + $0x68] sm:$0xff]
        %118 = vst [vmem:[%s90 + $0x68] sm:$0xff] %v117
        %v119 = vld [vmem:[%s89 + $0x70] sm:$0xff]
        %120 = vst [vmem:[%s90 + $0x70] sm:$0xff] %v119
        %v121 = vld [vmem:[%s89 + $0x78] sm:$0xff]
        %122 = vst [vmem:[%s90 + $0x78] sm:$0xff] %v121
      $region93: #{text_image_lstm_encoder_forward.1} parent=87 // loop_footer
        %s88 = sadd.s32 1, %s84
      $region94: #{text_image_lstm_encoder_forward.1} parent=87 // loop_footer_branch
        %83 = sbr.rel target = $region90
      $region95: #{text_image_lstm_encoder_forward.1} parent=87 // loop_exit
        _
    $region88: #{text_image_lstm_encoder_forward.1} parent=72 // pred_fallthru
      _
    %p123 = pneg %p79
    // Predicated region
    $region96: #{text_image_lstm_encoder_forward.1} parent=72 // pred_check
      _
    $region97: #{text_image_lstm_encoder_forward.1} parent=72 // pred_check_branch
      %125 = sbr.rel (%p79) target = $region99
    $region98: #{text_image_lstm_encoder_forward.1} parent=72 // pred_region
      %s126 = sand.u32 128, 7
    $region99: #{text_image_lstm_encoder_forward.1} parent=72 // pred_fallthru
      _
  $region73: #{text_image_lstm_encoder_forward.1} parent=0 // pred_fallthru
    _
  // Predicated region
  $region74: #{text_image_lstm_encoder_forward.1} parent=0 // pred_check
    %p64 = pneg %p60
  $region75: #{text_image_lstm_encoder_forward.1} parent=0 // pred_check_branch
    %66 = sbr.rel (%p64) target = $region77
  $region76: #{text_image_lstm_encoder_forward.1} parent=0 // pred_region
    %s67 = sshllo.u32 0, 128
    loop: start=0, step=1, limit=1
    $region78: #{text_image_lstm_encoder_forward.1} parent=76 // loop_pre_header
      _
    $region79: #{text_image_lstm_encoder_forward.1} parent=76 // loop_header
      %s69 = sphi 0, %s73
      %p70 = scmp.ge.s32.totalorder %s69, 1
      %s74 = sphi %s17, %s17
      %s75 = sphi [#allocation4], [#allocation4]
    $region80: #{text_image_lstm_encoder_forward.1} parent=76 // loop_header_branch
      %72 = sbr.rel (%p70) target = $region84
    $region81: #{text_image_lstm_encoder_forward.1} parent=76 // loop_body
      %v76 = vld [vmem:[%s74] sm:%s67]
      %77 = vst [vmem:[%s75] sm:%s67] %v76
    $region82: #{text_image_lstm_encoder_forward.1} parent=76 // loop_footer
      %s73 = sadd.s32 1, %s69
    $region83: #{text_image_lstm_encoder_forward.1} parent=76 // loop_footer_branch
      %68 = sbr.rel target = $region79
    $region84: #{text_image_lstm_encoder_forward.1} parent=76 // loop_exit
      _
  $region77: #{text_image_lstm_encoder_forward.1} parent=0 // pred_fallthru
    _
  // Predicated region
  $region100: #{text_image_lstm_encoder_forward.1} parent=0 // pred_check
    _
  $region101: #{text_image_lstm_encoder_forward.1} parent=0 // pred_check_branch
    %129 = sbr.rel (0) target = $region103
  $region102: #{text_image_lstm_encoder_forward.1} parent=0 // pred_region
    %130 = vsyncadd [#allocation6], 2048
  $region103: #{text_image_lstm_encoder_forward.1} parent=0 // pred_fallthru
    _
  %s131 = scalar_lea.sflag [#allocation6], 1
  %p133 = scmp.lt.u32.totalorder 64, 8
  %p134 = pneg %p133
  // Predicated region
  $region104: #{text_image_lstm_encoder_forward.1} parent=0 // pred_check
    _
  $region105: #{text_image_lstm_encoder_forward.1} parent=0 // pred_check_branch
    %136 = sbr.rel (%p133) target = $region107
  $region106: #{text_image_lstm_encoder_forward.1} parent=0 // pred_region
    %s151 = sand.u32 64, 7
    %p152 = scmp.eq.s32.totalorder %s151, 0
    // Predicated region
    $region119: #{text_image_lstm_encoder_forward.1} parent=106 // pred_check
      %p153 = pneg %p152
    $region120: #{text_image_lstm_encoder_forward.1} parent=106 // pred_check_branch
      %155 = sbr.rel (%p153) target = $region122
    $region121: #{text_image_lstm_encoder_forward.1} parent=106 // pred_region
      loop: start=0, step=1, limit=1
      $region123: #{text_image_lstm_encoder_forward.1} parent=121 // loop_pre_header
        _
      $region124: #{text_image_lstm_encoder_forward.1} parent=121 // loop_header
        %s157 = sphi 0, %s161
        %p158 = scmp.ge.s32.totalorder %s157, 1
        %s162 = sphi %s18, %s18
        %s163 = sphi [#allocation5], [#allocation5]
      $region125: #{text_image_lstm_encoder_forward.1} parent=121 // loop_header_branch
        %160 = sbr.rel (%p158) target = $region129
      $region126: #{text_image_lstm_encoder_forward.1} parent=121 // loop_body
        %v164 = vld [vmem:[%s162] sm:$0xff]
        %165 = vst [vmem:[%s163] sm:$0xff] %v164
        %v166 = vld [vmem:[%s162 + $0x8] sm:$0xff]
        %167 = vst [vmem:[%s163 + $0x8] sm:$0xff] %v166
        %v168 = vld [vmem:[%s162 + $0x10] sm:$0xff]
        %169 = vst [vmem:[%s163 + $0x10] sm:$0xff] %v168
        %v170 = vld [vmem:[%s162 + $0x18] sm:$0xff]
        %171 = vst [vmem:[%s163 + $0x18] sm:$0xff] %v170
        %v172 = vld [vmem:[%s162 + $0x20] sm:$0xff]
        %173 = vst [vmem:[%s163 + $0x20] sm:$0xff] %v172
        %v174 = vld [vmem:[%s162 + $0x28] sm:$0xff]
        %175 = vst [vmem:[%s163 + $0x28] sm:$0xff] %v174
        %v176 = vld [vmem:[%s162 + $0x30] sm:$0xff]
        %177 = vst [vmem:[%s163 + $0x30] sm:$0xff] %v176
        %v178 = vld [vmem:[%s162 + $0x38] sm:$0xff]
        %179 = vst [vmem:[%s163 + $0x38] sm:$0xff] %v178
      $region127: #{text_image_lstm_encoder_forward.1} parent=121 // loop_footer
        %s161 = sadd.s32 1, %s157
      $region128: #{text_image_lstm_encoder_forward.1} parent=121 // loop_footer_branch
        %156 = sbr.rel target = $region124
      $region129: #{text_image_lstm_encoder_forward.1} parent=121 // loop_exit
        _
    $region122: #{text_image_lstm_encoder_forward.1} parent=106 // pred_fallthru
      _
    %p180 = pneg %p152
    // Predicated region
    $region130: #{text_image_lstm_encoder_forward.1} parent=106 // pred_check
      _
    $region131: #{text_image_lstm_encoder_forward.1} parent=106 // pred_check_branch
      %182 = sbr.rel (%p152) target = $region133
    $region132: #{text_image_lstm_encoder_forward.1} parent=106 // pred_region
      %s183 = sand.u32 64, 7
    $region133: #{text_image_lstm_encoder_forward.1} parent=106 // pred_fallthru
      _
  $region107: #{text_image_lstm_encoder_forward.1} parent=0 // pred_fallthru
    _
  // Predicated region
  $region108: #{text_image_lstm_encoder_forward.1} parent=0 // pred_check
    %p137 = pneg %p133
  $region109: #{text_image_lstm_encoder_forward.1} parent=0 // pred_check_branch
    %139 = sbr.rel (%p137) target = $region111
  $region110: #{text_image_lstm_encoder_forward.1} parent=0 // pred_region
    %s140 = sshllo.u32 0, 64
    loop: start=0, step=1, limit=1
    $region112: #{text_image_lstm_encoder_forward.1} parent=110 // loop_pre_header
      _
    $region113: #{text_image_lstm_encoder_forward.1} parent=110 // loop_header
      %s142 = sphi 0, %s146
      %p143 = scmp.ge.s32.totalorder %s142, 1
      %s147 = sphi %s18, %s18
      %s148 = sphi [#allocation5], [#allocation5]
    $region114: #{text_image_lstm_encoder_forward.1} parent=110 // loop_header_branch
      %145 = sbr.rel (%p143) target = $region118
    $region115: #{text_image_lstm_encoder_forward.1} parent=110 // loop_body
      %v149 = vld [vmem:[%s147] sm:%s140]
      %150 = vst [vmem:[%s148] sm:%s140] %v149
    $region116: #{text_image_lstm_encoder_forward.1} parent=110 // loop_footer
      %s146 = sadd.s32 1, %s142
    $region117: #{text_image_lstm_encoder_forward.1} parent=110 // loop_footer_branch
      %141 = sbr.rel target = $region113
    $region118: #{text_image_lstm_encoder_forward.1} parent=110 // loop_exit
      _
  $region111: #{text_image_lstm_encoder_forward.1} parent=0 // pred_fallthru
    _
  // Predicated region
  $region134: #{text_image_lstm_encoder_forward.1} parent=0 // pred_check
    _
  $region135: #{text_image_lstm_encoder_forward.1} parent=0 // pred_check_branch
    %186 = sbr.rel (0) target = $region137
  $region136: #{text_image_lstm_encoder_forward.1} parent=0 // pred_region
    %187 = vsyncadd %s131, 1024
  $region137: #{text_image_lstm_encoder_forward.1} parent=0 // pred_fallthru
    _
  %v188 = vlaneseq
  %v189 = vand.u32 %v188, 127
  %v190 = vld [vmem:[%s0] sm:$0xff]
  %v191 = vld [vmem:[%s0 + $0x8] sm:$0xff]
  %v192 = vld [vmem:[%s0 + $0x10] sm:$0xff]
  %v193 = vld [vmem:[%s0 + $0x18] sm:$0xff]
  %v194 = vld [vmem:[%s0 + $0x20] sm:$0xff]
  %v195 = vld [vmem:[%s0 + $0x28] sm:$0xff]
  %v196 = vld [vmem:[%s0 + $0x30] sm:$0xff]
  %v197 = vld [vmem:[%s0 + $0x38] sm:$0xff]
  %198 = vset.pattern.permute.xlu0 0
  %199 = vperm.xlu0 %198, %v190
  %v200 = vpop.permute.xlu0 %199
  %201 = vset.pattern.permute.xlu0 0
  %202 = vperm.xlu0 %201, %v191
  %v203 = vpop.permute.xlu0 %202
  %204 = vset.pattern.permute.xlu0 0
  %205 = vperm.xlu0 %204, %v192
  %v206 = vpop.permute.xlu0 %205
  %207 = vset.pattern.permute.xlu0 0
  %208 = vperm.xlu0 %207, %v193
  %v209 = vpop.permute.xlu0 %208
  %210 = vset.pattern.permute.xlu0 0
  %211 = vperm.xlu0 %210, %v194
  %v212 = vpop.permute.xlu0 %211
  %213 = vset.pattern.permute.xlu0 0
  %214 = vperm.xlu0 %213, %v195
  %v215 = vpop.permute.xlu0 %214
  %216 = vset.pattern.permute.xlu0 0
  %217 = vperm.xlu0 %216, %v196
  %v218 = vpop.permute.xlu0 %217
  %219 = vset.pattern.permute.xlu0 0
  %220 = vperm.xlu0 %219, %v197
  %v221 = vpop.permute.xlu0 %220
  %vm222 = vcmp.eq.s32.totalorder %v200, %v189
  %vm223 = vcmp.eq.s32.totalorder %v203, %v189
  %vm224 = vcmp.eq.s32.totalorder %v206, %v189
  %vm225 = vcmp.eq.s32.totalorder %v209, %v189
  %vm226 = vcmp.eq.s32.totalorder %v212, %v189
  %vm227 = vcmp.eq.s32.totalorder %v215, %v189
  %vm228 = vcmp.eq.s32.totalorder %v218, %v189
  %vm229 = vcmp.eq.s32.totalorder %v221, %v189
  %v230 = vsel %vm222, 1, 0
  %v231 = vsel %vm223, 1, 0
  %v232 = vsel %vm224, 1, 0
  %v233 = vsel %vm225, 1, 0
  %v234 = vsel %vm226, 1, 0
  %v235 = vsel %vm227, 1, 0
  %v236 = vsel %vm228, 1, 0
  %v237 = vsel %vm229, 1, 0
  %v238 = vcvt.s32.f32 %v230
  %v239 = vcvt.s32.f32 %v231
  %v240 = vcvt.s32.f32 %v232
  %v241 = vcvt.s32.f32 %v233
  %v242 = vcvt.s32.f32 %v234
  %v243 = vcvt.s32.f32 %v235
  %v244 = vcvt.s32.f32 %v236
  %v245 = vcvt.s32.f32 %v237
  %v246 = vpack.c.bf16 %v239, %v238
  %v247 = vpack.c.bf16 %v241, %v240
  %v248 = vpack.c.bf16 %v243, %v242
  %v249 = vpack.c.bf16 %v245, %v244
  %v250 = vld [vmem:[%s1] sm:$0xff]
  %v251 = vld [vmem:[%s1 + $0x8] sm:$0xff]
  %v252 = vld [vmem:[%s1 + $0x10] sm:$0xff]
  %v253 = vld [vmem:[%s1 + $0x18] sm:$0xff]
  %v254 = vld [vmem:[%s1 + $0x20] sm:$0xff]
  %v255 = vld [vmem:[%s1 + $0x28] sm:$0xff]
  %v256 = vld [vmem:[%s1 + $0x30] sm:$0xff]
  %v257 = vld [vmem:[%s1 + $0x38] sm:$0xff]
  %258 = vset.pattern.permute.xlu0 0
  %259 = vperm.xlu0 %258, %v250
  %v260 = vpop.permute.xlu0 %259
  %261 = vset.pattern.permute.xlu0 0
  %262 = vperm.xlu0 %261, %v251
  %v263 = vpop.permute.xlu0 %262
  %264 = vset.pattern.permute.xlu0 0
  %265 = vperm.xlu0 %264, %v252
  %v266 = vpop.permute.xlu0 %265
  %267 = vset.pattern.permute.xlu0 0
  %268 = vperm.xlu0 %267, %v253
  %v269 = vpop.permute.xlu0 %268
  %270 = vset.pattern.permute.xlu0 0
  %271 = vperm.xlu0 %270, %v254
  %v272 = vpop.permute.xlu0 %271
  %273 = vset.pattern.permute.xlu0 0
  %274 = vperm.xlu0 %273, %v255
  %v275 = vpop.permute.xlu0 %274
  %276 = vset.pattern.permute.xlu0 0
  %277 = vperm.xlu0 %276, %v256
  %v278 = vpop.permute.xlu0 %277
  %279 = vset.pattern.permute.xlu0 0
  %280 = vperm.xlu0 %279, %v257
  %v281 = vpop.permute.xlu0 %280
  %vm282 = vcmp.eq.s32.totalorder %v260, %v189
  %vm283 = vcmp.eq.s32.totalorder %v263, %v189
  %vm284 = vcmp.eq.s32.totalorder %v266, %v189
  %vm285 = vcmp.eq.s32.totalorder %v269, %v189
  %vm286 = vcmp.eq.s32.totalorder %v272, %v189
  %vm287 = vcmp.eq.s32.totalorder %v275, %v189
  %vm288 = vcmp.eq.s32.totalorder %v278, %v189
  %vm289 = vcmp.eq.s32.totalorder %v281, %v189
  %v290 = vsel %vm282, 1, 0
  %v291 = vsel %vm283, 1, 0
  %v292 = vsel %vm284, 1, 0
  %v293 = vsel %vm285, 1, 0
  %v294 = vsel %vm286, 1, 0
  %v295 = vsel %vm287, 1, 0
  %v296 = vsel %vm288, 1, 0
  %v297 = vsel %vm289, 1, 0
  %v298 = vcvt.s32.f32 %v290
  %v299 = vcvt.s32.f32 %v291
  %v300 = vcvt.s32.f32 %v292
  %v301 = vcvt.s32.f32 %v293
  %v302 = vcvt.s32.f32 %v294
  %v303 = vcvt.s32.f32 %v295
  %v304 = vcvt.s32.f32 %v296
  %v305 = vcvt.s32.f32 %v297
  %v306 = vpack.c.bf16 %v299, %v298
  %v307 = vpack.c.bf16 %v301, %v300
  %v308 = vpack.c.bf16 %v303, %v302
  %v309 = vpack.c.bf16 %v305, %v304
  %v310 = vld [vmem:[%s6] sm:$0xf]
  %v311 = vld [vmem:[%s6 + $0x4] sm:$0xf]
  %v312 = vld [vmem:[%s6 + $0x8] sm:$0xf]
  %v313 = vld [vmem:[%s6 + $0xc] sm:$0xf]
  %v314 = vld [vmem:[%s6 + $0x10] sm:$0xf]
  %v315 = vld [vmem:[%s6 + $0x14] sm:$0xf]
  %v316 = vld [vmem:[%s6 + $0x18] sm:$0xf]
  %v317 = vld [vmem:[%s6 + $0x1c] sm:$0xf]
  %v318 = vld [vmem:[%s6 + $0x20] sm:$0xf]
  %v319 = vld [vmem:[%s6 + $0x24] sm:$0xf]
  %v320 = vld [vmem:[%s6 + $0x28] sm:$0xf]
  %v321 = vld [vmem:[%s6 + $0x2c] sm:$0xf]
  %v322 = vld [vmem:[%s6 + $0x30] sm:$0x3]
  %v336 = vunpack.c.l.b16 %v310
  %v337 = vunpack.c.l.b16 %v311
  %v338 = vunpack.c.l.b16 %v312
  %v339 = vunpack.c.l.b16 %v313
  %v340 = vunpack.c.l.b16 %v314
  %v341 = vunpack.c.l.b16 %v315
  %v342 = vunpack.c.l.b16 %v316
  %v343 = vunpack.c.l.b16 %v317
  %v344 = vunpack.c.l.b16 %v318
  %v345 = vunpack.c.l.b16 %v319
  %v346 = vunpack.c.l.b16 %v320
  %v347 = vunpack.c.l.b16 %v321
  %v348 = vunpack.c.l.b16 %v322
  %v349 = vpack.c.b16 %v337, %v336
  %v350 = vpack.c.b16 %v339, %v338
  %v351 = vpack.c.b16 %v341, %v340
  %v352 = vpack.c.b16 %v343, %v342
  %v353 = vpack.c.b16 %v345, %v344
  %v354 = vpack.c.b16 %v347, %v346
  %v355 = vpack.c.b16 %v348, %v348
  %vm362 = vcmask 818176
  %v364 = vsel %vm362, %v246, 0
  %v367 = vsel %vm362, %v247, 0
  %v370 = vsel %vm362, %v248, 0
  %v373 = vsel %vm362, %v249, 0
  %vm375 = vcmask 1041408
  %v377 = vsel %vm375, %v355, 0
  %379 = vmatprep.subr.bf16.mxu0 0
  %380 = vmatpush1.bf16.msra.mxu0 %v349
  %381 = vmatprep.subr.bf16.mxu0 0
  %382 = vmatpush1.bf16.msra.mxu0 %v350
  %383 = vmatprep.subr.bf16.mxu0 0
  %384 = vmatpush1.bf16.msra.mxu0 %v351
  %385 = vmatprep.subr.bf16.mxu0 0
  %386 = vmatpush1.bf16.msra.mxu0 %v352
  %387 = vmatprep.subr.bf16.mxu0 0
  %388 = vmatpush1.bf16.msra.mxu0 %v353
  %389 = vmatprep.subr.bf16.mxu0 0
  %390 = vmatpush1.bf16.msra.mxu0 %v354
  %391 = vmatprep.subr.bf16.mxu0 0
  %392 = vmatpush1.bf16.msra.mxu0 %v377
  %393 = vmatprep.subr.bf16.mxu0 0
  %394 = vmatpush1.bf16.msra.mxu0 0
  %395 = vmatprep.subr.bf16.mxu0 0
  %396 = vmatpush1.bf16.msra.mxu0 0
  %397 = vmatprep.subr.bf16.mxu0 0
  %398 = vmatpush1.bf16.msra.mxu0 0
  %399 = vmatprep.subr.bf16.mxu0 0
  %400 = vmatpush1.bf16.msra.mxu0 0
  %401 = vmatprep.subr.bf16.mxu0 0
  %402 = vmatpush1.bf16.msra.mxu0 0
  %403 = vmatprep.subr.bf16.mxu0 0
  %404 = vmatpush1.bf16.msra.mxu0 0
  %405 = vmatprep.subr.bf16.mxu0 0
  %406 = vmatpush1.bf16.msra.mxu0 0
  %407 = vmatprep.subr.bf16.mxu0 0
  %408 = vmatpush1.bf16.msra.mxu0 0
  %409 = vmatprep.subr.bf16.mxu0 0
  %410 = vmatpush1.bf16.msra.mxu0 0
  %411 = vmatprep.mubr.bf16.mxu0 0
  %412 = vmatmul.mubr.bf16.gmra.mrb[0].mxu0 %v364
  %v413 = vpop.f32.mrb[0].mxu0
  %v414 = vadd.f32 0.0, %v413
  %v415 = vpop.f32.mrb[0].mxu0
  %v416 = vpop.f32.mrb[0].mxu0
  %v417 = vadd.f32 0.0, %v416
  %v418 = vpop.f32.mrb[0].mxu0
  %419 = vmatprep.mubr.bf16.mxu0 0
  %420 = vmatmul.mubr.bf16.gmra.mrb[0].mxu0 %v367
  %v421 = vpop.f32.mrb[0].mxu0
  %v422 = vadd.f32 0.0, %v421
  %v423 = vpop.f32.mrb[0].mxu0
  %v424 = vpop.f32.mrb[0].mxu0
  %v425 = vadd.f32 0.0, %v424
  %v426 = vpop.f32.mrb[0].mxu0
  %427 = vmatprep.mubr.bf16.mxu0 0
  %428 = vmatmul.mubr.bf16.gmra.mrb[0].mxu0 %v370
  %v429 = vpop.f32.mrb[0].mxu0
  %v430 = vadd.f32 0.0, %v429
  %v431 = vpop.f32.mrb[0].mxu0
  %v432 = vpop.f32.mrb[0].mxu0
  %v433 = vadd.f32 0.0, %v432
  %v434 = vpop.f32.mrb[0].mxu0
  %435 = vmatprep.mubr.bf16.mxu0 0
  %436 = vmatmul.mubr.bf16.gmra.mrb[0].mxu0 %v373
  %v437 = vpop.f32.mrb[0].mxu0
  %v438 = vadd.f32 0.0, %v437
  %v439 = vpop.f32.mrb[0].mxu0
  %v440 = vpop.f32.mrb[0].mxu0
  %v441 = vadd.f32 0.0, %v440
  %v442 = vpop.f32.mrb[0].mxu0
  %443 = vdwg.mxu0
  %v444 = vpack.c.bf16 %v417, %v414
  %v445 = vpack.c.bf16 %v425, %v422
  %v446 = vpack.c.bf16 %v433, %v430
  %v447 = vpack.c.bf16 %v441, %v438
  %v449 = vsel %vm362, %v306, 0
  %v452 = vsel %vm362, %v307, 0
  %v455 = vsel %vm362, %v308, 0
  %v458 = vsel %vm362, %v309, 0
  %460 = vmatprep.subr.bf16.mxu0 0
  %461 = vmatpush1.bf16.msra.mxu0 %v349
  %462 = vmatprep.subr.bf16.mxu0 0
  %463 = vmatpush1.bf16.msra.mxu0 %v350
  %464 = vmatprep.subr.bf16.mxu0 0
  %465 = vmatpush1.bf16.msra.mxu0 %v351
  %466 = vmatprep.subr.bf16.mxu0 0
  %467 = vmatpush1.bf16.msra.mxu0 %v352
  %468 = vmatprep.subr.bf16.mxu0 0
  %469 = vmatpush1.bf16.msra.mxu0 %v353
  %470 = vmatprep.subr.bf16.mxu0 0
  %471 = vmatpush1.bf16.msra.mxu0 %v354
  %472 = vmatprep.subr.bf16.mxu0 0
  %473 = vmatpush1.bf16.msra.mxu0 %v377
  %474 = vmatprep.subr.bf16.mxu0 0
  %475 = vmatpush1.bf16.msra.mxu0 0
  %476 = vmatprep.subr.bf16.mxu0 0
  %477 = vmatpush1.bf16.msra.mxu0 0
  %478 = vmatprep.subr.bf16.mxu0 0
  %479 = vmatpush1.bf16.msra.mxu0 0
  %480 = vmatprep.subr.bf16.mxu0 0
  %481 = vmatpush1.bf16.msra.mxu0 0
  %482 = vmatprep.subr.bf16.mxu0 0
  %483 = vmatpush1.bf16.msra.mxu0 0
  %484 = vmatprep.subr.bf16.mxu0 0
  %485 = vmatpush1.bf16.msra.mxu0 0
  %486 = vmatprep.subr.bf16.mxu0 0
  %487 = vmatpush1.bf16.msra.mxu0 0
  %488 = vmatprep.subr.bf16.mxu0 0
  %489 = vmatpush1.bf16.msra.mxu0 0
  %490 = vmatprep.subr.bf16.mxu0 0
  %491 = vmatpush1.bf16.msra.mxu0 0
  %492 = vmatprep.mubr.bf16.mxu0 0
  %493 = vmatmul.mubr.bf16.gmra.mrb[0].mxu0 %v449
  %v494 = vpop.f32.mrb[0].mxu0
  %v495 = vadd.f32 0.0, %v494
  %v496 = vpop.f32.mrb[0].mxu0
  %v497 = vpop.f32.mrb[0].mxu0
  %v498 = vadd.f32 0.0, %v497
  %v499 = vpop.f32.mrb[0].mxu0
  %500 = vmatprep.mubr.bf16.mxu0 0
  %501 = vmatmul.mubr.bf16.gmra.mrb[0].mxu0 %v452
  %v502 = vpop.f32.mrb[0].mxu0
  %v503 = vadd.f32 0.0, %v502
  %v504 = vpop.f32.mrb[0].mxu0
  %v505 = vpop.f32.mrb[0].mxu0
  %v506 = vadd.f32 0.0, %v505
  %v507 = vpop.f32.mrb[0].mxu0
  %508 = vmatprep.mubr.bf16.mxu0 0
  %509 = vmatmul.mubr.bf16.gmra.mrb[0].mxu0 %v455
  %v510 = vpop.f32.mrb[0].mxu0
  %v511 = vadd.f32 0.0, %v510
  %v512 = vpop.f32.mrb[0].mxu0
  %v513 = vpop.f32.mrb[0].mxu0
  %v514 = vadd.f32 0.0, %v513
  %v515 = vpop.f32.mrb[0].mxu0
  %516 = vmatprep.mubr.bf16.mxu0 0
  %517 = vmatmul.mubr.bf16.gmra.mrb[0].mxu0 %v458
  %v518 = vpop.f32.mrb[0].mxu0
  %v519 = vadd.f32 0.0, %v518
  %v520 = vpop.f32.mrb[0].mxu0
  %v521 = vpop.f32.mrb[0].mxu0
  %v522 = vadd.f32 0.0, %v521
  %v523 = vpop.f32.mrb[0].mxu0
  %524 = vdwg.mxu0
  %v525 = vpack.c.bf16 %v498, %v495
  %v526 = vpack.c.bf16 %v506, %v503
  %v527 = vpack.c.bf16 %v514, %v511
  %v528 = vpack.c.bf16 %v522, %v519
  %v529 = vld [vmem:[%s7] sm:$0xff]
  %v530 = vld [vmem:[%s7 + $0x8] sm:$0xff]
  %v531 = vld [vmem:[%s7 + $0x10] sm:$0xff]
  %v532 = vld [vmem:[%s7 + $0x18] sm:$0xff]
  %v533 = vld [vmem:[%s7 + $0x20] sm:$0xff]
  %v534 = vld [vmem:[%s7 + $0x28] sm:$0xff]
  %v535 = vld [vmem:[%s7 + $0x30] sm:$0xff]
  %v536 = vld [vmem:[%s7 + $0x38] sm:$0xff]
  %v537 = vld [vmem:[%s9] sm:$0xf]
  %v539 = vlaneseq
  %v540 = vshrl.u32 %v539, 7
  %v541 = vsub.s32 0, %v540
  %v542 = vrot.slane %v537, %v541
  %v543 = vlaneseq
  %v544 = vshrl.u32 %v543, 7
  %v545 = vsub.s32 1, %v544
  %v546 = vrot.slane %v537, %v545
  %v547 = vlaneseq
  %v548 = vshrl.u32 %v547, 7
  %v549 = vsub.s32 2, %v548
  %v550 = vrot.slane %v537, %v549
  %v551 = vlaneseq
  %v552 = vshrl.u32 %v551, 7
  %v553 = vsub.s32 3, %v552
  %v554 = vrot.slane %v537, %v553
  %v567 = vunpack.c.l.b16 %v529
  %v568 = vunpack.c.h.b16 %v529
  %v569 = vunpack.c.l.b16 %v530
  %v570 = vunpack.c.h.b16 %v530
  %v571 = vunpack.c.l.b16 %v531
  %v572 = vunpack.c.h.b16 %v531
  %v573 = vunpack.c.l.b16 %v532
  %v574 = vunpack.c.h.b16 %v532
  %v575 = vunpack.c.l.b16 %v533
  %v576 = vunpack.c.h.b16 %v533
  %v577 = vunpack.c.l.b16 %v534
  %v578 = vunpack.c.h.b16 %v534
  %v579 = vunpack.c.l.b16 %v535
  %v580 = vunpack.c.h.b16 %v535
  %v581 = vunpack.c.l.b16 %v536
  %v582 = vunpack.c.h.b16 %v536
  %v583 = vpack.c.b16 %v571, %v567
  %v584 = vpack.c.b16 %v572, %v568
  %v585 = vpack.c.b16 %v573, %v569
  %v586 = vpack.c.b16 %v574, %v570
  %v587 = vpack.c.b16 %v579, %v575
  %v588 = vpack.c.b16 %v580, %v576
  %v589 = vpack.c.b16 %v581, %v577
  %v590 = vpack.c.b16 %v582, %v578
  %vm599 = vcmask 261120
  %v601 = vsel %vm599, %v444, 0
  %v604 = vsel %vm599, %v445, 0
  %v607 = vsel %vm599, %v446, 0
  %v610 = vsel %vm599, %v447, 0
  %612 = vmatprep.subr.bf16.mxu0 %v584
  %613 = vmatpush1.bf16.msra.mxu0 %v583
  %614 = vmatprep.subr.bf16.mxu0 %v588
  %615 = vmatpush1.bf16.msra.mxu0 %v587
  %616 = vmatprep.subr.bf16.mxu0 0
  %617 = vmatpush1.bf16.msra.mxu0 0
  %618 = vmatprep.subr.bf16.mxu0 0
  %619 = vmatpush1.bf16.msra.mxu0 0
  %620 = vmatprep.subr.bf16.mxu0 0
  %621 = vmatpush1.bf16.msra.mxu0 0
  %622 = vmatprep.subr.bf16.mxu0 0
  %623 = vmatpush1.bf16.msra.mxu0 0
  %624 = vmatprep.subr.bf16.mxu0 0
  %625 = vmatpush1.bf16.msra.mxu0 0
  %626 = vmatprep.subr.bf16.mxu0 0
  %627 = vmatpush1.bf16.msra.mxu0 0
  %628 = vmatprep.subr.bf16.mxu0 0
  %629 = vmatpush1.bf16.msra.mxu0 0
  %630 = vmatprep.subr.bf16.mxu0 0
  %631 = vmatpush1.bf16.msra.mxu0 0
  %632 = vmatprep.subr.bf16.mxu0 0
  %633 = vmatpush1.bf16.msra.mxu0 0
  %634 = vmatprep.subr.bf16.mxu0 0
  %635 = vmatpush1.bf16.msra.mxu0 0
  %636 = vmatprep.subr.bf16.mxu0 0
  %637 = vmatpush1.bf16.msra.mxu0 0
  %638 = vmatprep.subr.bf16.mxu0 0
  %639 = vmatpush1.bf16.msra.mxu0 0
  %640 = vmatprep.subr.bf16.mxu0 0
  %641 = vmatpush1.bf16.msra.mxu0 0
  %642 = vmatprep.subr.bf16.mxu0 0
  %643 = vmatpush1.bf16.msra.mxu0 0
  %644 = vmatprep.mubr.bf16.mxu0 0
  %645 = vmatmul.mubr.bf16.gmra.mrb[0].mxu0 %v601
  %v646 = vpop.f32.mrb[0].mxu0
  %v647 = vadd.f32 %v542, %v646
  %v648 = vpop.f32.mrb[0].mxu0
  %v649 = vadd.f32 %v546, %v648
  %v650 = vpop.f32.mrb[0].mxu0
  %v651 = vadd.f32 %v542, %v650
  %v652 = vpop.f32.mrb[0].mxu0
  %v653 = vadd.f32 %v546, %v652
  %654 = vmatprep.mubr.bf16.mxu0 0
  %655 = vmatmul.mubr.bf16.gmra.mrb[0].mxu0 %v604
  %v656 = vpop.f32.mrb[0].mxu0
  %v657 = vadd.f32 %v542, %v656
  %v658 = vpop.f32.mrb[0].mxu0
  %v659 = vadd.f32 %v546, %v658
  %v660 = vpop.f32.mrb[0].mxu0
  %v661 = vadd.f32 %v542, %v660
  %v662 = vpop.f32.mrb[0].mxu0
  %v663 = vadd.f32 %v546, %v662
  %664 = vmatprep.mubr.bf16.mxu0 0
  %665 = vmatmul.mubr.bf16.gmra.mrb[0].mxu0 %v607
  %v666 = vpop.f32.mrb[0].mxu0
  %v667 = vadd.f32 %v542, %v666
  %v668 = vpop.f32.mrb[0].mxu0
  %v669 = vadd.f32 %v546, %v668
  %v670 = vpop.f32.mrb[0].mxu0
  %v671 = vadd.f32 %v542, %v670
  %v672 = vpop.f32.mrb[0].mxu0
  %v673 = vadd.f32 %v546, %v672
  %674 = vmatprep.mubr.bf16.mxu0 0
  %675 = vmatmul.mubr.bf16.gmra.mrb[0].mxu0 %v610
  %v676 = vpop.f32.mrb[0].mxu0
  %v677 = vadd.f32 %v542, %v676
  %v678 = vpop.f32.mrb[0].mxu0
  %v679 = vadd.f32 %v546, %v678
  %v680 = vpop.f32.mrb[0].mxu0
  %v681 = vadd.f32 %v542, %v680
  %v682 = vpop.f32.mrb[0].mxu0
  %v683 = vadd.f32 %v546, %v682
  %684 = vdwg.mxu0
  %685 = vmatprep.subr.bf16.mxu0 %v586
  %686 = vmatpush1.bf16.msra.mxu0 %v585
  %687 = vmatprep.subr.bf16.mxu0 %v590
  %688 = vmatpush1.bf16.msra.mxu0 %v589
  %689 = vmatprep.subr.bf16.mxu0 0
  %690 = vmatpush1.bf16.msra.mxu0 0
  %691 = vmatprep.subr.bf16.mxu0 0
  %692 = vmatpush1.bf16.msra.mxu0 0
  %693 = vmatprep.subr.bf16.mxu0 0
  %694 = vmatpush1.bf16.msra.mxu0 0
  %695 = vmatprep.subr.bf16.mxu0 0
  %696 = vmatpush1.bf16.msra.mxu0 0
  %697 = vmatprep.subr.bf16.mxu0 0
  %698 = vmatpush1.bf16.msra.mxu0 0
  %699 = vmatprep.subr.bf16.mxu0 0
  %700 = vmatpush1.bf16.msra.mxu0 0
  %701 = vmatprep.subr.bf16.mxu0 0
  %702 = vmatpush1.bf16.msra.mxu0 0
  %703 = vmatprep.subr.bf16.mxu0 0
  %704 = vmatpush1.bf16.msra.mxu0 0
  %705 = vmatprep.subr.bf16.mxu0 0
  %706 = vmatpush1.bf16.msra.mxu0 0
  %707 = vmatprep.subr.bf16.mxu0 0
  %708 = vmatpush1.bf16.msra.mxu0 0
  %709 = vmatprep.subr.bf16.mxu0 0
  %710 = vmatpush1.bf16.msra.mxu0 0
  %711 = vmatprep.subr.bf16.mxu0 0
  %712 = vmatpush1.bf16.msra.mxu0 0
  %713 = vmatprep.subr.bf16.mxu0 0
  %714 = vmatpush1.bf16.msra.mxu0 0
  %715 = vmatprep.subr.bf16.mxu0 0
  %716 = vmatpush1.bf16.msra.mxu0 0
  %717 = vmatprep.mubr.bf16.mxu0 0
  %718 = vmatmul.mubr.bf16.gmra.mrb[0].mxu0 %v601
  %v719 = vpop.f32.mrb[0].mxu0
  %v720 = vadd.f32 %v550, %v719
  %v721 = vpop.f32.mrb[0].mxu0
  %v722 = vadd.f32 %v554, %v721
  %v723 = vpop.f32.mrb[0].mxu0
  %v724 = vadd.f32 %v550, %v723
  %v725 = vpop.f32.mrb[0].mxu0
  %v726 = vadd.f32 %v554, %v725
  %727 = vmatprep.mubr.bf16.mxu0 0
  %728 = vmatmul.mubr.bf16.gmra.mrb[0].mxu0 %v604
  %v729 = vpop.f32.mrb[0].mxu0
  %v730 = vadd.f32 %v550, %v729
  %v731 = vpop.f32.mrb[0].mxu0
  %v732 = vadd.f32 %v554, %v731
  %v733 = vpop.f32.mrb[0].mxu0
  %v734 = vadd.f32 %v550, %v733
  %v735 = vpop.f32.mrb[0].mxu0
  %v736 = vadd.f32 %v554, %v735
  %737 = vmatprep.mubr.bf16.mxu0 0
  %738 = vmatmul.mubr.bf16.gmra.mrb[0].mxu0 %v607
  %v739 = vpop.f32.mrb[0].mxu0
  %v740 = vadd.f32 %v550, %v739
  %v741 = vpop.f32.mrb[0].mxu0
  %v742 = vadd.f32 %v554, %v741
  %v743 = vpop.f32.mrb[0].mxu0
  %v744 = vadd.f32 %v550, %v743
  %v745 = vpop.f32.mrb[0].mxu0
  %v746 = vadd.f32 %v554, %v745
  %747 = vmatprep.mubr.bf16.mxu0 0
  %748 = vmatmul.mubr.bf16.gmra.mrb[0].mxu0 %v610
  %v749 = vpop.f32.mrb[0].mxu0
  %v750 = vadd.f32 %v550, %v749
  %v751 = vpop.f32.mrb[0].mxu0
  %v752 = vadd.f32 %v554, %v751
  %v753 = vpop.f32.mrb[0].mxu0
  %v754 = vadd.f32 %v550, %v753
  %v755 = vpop.f32.mrb[0].mxu0
  %v756 = vadd.f32 %v554, %v755
  %757 = vdwg.mxu0
  %758 = vst [vmem:[#allocation2] sm:$0xff] %v647
  %759 = vst [vmem:[#allocation2 + $0x8] sm:$0xff] %v649
  %760 = vst [vmem:[#allocation2 + $0x10] sm:$0xff] %v720
  %761 = vst [vmem:[#allocation2 + $0x18] sm:$0xff] %v722
  %762 = vst [vmem:[#allocation2 + $0x20] sm:$0xff] %v651
  %763 = vst [vmem:[#allocation2 + $0x28] sm:$0xff] %v653
  %764 = vst [vmem:[#allocation2 + $0x30] sm:$0xff] %v724
  %765 = vst [vmem:[#allocation2 + $0x38] sm:$0xff] %v726
  %766 = vst [vmem:[#allocation2 + $0x40] sm:$0xff] %v657
  %767 = vst [vmem:[#allocation2 + $0x48] sm:$0xff] %v659
  %768 = vst [vmem:[#allocation2 + $0x50] sm:$0xff] %v730
  %769 = vst [vmem:[#allocation2 + $0x58] sm:$0xff] %v732
  %770 = vst [vmem:[#allocation2 + $0x60] sm:$0xff] %v661
  %771 = vst [vmem:[#allocation2 + $0x68] sm:$0xff] %v663
  %772 = vst [vmem:[#allocation2 + $0x70] sm:$0xff] %v734
  %773 = vst [vmem:[#allocation2 + $0x78] sm:$0xff] %v736
  %774 = vst [vmem:[#allocation2 + $0x80] sm:$0xff] %v667
  %775 = vst [vmem:[#allocation2 + $0x88] sm:$0xff] %v669
  %776 = vst [vmem:[#allocation2 + $0x90] sm:$0xff] %v740
  %777 = vst [vmem:[#allocation2 + $0x98] sm:$0xff] %v742
  %778 = vst [vmem:[#allocation2 + $0xa0] sm:$0xff] %v671
  %779 = vst [vmem:[#allocation2 + $0xa8] sm:$0xff] %v673
  %780 = vst [vmem:[#allocation2 + $0xb0] sm:$0xff] %v744
  %781 = vst [vmem:[#allocation2 + $0xb8] sm:$0xff] %v746
  %782 = vst [vmem:[#allocation2 + $0xc0] sm:$0xff] %v677
  %783 = vst [vmem:[#allocation2 + $0xc8] sm:$0xff] %v679
  %784 = vst [vmem:[#allocation2 + $0xd0] sm:$0xff] %v750
  %785 = vst [vmem:[#allocation2 + $0xd8] sm:$0xff] %v752
  %786 = vst [vmem:[#allocation2 + $0xe0] sm:$0xff] %v681
  %787 = vst [vmem:[#allocation2 + $0xe8] sm:$0xff] %v683
  %788 = vst [vmem:[#allocation2 + $0xf0] sm:$0xff] %v754
  %789 = vst [vmem:[#allocation2 + $0xf8] sm:$0xff] %v756
  %v790 = vld [vmem:[%s10] sm:$0xff]
  %v791 = vld [vmem:[%s10 + $0x8] sm:$0xff]
  %v792 = vld [vmem:[%s10 + $0x10] sm:$0xff]
  %v793 = vld [vmem:[%s10 + $0x18] sm:$0xff]
  %v794 = vld [vmem:[%s10 + $0x20] sm:$0xff]
  %v795 = vld [vmem:[%s10 + $0x28] sm:$0xff]
  %v796 = vld [vmem:[%s10 + $0x30] sm:$0xff]
  %v797 = vld [vmem:[%s10 + $0x38] sm:$0xff]
  %v798 = vld [vmem:[%s12] sm:$0xf]
  %v800 = vlaneseq
  %v801 = vshrl.u32 %v800, 7
  %v802 = vsub.s32 0, %v801
  %v803 = vrot.slane %v798, %v802
  %v804 = vlaneseq
  %v805 = vshrl.u32 %v804, 7
  %v806 = vsub.s32 1, %v805
  %v807 = vrot.slane %v798, %v806
  %v808 = vlaneseq
  %v809 = vshrl.u32 %v808, 7
  %v810 = vsub.s32 2, %v809
  %v811 = vrot.slane %v798, %v810
  %v812 = vlaneseq
  %v813 = vshrl.u32 %v812, 7
  %v814 = vsub.s32 3, %v813
  %v815 = vrot.slane %v798, %v814
  %v828 = vunpack.c.l.b16 %v790
  %v829 = vunpack.c.h.b16 %v790
  %v830 = vunpack.c.l.b16 %v791
  %v831 = vunpack.c.h.b16 %v791
  %v832 = vunpack.c.l.b16 %v792
  %v833 = vunpack.c.h.b16 %v792
  %v834 = vunpack.c.l.b16 %v793
  %v835 = vunpack.c.h.b16 %v793
  %v836 = vunpack.c.l.b16 %v794
  %v837 = vunpack.c.h.b16 %v794
  %v838 = vunpack.c.l.b16 %v795
  %v839 = vunpack.c.h.b16 %v795
  %v840 = vunpack.c.l.b16 %v796
  %v841 = vunpack.c.h.b16 %v796
  %v842 = vunpack.c.l.b16 %v797
  %v843 = vunpack.c.h.b16 %v797
  %v844 = vpack.c.b16 %v832, %v828
  %v845 = vpack.c.b16 %v833, %v829
  %v846 = vpack.c.b16 %v834, %v830
  %v847 = vpack.c.b16 %v835, %v831
  %v848 = vpack.c.b16 %v840, %v836
  %v849 = vpack.c.b16 %v841, %v837
  %v850 = vpack.c.b16 %v842, %v838
  %v851 = vpack.c.b16 %v843, %v839
  %v861 = vsel %vm599, %v525, 0
  %v864 = vsel %vm599, %v526, 0
  %v867 = vsel %vm599, %v527, 0
  %v870 = vsel %vm599, %v528, 0
  %872 = vmatprep.subr.bf16.mxu0 %v845
  %873 = vmatpush1.bf16.msra.mxu0 %v844
  %874 = vmatprep.subr.bf16.mxu0 %v849
  %875 = vmatpush1.bf16.msra.mxu0 %v848
  %876 = vmatprep.subr.bf16.mxu0 0
  %877 = vmatpush1.bf16.msra.mxu0 0
  %878 = vmatprep.subr.bf16.mxu0 0
  %879 = vmatpush1.bf16.msra.mxu0 0
  %880 = vmatprep.subr.bf16.mxu0 0
  %881 = vmatpush1.bf16.msra.mxu0 0
  %882 = vmatprep.subr.bf16.mxu0 0
  %883 = vmatpush1.bf16.msra.mxu0 0
  %884 = vmatprep.subr.bf16.mxu0 0
  %885 = vmatpush1.bf16.msra.mxu0 0
  %886 = vmatprep.subr.bf16.mxu0 0
  %887 = vmatpush1.bf16.msra.mxu0 0
  %888 = vmatprep.subr.bf16.mxu0 0
  %889 = vmatpush1.bf16.msra.mxu0 0
  %890 = vmatprep.subr.bf16.mxu0 0
  %891 = vmatpush1.bf16.msra.mxu0 0
  %892 = vmatprep.subr.bf16.mxu0 0
  %893 = vmatpush1.bf16.msra.mxu0 0
  %894 = vmatprep.subr.bf16.mxu0 0
  %895 = vmatpush1.bf16.msra.mxu0 0
  %896 = vmatprep.subr.bf16.mxu0 0
  %897 = vmatpush1.bf16.msra.mxu0 0
  %898 = vmatprep.subr.bf16.mxu0 0
  %899 = vmatpush1.bf16.msra.mxu0 0
  %900 = vmatprep.subr.bf16.mxu0 0
  %901 = vmatpush1.bf16.msra.mxu0 0
  %902 = vmatprep.subr.bf16.mxu0 0
  %903 = vmatpush1.bf16.msra.mxu0 0
  %904 = vmatprep.mubr.bf16.mxu0 0
  %905 = vmatmul.mubr.bf16.gmra.mrb[0].mxu0 %v861
  %v906 = vpop.f32.mrb[0].mxu0
  %v907 = vadd.f32 %v803, %v906
  %v908 = vpop.f32.mrb[0].mxu0
  %v909 = vadd.f32 %v807, %v908
  %v910 = vpop.f32.mrb[0].mxu0
  %v911 = vadd.f32 %v803, %v910
  %v912 = vpop.f32.mrb[0].mxu0
  %v913 = vadd.f32 %v807, %v912
  %914 = vmatprep.mubr.bf16.mxu0 0
  %915 = vmatmul.mubr.bf16.gmra.mrb[0].mxu0 %v864
  %v916 = vpop.f32.mrb[0].mxu0
  %v917 = vadd.f32 %v803, %v916
  %v918 = vpop.f32.mrb[0].mxu0
  %v919 = vadd.f32 %v807, %v918
  %v920 = vpop.f32.mrb[0].mxu0
  %v921 = vadd.f32 %v803, %v920
  %v922 = vpop.f32.mrb[0].mxu0
  %v923 = vadd.f32 %v807, %v922
  %924 = vmatprep.mubr.bf16.mxu0 0
  %925 = vmatmul.mubr.bf16.gmra.mrb[0].mxu0 %v867
  %v926 = vpop.f32.mrb[0].mxu0
  %v927 = vadd.f32 %v803, %v926
  %v928 = vpop.f32.mrb[0].mxu0
  %v929 = vadd.f32 %v807, %v928
  %v930 = vpop.f32.mrb[0].mxu0
  %v931 = vadd.f32 %v803, %v930
  %v932 = vpop.f32.mrb[0].mxu0
  %v933 = vadd.f32 %v807, %v932
  %934 = vmatprep.mubr.bf16.mxu0 0
  %935 = vmatmul.mubr.bf16.gmra.mrb[0].mxu0 %v870
  %v936 = vpop.f32.mrb[0].mxu0
  %v937 = vadd.f32 %v803, %v936
  %v938 = vpop.f32.mrb[0].mxu0
  %v939 = vadd.f32 %v807, %v938
  %v940 = vpop.f32.mrb[0].mxu0
  %v941 = vadd.f32 %v803, %v940
  %v942 = vpop.f32.mrb[0].mxu0
  %v943 = vadd.f32 %v807, %v942
  %944 = vdwg.mxu0
  %945 = vmatprep.subr.bf16.mxu0 %v847
  %946 = vmatpush1.bf16.msra.mxu0 %v846
  %947 = vmatprep.subr.bf16.mxu0 %v851
  %948 = vmatpush1.bf16.msra.mxu0 %v850
  %949 = vmatprep.subr.bf16.mxu0 0
  %950 = vmatpush1.bf16.msra.mxu0 0
  %951 = vmatprep.subr.bf16.mxu0 0
  %952 = vmatpush1.bf16.msra.mxu0 0
  %953 = vmatprep.subr.bf16.mxu0 0
  %954 = vmatpush1.bf16.msra.mxu0 0
  %955 = vmatprep.subr.bf16.mxu0 0
  %956 = vmatpush1.bf16.msra.mxu0 0
  %957 = vmatprep.subr.bf16.mxu0 0
  %958 = vmatpush1.bf16.msra.mxu0 0
  %959 = vmatprep.subr.bf16.mxu0 0
  %960 = vmatpush1.bf16.msra.mxu0 0
  %961 = vmatprep.subr.bf16.mxu0 0
  %962 = vmatpush1.bf16.msra.mxu0 0
  %963 = vmatprep.subr.bf16.mxu0 0
  %964 = vmatpush1.bf16.msra.mxu0 0
  %965 = vmatprep.subr.bf16.mxu0 0
  %966 = vmatpush1.bf16.msra.mxu0 0
  %967 = vmatprep.subr.bf16.mxu0 0
  %968 = vmatpush1.bf16.msra.mxu0 0
  %969 = vmatprep.subr.bf16.mxu0 0
  %970 = vmatpush1.bf16.msra.mxu0 0
  %971 = vmatprep.subr.bf16.mxu0 0
  %972 = vmatpush1.bf16.msra.mxu0 0
  %973 = vmatprep.subr.bf16.mxu0 0
  %974 = vmatpush1.bf16.msra.mxu0 0
  %975 = vmatprep.subr.bf16.mxu0 0
  %976 = vmatpush1.bf16.msra.mxu0 0
  %977 = vmatprep.mubr.bf16.mxu0 0
  %978 = vmatmul.mubr.bf16.gmra.mrb[0].mxu0 %v861
  %v979 = vpop.f32.mrb[0].mxu0
  %v980 = vadd.f32 %v811, %v979
  %v981 = vpop.f32.mrb[0].mxu0
  %v982 = vadd.f32 %v815, %v981
  %v983 = vpop.f32.mrb[0].mxu0
  %v984 = vadd.f32 %v811, %v983
  %v985 = vpop.f32.mrb[0].mxu0
  %v986 = vadd.f32 %v815, %v985
  %987 = vmatprep.mubr.bf16.mxu0 0
  %988 = vmatmul.mubr.bf16.gmra.mrb[0].mxu0 %v864
  %v989 = vpop.f32.mrb[0].mxu0
  %v990 = vadd.f32 %v811, %v989
  %v991 = vpop.f32.mrb[0].mxu0
  %v992 = vadd.f32 %v815, %v991
  %v993 = vpop.f32.mrb[0].mxu0
  %v994 = vadd.f32 %v811, %v993
  %v995 = vpop.f32.mrb[0].mxu0
  %v996 = vadd.f32 %v815, %v995
  %997 = vmatprep.mubr.bf16.mxu0 0
  %998 = vmatmul.mubr.bf16.gmra.mrb[0].mxu0 %v867
  %v999 = vpop.f32.mrb[0].mxu0
  %v1000 = vadd.f32 %v811, %v999
  %v1001 = vpop.f32.mrb[0].mxu0
  %v1002 = vadd.f32 %v815, %v1001
  %v1003 = vpop.f32.mrb[0].mxu0
  %v1004 = vadd.f32 %v811, %v1003
  %v1005 = vpop.f32.mrb[0].mxu0
  %v1006 = vadd.f32 %v815, %v1005
  %1007 = vmatprep.mubr.bf16.mxu0 0
  %1008 = vmatmul.mubr.bf16.gmra.mrb[0].mxu0 %v870
  %v1009 = vpop.f32.mrb[0].mxu0
  %v1010 = vadd.f32 %v811, %v1009
  %v1011 = vpop.f32.mrb[0].mxu0
  %v1012 = vadd.f32 %v815, %v1011
  %v1013 = vpop.f32.mrb[0].mxu0
  %v1014 = vadd.f32 %v811, %v1013
  %v1015 = vpop.f32.mrb[0].mxu0
  %v1016 = vadd.f32 %v815, %v1015
  %1017 = vdwg.mxu0
  %1018 = vst [vmem:[#allocation3] sm:$0xff] %v907
  %1019 = vst [vmem:[#allocation3 + $0x8] sm:$0xff] %v909
  %1020 = vst [vmem:[#allocation3 + $0x10] sm:$0xff] %v980
  %1021 = vst [vmem:[#allocation3 + $0x18] sm:$0xff] %v982
  %1022 = vst [vmem:[#allocation3 + $0x20] sm:$0xff] %v911
  %1023 = vst [vmem:[#allocation3 + $0x28] sm:$0xff] %v913
  %1024 = vst [vmem:[#allocation3 + $0x30] sm:$0xff] %v984
  %1025 = vst [vmem:[#allocation3 + $0x38] sm:$0xff] %v986
  %1026 = vst [vmem:[#allocation3 + $0x40] sm:$0xff] %v917
  %1027 = vst [vmem:[#allocation3 + $0x48] sm:$0xff] %v919
  %1028 = vst [vmem:[#allocation3 + $0x50] sm:$0xff] %v990
  %1029 = vst [vmem:[#allocation3 + $0x58] sm:$0xff] %v992
  %1030 = vst [vmem:[#allocation3 + $0x60] sm:$0xff] %v921
  %1031 = vst [vmem:[#allocation3 + $0x68] sm:$0xff] %v923
  %1032 = vst [vmem:[#allocation3 + $0x70] sm:$0xff] %v994
  %1033 = vst [vmem:[#allocation3 + $0x78] sm:$0xff] %v996
  %1034 = vst [vmem:[#allocation3 + $0x80] sm:$0xff] %v927
  %1035 = vst [vmem:[#allocation3 + $0x88] sm:$0xff] %v929
  %1036 = vst [vmem:[#allocation3 + $0x90] sm:$0xff] %v1000
  %1037 = vst [vmem:[#allocation3 + $0x98] sm:$0xff] %v1002
  %1038 = vst [vmem:[#allocation3 + $0xa0] sm:$0xff] %v931
  %1039 = vst [vmem:[#allocation3 + $0xa8] sm:$0xff] %v933
  %1040 = vst [vmem:[#allocation3 + $0xb0] sm:$0xff] %v1004
  %1041 = vst [vmem:[#allocation3 + $0xb8] sm:$0xff] %v1006
  %1042 = vst [vmem:[#allocation3 + $0xc0] sm:$0xff] %v937
  %1043 = vst [vmem:[#allocation3 + $0xc8] sm:$0xff] %v939
  %1044 = vst [vmem:[#allocation3 + $0xd0] sm:$0xff] %v1010
  %1045 = vst [vmem:[#allocation3 + $0xd8] sm:$0xff] %v1012
  %1046 = vst [vmem:[#allocation3 + $0xe0] sm:$0xff] %v941
  %1047 = vst [vmem:[#allocation3 + $0xe8] sm:$0xff] %v943
  %1048 = vst [vmem:[#allocation3 + $0xf0] sm:$0xff] %v1014
  %1049 = vst [vmem:[#allocation3 + $0xf8] sm:$0xff] %v1016
  %v1050 = vld [vmem:[%s8] sm:$0xff]
  %v1051 = vld [vmem:[%s8 + $0x8] sm:$0xff]
  %v1052 = vld [vmem:[%s8 + $0x10] sm:$0xff]
  %v1053 = vld [vmem:[%s8 + $0x18] sm:$0xff]
  %v1054 = vld [vmem:[%s8 + $0x20] sm:$0xff]
  %v1055 = vld [vmem:[%s8 + $0x28] sm:$0xff]
  %v1056 = vld [vmem:[%s8 + $0x30] sm:$0xff]
  %v1057 = vld [vmem:[%s8 + $0x38] sm:$0xff]
  %v1058 = vld [vmem:[%s8 + $0x40] sm:$0xff]
  %v1059 = vld [vmem:[%s8 + $0x48] sm:$0xff]
  %v1060 = vld [vmem:[%s8 + $0x50] sm:$0xff]
  %v1061 = vld [vmem:[%s8 + $0x58] sm:$0xff]
  %v1062 = vld [vmem:[%s8 + $0x60] sm:$0xff]
  %v1063 = vld [vmem:[%s8 + $0x68] sm:$0xff]
  %v1064 = vld [vmem:[%s8 + $0x70] sm:$0xff]
  %v1065 = vld [vmem:[%s8 + $0x78] sm:$0xff]
  %v1066 = vld [vmem:[%s8 + $0x80] sm:$0xff]
  %v1067 = vld [vmem:[%s8 + $0x88] sm:$0xff]
  %v1068 = vld [vmem:[%s8 + $0x90] sm:$0xff]
  %v1069 = vld [vmem:[%s8 + $0x98] sm:$0xff]
  %v1070 = vld [vmem:[%s8 + $0xa0] sm:$0xff]
  %v1071 = vld [vmem:[%s8 + $0xa8] sm:$0xff]
  %v1072 = vld [vmem:[%s8 + $0xb0] sm:$0xff]
  %v1073 = vld [vmem:[%s8 + $0xb8] sm:$0xff]
  %v1074 = vld [vmem:[%s8 + $0xc0] sm:$0xff]
  %v1075 = vld [vmem:[%s8 + $0xc8] sm:$0xff]
  %v1076 = vld [vmem:[%s8 + $0xd0] sm:$0xff]
  %v1077 = vld [vmem:[%s8 + $0xd8] sm:$0xff]
  %v1078 = vld [vmem:[%s8 + $0xe0] sm:$0xff]
  %v1079 = vld [vmem:[%s8 + $0xe8] sm:$0xff]
  %v1080 = vld [vmem:[%s8 + $0xf0] sm:$0xff]
  %v1081 = vld [vmem:[%s8 + $0xf8] sm:$0xff]
  %v1082 = vld [vmem:[%s11] sm:$0xff]
  %v1083 = vld [vmem:[%s11 + $0x8] sm:$0xff]
  %v1084 = vld [vmem:[%s11 + $0x10] sm:$0xff]
  %v1085 = vld [vmem:[%s11 + $0x18] sm:$0xff]
  %v1086 = vld [vmem:[%s11 + $0x20] sm:$0xff]
  %v1087 = vld [vmem:[%s11 + $0x28] sm:$0xff]
  %v1088 = vld [vmem:[%s11 + $0x30] sm:$0xff]
  %v1089 = vld [vmem:[%s11 + $0x38] sm:$0xff]
  %v1090 = vld [vmem:[%s11 + $0x40] sm:$0xff]
  %v1091 = vld [vmem:[%s11 + $0x48] sm:$0xff]
  %v1092 = vld [vmem:[%s11 + $0x50] sm:$0xff]
  %v1093 = vld [vmem:[%s11 + $0x58] sm:$0xff]
  %v1094 = vld [vmem:[%s11 + $0x60] sm:$0xff]
  %v1095 = vld [vmem:[%s11 + $0x68] sm:$0xff]
  %v1096 = vld [vmem:[%s11 + $0x70] sm:$0xff]
  %v1097 = vld [vmem:[%s11 + $0x78] sm:$0xff]
  %v1098 = vld [vmem:[%s11 + $0x80] sm:$0xff]
  %v1099 = vld [vmem:[%s11 + $0x88] sm:$0xff]
  %v1100 = vld [vmem:[%s11 + $0x90] sm:$0xff]
  %v1101 = vld [vmem:[%s11 + $0x98] sm:$0xff]
  %v1102 = vld [vmem:[%s11 + $0xa0] sm:$0xff]
  %v1103 = vld [vmem:[%s11 + $0xa8] sm:$0xff]
  %v1104 = vld [vmem:[%s11 + $0xb0] sm:$0xff]
  %v1105 = vld [vmem:[%s11 + $0xb8] sm:$0xff]
  %v1106 = vld [vmem:[%s11 + $0xc0] sm:$0xff]
  %v1107 = vld [vmem:[%s11 + $0xc8] sm:$0xff]
  %v1108 = vld [vmem:[%s11 + $0xd0] sm:$0xff]
  %v1109 = vld [vmem:[%s11 + $0xd8] sm:$0xff]
  %v1110 = vld [vmem:[%s11 + $0xe0] sm:$0xff]
  %v1111 = vld [vmem:[%s11 + $0xe8] sm:$0xff]
  %v1112 = vld [vmem:[%s11 + $0xf0] sm:$0xff]
  %v1113 = vld [vmem:[%s11 + $0xf8] sm:$0xff]
  %v1114 = vld [vmem:[%s2] sm:$0xff]
  %v1115 = vld [vmem:[%s3] sm:$0xff]
  %v1116 = vld [vmem:[#allocation2] sm:$0xff]
  %v1117 = vld [vmem:[#allocation2 + $0x8] sm:$0xff]
  %v1118 = vld [vmem:[#allocation2 + $0x10] sm:$0xff]
  %v1119 = vld [vmem:[#allocation2 + $0x18] sm:$0xff]
  %v1152 = vunpack.c.l.b16 %v1050
  %v1153 = vunpack.c.h.b16 %v1050
  %v1154 = vunpack.c.l.b16 %v1051
  %v1155 = vunpack.c.h.b16 %v1051
  %v1156 = vunpack.c.l.b16 %v1052
  %v1157 = vunpack.c.h.b16 %v1052
  %v1158 = vunpack.c.l.b16 %v1053
  %v1159 = vunpack.c.h.b16 %v1053
  %v1160 = vunpack.c.l.b16 %v1054
  %v1161 = vunpack.c.h.b16 %v1054
  %v1162 = vunpack.c.l.b16 %v1055
  %v1163 = vunpack.c.h.b16 %v1055
  %v1164 = vunpack.c.l.b16 %v1056
  %v1165 = vunpack.c.h.b16 %v1056
  %v1166 = vunpack.c.l.b16 %v1057
  %v1167 = vunpack.c.h.b16 %v1057
  %v1168 = vunpack.c.l.b16 %v1058
  %v1169 = vunpack.c.h.b16 %v1058
  %v1170 = vunpack.c.l.b16 %v1059
  %v1171 = vunpack.c.h.b16 %v1059
  %v1172 = vunpack.c.l.b16 %v1060
  %v1173 = vunpack.c.h.b16 %v1060
  %v1174 = vunpack.c.l.b16 %v1061
  %v1175 = vunpack.c.h.b16 %v1061
  %v1176 = vunpack.c.l.b16 %v1062
  %v1177 = vunpack.c.h.b16 %v1062
  %v1178 = vunpack.c.l.b16 %v1063
  %v1179 = vunpack.c.h.b16 %v1063
  %v1180 = vunpack.c.l.b16 %v1064
  %v1181 = vunpack.c.h.b16 %v1064
  %v1182 = vunpack.c.l.b16 %v1065
  %v1183 = vunpack.c.h.b16 %v1065
  %v1184 = vunpack.c.l.b16 %v1066
  %v1185 = vunpack.c.h.b16 %v1066
  %v1186 = vunpack.c.l.b16 %v1067
  %v1187 = vunpack.c.h.b16 %v1067
  %v1188 = vunpack.c.l.b16 %v1068
  %v1189 = vunpack.c.h.b16 %v1068
  %v1190 = vunpack.c.l.b16 %v1069
  %v1191 = vunpack.c.h.b16 %v1069
  %v1192 = vunpack.c.l.b16 %v1070
  %v1193 = vunpack.c.h.b16 %v1070
  %v1194 = vunpack.c.l.b16 %v1071
  %v1195 = vunpack.c.h.b16 %v1071
  %v1196 = vunpack.c.l.b16 %v1072
  %v1197 = vunpack.c.h.b16 %v1072
  %v1198 = vunpack.c.l.b16 %v1073
  %v1199 = vunpack.c.h.b16 %v1073
  %v1200 = vunpack.c.l.b16 %v1074
  %v1201 = vunpack.c.h.b16 %v1074
  %v1202 = vunpack.c.l.b16 %v1075
  %v1203 = vunpack.c.h.b16 %v1075
  %v1204 = vunpack.c.l.b16 %v1076
  %v1205 = vunpack.c.h.b16 %v1076
  %v1206 = vunpack.c.l.b16 %v1077
  %v1207 = vunpack.c.h.b16 %v1077
  %v1208 = vunpack.c.l.b16 %v1078
  %v1209 = vunpack.c.h.b16 %v1078
  %v1210 = vunpack.c.l.b16 %v1079
  %v1211 = vunpack.c.h.b16 %v1079
  %v1212 = vunpack.c.l.b16 %v1080
  %v1213 = vunpack.c.h.b16 %v1080
  %v1214 = vunpack.c.l.b16 %v1081
  %v1215 = vunpack.c.h.b16 %v1081
  %v1216 = vpack.c.b16 %v1156, %v1152
  %v1217 = vpack.c.b16 %v1157, %v1153
  %v1218 = vpack.c.b16 %v1158, %v1154
  %v1219 = vpack.c.b16 %v1159, %v1155
  %v1220 = vpack.c.b16 %v1164, %v1160
  %v1221 = vpack.c.b16 %v1165, %v1161
  %v1222 = vpack.c.b16 %v1166, %v1162
  %v1223 = vpack.c.b16 %v1167, %v1163
  %v1224 = vpack.c.b16 %v1172, %v1168
  %v1225 = vpack.c.b16 %v1173, %v1169
  %v1226 = vpack.c.b16 %v1174, %v1170
  %v1227 = vpack.c.b16 %v1175, %v1171
  %v1228 = vpack.c.b16 %v1180, %v1176
  %v1229 = vpack.c.b16 %v1181, %v1177
  %v1230 = vpack.c.b16 %v1182, %v1178
  %v1231 = vpack.c.b16 %v1183, %v1179
  %v1232 = vpack.c.b16 %v1188, %v1184
  %v1233 = vpack.c.b16 %v1189, %v1185
  %v1234 = vpack.c.b16 %v1190, %v1186
  %v1235 = vpack.c.b16 %v1191, %v1187
  %v1236 = vpack.c.b16 %v1196, %v1192
  %v1237 = vpack.c.b16 %v1197, %v1193
  %v1238 = vpack.c.b16 %v1198, %v1194
  %v1239 = vpack.c.b16 %v1199, %v1195
  %v1240 = vpack.c.b16 %v1204, %v1200
  %v1241 = vpack.c.b16 %v1205, %v1201
  %v1242 = vpack.c.b16 %v1206, %v1202
  %v1243 = vpack.c.b16 %v1207, %v1203
  %v1244 = vpack.c.b16 %v1212, %v1208
  %v1245 = vpack.c.b16 %v1213, %v1209
  %v1246 = vpack.c.b16 %v1214, %v1210
  %v1247 = vpack.c.b16 %v1215, %v1211
  %1280 = vmatprep.subr.bf16.mxu0 %v1217
  %1281 = vmatpush1.bf16.msra.mxu0 %v1216
  %1282 = vmatprep.subr.bf16.mxu0 %v1221
  %1283 = vmatpush1.bf16.msra.mxu0 %v1220
  %1284 = vmatprep.subr.bf16.mxu0 %v1225
  %1285 = vmatpush1.bf16.msra.mxu0 %v1224
  %1286 = vmatprep.subr.bf16.mxu0 %v1229
  %1287 = vmatpush1.bf16.msra.mxu0 %v1228
  %1288 = vmatprep.subr.bf16.mxu0 %v1233
  %1289 = vmatpush1.bf16.msra.mxu0 %v1232
  %1290 = vmatprep.subr.bf16.mxu0 %v1237
  %1291 = vmatpush1.bf16.msra.mxu0 %v1236
  %1292 = vmatprep.subr.bf16.mxu0 %v1241
  %1293 = vmatpush1.bf16.msra.mxu0 %v1240
  %1294 = vmatprep.subr.bf16.mxu0 %v1245
  %1295 = vmatpush1.bf16.msra.mxu0 %v1244
  %1296 = vmatprep.subr.bf16.mxu0 0
  %1297 = vmatpush1.bf16.msra.mxu0 0
  %1298 = vmatprep.subr.bf16.mxu0 0
  %1299 = vmatpush1.bf16.msra.mxu0 0
  %1300 = vmatprep.subr.bf16.mxu0 0
  %1301 = vmatpush1.bf16.msra.mxu0 0
  %1302 = vmatprep.subr.bf16.mxu0 0
  %1303 = vmatpush1.bf16.msra.mxu0 0
  %1304 = vmatprep.subr.bf16.mxu0 0
  %1305 = vmatpush1.bf16.msra.mxu0 0
  %1306 = vmatprep.subr.bf16.mxu0 0
  %1307 = vmatpush1.bf16.msra.mxu0 0
  %1308 = vmatprep.subr.bf16.mxu0 0
  %1309 = vmatpush1.bf16.msra.mxu0 0
  %1310 = vmatprep.subr.bf16.mxu0 0
  %1311 = vmatpush1.bf16.msra.mxu0 0
  %1312 = vmatprep.mubr.bf16.mxu0 0
  %1313 = vmatmul.mubr.bf16.gmra.mrb[0].mxu0 0
  %v1314 = vpop.f32.mrb[0].mxu0
  %v1315 = vadd.f32 0.0, %v1314
  %v1316 = vpop.f32.mrb[0].mxu0
  %v1317 = vadd.f32 0.0, %v1316
  %v1318 = vpop.f32.mrb[0].mxu0
  %v1319 = vpop.f32.mrb[0].mxu0
  %1320 = vdwg.mxu0
  %1321 = vmatprep.subr.bf16.mxu0 %v1219
  %1322 = vmatpush1.bf16.msra.mxu0 %v1218
  %1323 = vmatprep.subr.bf16.mxu0 %v1223
  %1324 = vmatpush1.bf16.msra.mxu0 %v1222
  %1325 = vmatprep.subr.bf16.mxu0 %v1227
  %1326 = vmatpush1.bf16.msra.mxu0 %v1226
  %1327 = vmatprep.subr.bf16.mxu0 %v1231
  %1328 = vmatpush1.bf16.msra.mxu0 %v1230
  %1329 = vmatprep.subr.bf16.mxu0 %v1235
  %1330 = vmatpush1.bf16.msra.mxu0 %v1234
  %1331 = vmatprep.subr.bf16.mxu0 %v1239
  %1332 = vmatpush1.bf16.msra.mxu0 %v1238
  %1333 = vmatprep.subr.bf16.mxu0 %v1243
  %1334 = vmatpush1.bf16.msra.mxu0 %v1242
  %1335 = vmatprep.subr.bf16.mxu0 %v1247
  %1336 = vmatpush1.bf16.msra.mxu0 %v1246
  %1337 = vmatprep.subr.bf16.mxu0 0
  %1338 = vmatpush1.bf16.msra.mxu0 0
  %1339 = vmatprep.subr.bf16.mxu0 0
  %1340 = vmatpush1.bf16.msra.mxu0 0
  %1341 = vmatprep.subr.bf16.mxu0 0
  %1342 = vmatpush1.bf16.msra.mxu0 0
  %1343 = vmatprep.subr.bf16.mxu0 0
  %1344 = vmatpush1.bf16.msra.mxu0 0
  %1345 = vmatprep.subr.bf16.mxu0 0
  %1346 = vmatpush1.bf16.msra.mxu0 0
  %1347 = vmatprep.subr.bf16.mxu0 0
  %1348 = vmatpush1.bf16.msra.mxu0 0
  %1349 = vmatprep.subr.bf16.mxu0 0
  %1350 = vmatpush1.bf16.msra.mxu0 0
  %1351 = vmatprep.subr.bf16.mxu0 0
  %1352 = vmatpush1.bf16.msra.mxu0 0
  %1353 = vmatprep.mubr.bf16.mxu0 0
  %1354 = vmatmul.mubr.bf16.gmra.mrb[0].mxu0 0
  %v1355 = vpop.f32.mrb[0].mxu0
  %v1356 = vadd.f32 0.0, %v1355
  %v1357 = vpop.f32.mrb[0].mxu0
  %v1358 = vadd.f32 0.0, %v1357
  %v1359 = vpop.f32.mrb[0].mxu0
  %v1360 = vpop.f32.mrb[0].mxu0
  %1361 = vdwg.mxu0
  %v1362 = vadd.f32 %v1116, %v1315
  %v1363 = vadd.f32 %v1117, %v1317
  %v1364 = vadd.f32 %v1118, %v1356
  %v1365 = vadd.f32 %v1119, %v1358
  %v1366 = vld [vmem:[#allocation3] sm:$0xff]
  %v1367 = vld [vmem:[#allocation3 + $0x8] sm:$0xff]
  %v1368 = vld [vmem:[#allocation3 + $0x10] sm:$0xff]
  %v1369 = vld [vmem:[#allocation3 + $0x18] sm:$0xff]
  %v1402 = vunpack.c.l.b16 %v1082
  %v1403 = vunpack.c.h.b16 %v1082
  %v1404 = vunpack.c.l.b16 %v1083
  %v1405 = vunpack.c.h.b16 %v1083
  %v1406 = vunpack.c.l.b16 %v1084
  %v1407 = vunpack.c.h.b16 %v1084
  %v1408 = vunpack.c.l.b16 %v1085
  %v1409 = vunpack.c.h.b16 %v1085
  %v1410 = vunpack.c.l.b16 %v1086
  %v1411 = vunpack.c.h.b16 %v1086
  %v1412 = vunpack.c.l.b16 %v1087
  %v1413 = vunpack.c.h.b16 %v1087
  %v1414 = vunpack.c.l.b16 %v1088
  %v1415 = vunpack.c.h.b16 %v1088
  %v1416 = vunpack.c.l.b16 %v1089
  %v1417 = vunpack.c.h.b16 %v1089
  %v1418 = vunpack.c.l.b16 %v1090
  %v1419 = vunpack.c.h.b16 %v1090
  %v1420 = vunpack.c.l.b16 %v1091
  %v1421 = vunpack.c.h.b16 %v1091
  %v1422 = vunpack.c.l.b16 %v1092
  %v1423 = vunpack.c.h.b16 %v1092
  %v1424 = vunpack.c.l.b16 %v1093
  %v1425 = vunpack.c.h.b16 %v1093
  %v1426 = vunpack.c.l.b16 %v1094
  %v1427 = vunpack.c.h.b16 %v1094
  %v1428 = vunpack.c.l.b16 %v1095
  %v1429 = vunpack.c.h.b16 %v1095
  %v1430 = vunpack.c.l.b16 %v1096
  %v1431 = vunpack.c.h.b16 %v1096
  %v1432 = vunpack.c.l.b16 %v1097
  %v1433 = vunpack.c.h.b16 %v1097
  %v1434 = vunpack.c.l.b16 %v1098
  %v1435 = vunpack.c.h.b16 %v1098
  %v1436 = vunpack.c.l.b16 %v1099
  %v1437 = vunpack.c.h.b16 %v1099
  %v1438 = vunpack.c.l.b16 %v1100
  %v1439 = vunpack.c.h.b16 %v1100
  %v1440 = vunpack.c.l.b16 %v1101
  %v1441 = vunpack.c.h.b16 %v1101
  %v1442 = vunpack.c.l.b16 %v1102
  %v1443 = vunpack.c.h.b16 %v1102
  %v1444 = vunpack.c.l.b16 %v1103
  %v1445 = vunpack.c.h.b16 %v1103
  %v1446 = vunpack.c.l.b16 %v1104
  %v1447 = vunpack.c.h.b16 %v1104
  %v1448 = vunpack.c.l.b16 %v1105
  %v1449 = vunpack.c.h.b16 %v1105
  %v1450 = vunpack.c.l.b16 %v1106
  %v1451 = vunpack.c.h.b16 %v1106
  %v1452 = vunpack.c.l.b16 %v1107
  %v1453 = vunpack.c.h.b16 %v1107
  %v1454 = vunpack.c.l.b16 %v1108
  %v1455 = vunpack.c.h.b16 %v1108
  %v1456 = vunpack.c.l.b16 %v1109
  %v1457 = vunpack.c.h.b16 %v1109
  %v1458 = vunpack.c.l.b16 %v1110
  %v1459 = vunpack.c.h.b16 %v1110
  %v1460 = vunpack.c.l.b16 %v1111
  %v1461 = vunpack.c.h.b16 %v1111
  %v1462 = vunpack.c.l.b16 %v1112
  %v1463 = vunpack.c.h.b16 %v1112
  %v1464 = vunpack.c.l.b16 %v1113
  %v1465 = vunpack.c.h.b16 %v1113
  %v1466 = vpack.c.b16 %v1406, %v1402
  %v1467 = vpack.c.b16 %v1407, %v1403
  %v1468 = vpack.c.b16 %v1408, %v1404
  %v1469 = vpack.c.b16 %v1409, %v1405
  %v1470 = vpack.c.b16 %v1414, %v1410
  %v1471 = vpack.c.b16 %v1415, %v1411
  %v1472 = vpack.c.b16 %v1416, %v1412
  %v1473 = vpack.c.b16 %v1417, %v1413
  %v1474 = vpack.c.b16 %v1422, %v1418
  %v1475 = vpack.c.b16 %v1423, %v1419
  %v1476 = vpack.c.b16 %v1424, %v1420
  %v1477 = vpack.c.b16 %v1425, %v1421
  %v1478 = vpack.c.b16 %v1430, %v1426
  %v1479 = vpack.c.b16 %v1431, %v1427
  %v1480 = vpack.c.b16 %v1432, %v1428
  %v1481 = vpack.c.b16 %v1433, %v1429
  %v1482 = vpack.c.b16 %v1438, %v1434
  %v1483 = vpack.c.b16 %v1439, %v1435
  %v1484 = vpack.c.b16 %v1440, %v1436
  %v1485 = vpack.c.b16 %v1441, %v1437
  %v1486 = vpack.c.b16 %v1446, %v1442
  %v1487 = vpack.c.b16 %v1447, %v1443
  %v1488 = vpack.c.b16 %v1448, %v1444
  %v1489 = vpack.c.b16 %v1449, %v1445
  %v1490 = vpack.c.b16 %v1454, %v1450
  %v1491 = vpack.c.b16 %v1455, %v1451
  %v1492 = vpack.c.b16 %v1456, %v1452
  %v1493 = vpack.c.b16 %v1457, %v1453
  %v1494 = vpack.c.b16 %v1462, %v1458
  %v1495 = vpack.c.b16 %v1463, %v1459
  %v1496 = vpack.c.b16 %v1464, %v1460
  %v1497 = vpack.c.b16 %v1465, %v1461
  %1530 = vmatprep.subr.bf16.mxu0 %v1467
  %1531 = vmatpush1.bf16.msra.mxu0 %v1466
  %1532 = vmatprep.subr.bf16.mxu0 %v1471
  %1533 = vmatpush1.bf16.msra.mxu0 %v1470
  %1534 = vmatprep.subr.bf16.mxu0 %v1475
  %1535 = vmatpush1.bf16.msra.mxu0 %v1474
  %1536 = vmatprep.subr.bf16.mxu0 %v1479
  %1537 = vmatpush1.bf16.msra.mxu0 %v1478
  %1538 = vmatprep.subr.bf16.mxu0 %v1483
  %1539 = vmatpush1.bf16.msra.mxu0 %v1482
  %1540 = vmatprep.subr.bf16.mxu0 %v1487
  %1541 = vmatpush1.bf16.msra.mxu0 %v1486
  %1542 = vmatprep.subr.bf16.mxu0 %v1491
  %1543 = vmatpush1.bf16.msra.mxu0 %v1490
  %1544 = vmatprep.subr.bf16.mxu0 %v1495
  %1545 = vmatpush1.bf16.msra.mxu0 %v1494
  %1546 = vmatprep.subr.bf16.mxu0 0
  %1547 = vmatpush1.bf16.msra.mxu0 0
  %1548 = vmatprep.subr.bf16.mxu0 0
  %1549 = vmatpush1.bf16.msra.mxu0 0
  %1550 = vmatprep.subr.bf16.mxu0 0
  %1551 = vmatpush1.bf16.msra.mxu0 0
  %1552 = vmatprep.subr.bf16.mxu0 0
  %1553 = vmatpush1.bf16.msra.mxu0 0
  %1554 = vmatprep.subr.bf16.mxu0 0
  %1555 = vmatpush1.bf16.msra.mxu0 0
  %1556 = vmatprep.subr.bf16.mxu0 0
  %1557 = vmatpush1.bf16.msra.mxu0 0
  %1558 = vmatprep.subr.bf16.mxu0 0
  %1559 = vmatpush1.bf16.msra.mxu0 0
  %1560 = vmatprep.subr.bf16.mxu0 0
  %1561 = vmatpush1.bf16.msra.mxu0 0
  %1562 = vmatprep.mubr.bf16.mxu0 0
  %1563 = vmatmul.mubr.bf16.gmra.mrb[0].mxu0 0
  %v1564 = vpop.f32.mrb[0].mxu0
  %v1565 = vadd.f32 0.0, %v1564
  %v1566 = vpop.f32.mrb[0].mxu0
  %v1567 = vadd.f32 0.0, %v1566
  %v1568 = vpop.f32.mrb[0].mxu0
  %v1569 = vpop.f32.mrb[0].mxu0
  %1570 = vdwg.mxu0
  %1571 = vmatprep.subr.bf16.mxu0 %v1469
  %1572 = vmatpush1.bf16.msra.mxu0 %v1468
  %1573 = vmatprep.subr.bf16.mxu0 %v1473
  %1574 = vmatpush1.bf16.msra.mxu0 %v1472
  %1575 = vmatprep.subr.bf16.mxu0 %v1477
  %1576 = vmatpush1.bf16.msra.mxu0 %v1476
  %1577 = vmatprep.subr.bf16.mxu0 %v1481
  %1578 = vmatpush1.bf16.msra.mxu0 %v1480
  %1579 = vmatprep.subr.bf16.mxu0 %v1485
  %1580 = vmatpush1.bf16.msra.mxu0 %v1484
  %1581 = vmatprep.subr.bf16.mxu0 %v1489
  %1582 = vmatpush1.bf16.msra.mxu0 %v1488
  %1583 = vmatprep.subr.bf16.mxu0 %v1493
  %1584 = vmatpush1.bf16.msra.mxu0 %v1492
  %1585 = vmatprep.subr.bf16.mxu0 %v1497
  %1586 = vmatpush1.bf16.msra.mxu0 %v1496
  %1587 = vmatprep.subr.bf16.mxu0 0
  %1588 = vmatpush1.bf16.msra.mxu0 0
  %1589 = vmatprep.subr.bf16.mxu0 0
  %1590 = vmatpush1.bf16.msra.mxu0 0
  %1591 = vmatprep.subr.bf16.mxu0 0
  %1592 = vmatpush1.bf16.msra.mxu0 0
  %1593 = vmatprep.subr.bf16.mxu0 0
  %1594 = vmatpush1.bf16.msra.mxu0 0
  %1595 = vmatprep.subr.bf16.mxu0 0
  %1596 = vmatpush1.bf16.msra.mxu0 0
  %1597 = vmatprep.subr.bf16.mxu0 0
  %1598 = vmatpush1.bf16.msra.mxu0 0
  %1599 = vmatprep.subr.bf16.mxu0 0
  %1600 = vmatpush1.bf16.msra.mxu0 0
  %1601 = vmatprep.subr.bf16.mxu0 0
  %1602 = vmatpush1.bf16.msra.mxu0 0
  %1603 = vmatprep.mubr.bf16.mxu0 0
  %1604 = vmatmul.mubr.bf16.gmra.mrb[0].mxu0 0
  %v1605 = vpop.f32.mrb[0].mxu0
  %v1606 = vadd.f32 0.0, %v1605
  %v1607 = vpop.f32.mrb[0].mxu0
  %v1608 = vadd.f32 0.0, %v1607
  %v1609 = vpop.f32.mrb[0].mxu0
  %v1610 = vpop.f32.mrb[0].mxu0
  %1611 = vdwg.mxu0
  %v1612 = vadd.f32 %v1366, %v1565
  %v1613 = vadd.f32 %v1367, %v1567
  %v1614 = vadd.f32 %v1368, %v1606
  %v1615 = vadd.f32 %v1369, %v1608
  %vm1616 = vcmp.gt.s32.totalorder %v1114, 0
  %v1617 = vxor.u32 %v1362, 2147483648
  %v1618 = vmul.f32 %v1617, 1.442695
  %v1619 = vpow.pop %v1618
  %v1620 = vadd.f32 %v1619, 1.0
  %v1621 = vrcp.pop %v1620
  %v1622 = vmul.f32 1.0, %v1621
  %v1623 = vxor.u32 %v1363, 2147483648
  %v1624 = vmul.f32 %v1623, 1.442695
  %v1625 = vpow.pop %v1624
  %v1626 = vadd.f32 %v1625, 1.0
  %v1627 = vrcp.pop %v1626
  %v1628 = vmul.f32 1.0, %v1627
  %v1629 = vtanh.pop %v1364
  %v1630 = vxor.u32 %v1365, 2147483648
  %v1631 = vmul.f32 %v1630, 1.442695
  %v1632 = vpow.pop %v1631
  %v1633 = vadd.f32 %v1632, 1.0
  %v1634 = vrcp.pop %v1633
  %v1635 = vmul.f32 1.0, %v1634
  %v1636 = vmul.f32 %v1628, 0.0
  %v1637 = vmul.f32 %v1622, %v1629
  %v1638 = vadd.f32 %v1636, %v1637
  %v1639 = vtanh.pop %v1638
  %v1640 = vmul.f32 %v1635, %v1639
  %v1641 = vsel %vm1616, 1, 0
  %1642 = vset.pattern.permute.xlu0 0
  %1643 = vperm.xlu0 %1642, %v1641
  %v1644 = vpop.permute.xlu0 %1643
  %vm1645 = vcmp.eq.s32.totalorder %v1644, 1
  %v1646 = vsel %vm1645, %v1640, 0.0
  %v1647 = vsel %vm1645, %v1638, 0.0
  %vm1648 = vcmp.gt.s32.totalorder %v1115, 0
  %v1649 = vxor.u32 %v1612, 2147483648
  %v1650 = vmul.f32 %v1649, 1.442695
  %v1651 = vpow.pop %v1650
  %v1652 = vadd.f32 %v1651, 1.0
  %v1653 = vrcp.pop %v1652
  %v1654 = vmul.f32 1.0, %v1653
  %v1655 = vxor.u32 %v1613, 2147483648
  %v1656 = vmul.f32 %v1655, 1.442695
  %v1657 = vpow.pop %v1656
  %v1658 = vadd.f32 %v1657, 1.0
  %v1659 = vrcp.pop %v1658
  %v1660 = vmul.f32 1.0, %v1659
  %v1661 = vtanh.pop %v1614
  %v1662 = vxor.u32 %v1615, 2147483648
  %v1663 = vmul.f32 %v1662, 1.442695
  %v1664 = vpow.pop %v1663
  %v1665 = vadd.f32 %v1664, 1.0
  %v1666 = vrcp.pop %v1665
  %v1667 = vmul.f32 1.0, %v1666
  %v1668 = vmul.f32 %v1660, 0.0
  %v1669 = vmul.f32 %v1654, %v1661
  %v1670 = vadd.f32 %v1668, %v1669
  %v1671 = vtanh.pop %v1670
  %v1672 = vmul.f32 %v1667, %v1671
  %v1673 = vsel %vm1648, 1, 0
  %1674 = vset.pattern.permute.xlu0 0
  %1675 = vperm.xlu0 %1674, %v1673
  %v1676 = vpop.permute.xlu0 %1675
  %vm1677 = vcmp.eq.s32.totalorder %v1676, 1
  %v1678 = vsel %vm1677, %v1672, 0.0
  %v1679 = vsel %vm1677, %v1670, 0.0
  %v1680 = vld [vmem:[#allocation2 + $0x20] sm:$0xff]
  %v1681 = vld [vmem:[#allocation2 + $0x28] sm:$0xff]
  %v1682 = vld [vmem:[#allocation2 + $0x30] sm:$0xff]
  %v1683 = vld [vmem:[#allocation2 + $0x38] sm:$0xff]
  %v1684 = vpack.c.bf16 %v1646, %v1646
  %1685 = vmatprep.subr.bf16.mxu0 %v1217
  %1686 = vmatpush1.bf16.msra.mxu0 %v1216
  %1687 = vmatprep.subr.bf16.mxu0 %v1221
  %1688 = vmatpush1.bf16.msra.mxu0 %v1220
  %1689 = vmatprep.subr.bf16.mxu0 %v1225
  %1690 = vmatpush1.bf16.msra.mxu0 %v1224
  %1691 = vmatprep.subr.bf16.mxu0 %v1229
  %1692 = vmatpush1.bf16.msra.mxu0 %v1228
  %1693 = vmatprep.subr.bf16.mxu0 %v1233
  %1694 = vmatpush1.bf16.msra.mxu0 %v1232
  %1695 = vmatprep.subr.bf16.mxu0 %v1237
  %1696 = vmatpush1.bf16.msra.mxu0 %v1236
  %1697 = vmatprep.subr.bf16.mxu0 %v1241
  %1698 = vmatpush1.bf16.msra.mxu0 %v1240
  %1699 = vmatprep.subr.bf16.mxu0 %v1245
  %1700 = vmatpush1.bf16.msra.mxu0 %v1244
  %1701 = vmatprep.subr.bf16.mxu0 0
  %1702 = vmatpush1.bf16.msra.mxu0 0
  %1703 = vmatprep.subr.bf16.mxu0 0
  %1704 = vmatpush1.bf16.msra.mxu0 0
  %1705 = vmatprep.subr.bf16.mxu0 0
  %1706 = vmatpush1.bf16.msra.mxu0 0
  %1707 = vmatprep.subr.bf16.mxu0 0
  %1708 = vmatpush1.bf16.msra.mxu0 0
  %1709 = vmatprep.subr.bf16.mxu0 0
  %1710 = vmatpush1.bf16.msra.mxu0 0
  %1711 = vmatprep.subr.bf16.mxu0 0
  %1712 = vmatpush1.bf16.msra.mxu0 0
  %1713 = vmatprep.subr.bf16.mxu0 0
  %1714 = vmatpush1.bf16.msra.mxu0 0
  %1715 = vmatprep.subr.bf16.mxu0 0
  %1716 = vmatpush1.bf16.msra.mxu0 0
  %1717 = vmatprep.mubr.bf16.mxu0 0
  %1718 = vmatmul.mubr.bf16.gmra.mrb[0].mxu0 %v1684
  %v1719 = vpop.f32.mrb[0].mxu0
  %v1720 = vadd.f32 0.0, %v1719
  %v1721 = vpop.f32.mrb[0].mxu0
  %v1722 = vadd.f32 0.0, %v1721
  %v1723 = vpop.f32.mrb[0].mxu0
  %v1724 = vpop.f32.mrb[0].mxu0
  %1725 = vdwg.mxu0
  %1726 = vmatprep.subr.bf16.mxu0 %v1219
  %1727 = vmatpush1.bf16.msra.mxu0 %v1218
  %1728 = vmatprep.subr.bf16.mxu0 %v1223
  %1729 = vmatpush1.bf16.msra.mxu0 %v1222
  %1730 = vmatprep.subr.bf16.mxu0 %v1227
  %1731 = vmatpush1.bf16.msra.mxu0 %v1226
  %1732 = vmatprep.subr.bf16.mxu0 %v1231
  %1733 = vmatpush1.bf16.msra.mxu0 %v1230
  %1734 = vmatprep.subr.bf16.mxu0 %v1235
  %1735 = vmatpush1.bf16.msra.mxu0 %v1234
  %1736 = vmatprep.subr.bf16.mxu0 %v1239
  %1737 = vmatpush1.bf16.msra.mxu0 %v1238
  %1738 = vmatprep.subr.bf16.mxu0 %v1243
  %1739 = vmatpush1.bf16.msra.mxu0 %v1242
  %1740 = vmatprep.subr.bf16.mxu0 %v1247
  %1741 = vmatpush1.bf16.msra.mxu0 %v1246
  %1742 = vmatprep.subr.bf16.mxu0 0
  %1743 = vmatpush1.bf16.msra.mxu0 0
  %1744 = vmatprep.subr.bf16.mxu0 0
  %1745 = vmatpush1.bf16.msra.mxu0 0
  %1746 = vmatprep.subr.bf16.mxu0 0
  %1747 = vmatpush1.bf16.msra.mxu0 0
  %1748 = vmatprep.subr.bf16.mxu0 0
  %1749 = vmatpush1.bf16.msra.mxu0 0
  %1750 = vmatprep.subr.bf16.mxu0 0
  %1751 = vmatpush1.bf16.msra.mxu0 0
  %1752 = vmatprep.subr.bf16.mxu0 0
  %1753 = vmatpush1.bf16.msra.mxu0 0
  %1754 = vmatprep.subr.bf16.mxu0 0
  %1755 = vmatpush1.bf16.msra.mxu0 0
  %1756 = vmatprep.subr.bf16.mxu0 0
  %1757 = vmatpush1.bf16.msra.mxu0 0
  %1758 = vmatprep.mubr.bf16.mxu0 0
  %1759 = vmatmul.mubr.bf16.gmra.mrb[0].mxu0 %v1684
  %v1760 = vpop.f32.mrb[0].mxu0
  %v1761 = vadd.f32 0.0, %v1760
  %v1762 = vpop.f32.mrb[0].mxu0
  %v1763 = vadd.f32 0.0, %v1762
  %v1764 = vpop.f32.mrb[0].mxu0
  %v1765 = vpop.f32.mrb[0].mxu0
  %1766 = vdwg.mxu0
  %v1767 = vadd.f32 %v1680, %v1720
  %v1768 = vadd.f32 %v1681, %v1722
  %v1769 = vadd.f32 %v1682, %v1761
  %v1770 = vadd.f32 %v1683, %v1763
  %v1771 = vld [vmem:[#allocation3 + $0x20] sm:$0xff]
  %v1772 = vld [vmem:[#allocation3 + $0x28] sm:$0xff]
  %v1773 = vld [vmem:[#allocation3 + $0x30] sm:$0xff]
  %v1774 = vld [vmem:[#allocation3 + $0x38] sm:$0xff]
  %v1775 = vpack.c.bf16 %v1678, %v1678
  %1776 = vmatprep.subr.bf16.mxu0 %v1467
  %1777 = vmatpush1.bf16.msra.mxu0 %v1466
  %1778 = vmatprep.subr.bf16.mxu0 %v1471
  %1779 = vmatpush1.bf16.msra.mxu0 %v1470
  %1780 = vmatprep.subr.bf16.mxu0 %v1475
  %1781 = vmatpush1.bf16.msra.mxu0 %v1474
  %1782 = vmatprep.subr.bf16.mxu0 %v1479
  %1783 = vmatpush1.bf16.msra.mxu0 %v1478
  %1784 = vmatprep.subr.bf16.mxu0 %v1483
  %1785 = vmatpush1.bf16.msra.mxu0 %v1482
  %1786 = vmatprep.subr.bf16.mxu0 %v1487
  %1787 = vmatpush1.bf16.msra.mxu0 %v1486
  %1788 = vmatprep.subr.bf16.mxu0 %v1491
  %1789 = vmatpush1.bf16.msra.mxu0 %v1490
  %1790 = vmatprep.subr.bf16.mxu0 %v1495
  %1791 = vmatpush1.bf16.msra.mxu0 %v1494
  %1792 = vmatprep.subr.bf16.mxu0 0
  %1793 = vmatpush1.bf16.msra.mxu0 0
  %1794 = vmatprep.subr.bf16.mxu0 0
  %1795 = vmatpush1.bf16.msra.mxu0 0
  %1796 = vmatprep.subr.bf16.mxu0 0
  %1797 = vmatpush1.bf16.msra.mxu0 0
  %1798 = vmatprep.subr.bf16.mxu0 0
  %1799 = vmatpush1.bf16.msra.mxu0 0
  %1800 = vmatprep.subr.bf16.mxu0 0
  %1801 = vmatpush1.bf16.msra.mxu0 0
  %1802 = vmatprep.subr.bf16.mxu0 0
  %1803 = vmatpush1.bf16.msra.mxu0 0
  %1804 = vmatprep.subr.bf16.mxu0 0
  %1805 = vmatpush1.bf16.msra.mxu0 0
  %1806 = vmatprep.subr.bf16.mxu0 0
  %1807 = vmatpush1.bf16.msra.mxu0 0
  %1808 = vmatprep.mubr.bf16.mxu0 0
  %1809 = vmatmul.mubr.bf16.gmra.mrb[0].mxu0 %v1775
  %v1810 = vpop.f32.mrb[0].mxu0
  %v1811 = vadd.f32 0.0, %v1810
  %v1812 = vpop.f32.mrb[0].mxu0
  %v1813 = vadd.f32 0.0, %v1812
  %v1814 = vpop.f32.mrb[0].mxu0
  %v1815 = vpop.f32.mrb[0].mxu0
  %1816 = vdwg.mxu0
  %1817 = vmatprep.subr.bf16.mxu0 %v1469
  %1818 = vmatpush1.bf16.msra.mxu0 %v1468
  %1819 = vmatprep.subr.bf16.mxu0 %v1473
  %1820 = vmatpush1.bf16.msra.mxu0 %v1472
  %1821 = vmatprep.subr.bf16.mxu0 %v1477
  %1822 = vmatpush1.bf16.msra.mxu0 %v1476
  %1823 = vmatprep.subr.bf16.mxu0 %v1481
  %1824 = vmatpush1.bf16.msra.mxu0 %v1480
  %1825 = vmatprep.subr.bf16.mxu0 %v1485
  %1826 = vmatpush1.bf16.msra.mxu0 %v1484
  %1827 = vmatprep.subr.bf16.mxu0 %v1489
  %1828 = vmatpush1.bf16.msra.mxu0 %v1488
  %1829 = vmatprep.subr.bf16.mxu0 %v1493
  %1830 = vmatpush1.bf16.msra.mxu0 %v1492
  %1831 = vmatprep.subr.bf16.mxu0 %v1497
  %1832 = vmatpush1.bf16.msra.mxu0 %v1496
  %1833 = vmatprep.subr.bf16.mxu0 0
  %1834 = vmatpush1.bf16.msra.mxu0 0
  %1835 = vmatprep.subr.bf16.mxu0 0
  %1836 = vmatpush1.bf16.msra.mxu0 0
  %1837 = vmatprep.subr.bf16.mxu0 0
  %1838 = vmatpush1.bf16.msra.mxu0 0
  %1839 = vmatprep.subr.bf16.mxu0 0
  %1840 = vmatpush1.bf16.msra.mxu0 0
  %1841 = vmatprep.subr.bf16.mxu0 0
  %1842 = vmatpush1.bf16.msra.mxu0 0
  %1843 = vmatprep.subr.bf16.mxu0 0
  %1844 = vmatpush1.bf16.msra.mxu0 0
  %1845 = vmatprep.subr.bf16.mxu0 0
  %1846 = vmatpush1.bf16.msra.mxu0 0
  %1847 = vmatprep.subr.bf16.mxu0 0
  %1848 = vmatpush1.bf16.msra.mxu0 0
  %1849 = vmatprep.mubr.bf16.mxu0 0
  %1850 = vmatmul.mubr.bf16.gmra.mrb[0].mxu0 %v1775
  %v1851 = vpop.f32.mrb[0].mxu0
  %v1852 = vadd.f32 0.0, %v1851
  %v1853 = vpop.f32.mrb[0].mxu0
  %v1854 = vadd.f32 0.0, %v1853
  %v1855 = vpop.f32.mrb[0].mxu0
  %v1856 = vpop.f32.mrb[0].mxu0
  %1857 = vdwg.mxu0
  %v1858 = vadd.f32 %v1771, %v1811
  %v1859 = vadd.f32 %v1772, %v1813
  %v1860 = vadd.f32 %v1773, %v1852
  %v1861 = vadd.f32 %v1774, %v1854
  %vm1862 = vcmp.gt.s32.totalorder %v1114, 1
  %v1863 = vxor.u32 %v1767, 2147483648
  %v1864 = vmul.f32 %v1863, 1.442695
  %v1865 = vpow.pop %v1864
  %v1866 = vadd.f32 %v1865, 1.0
  %v1867 = vrcp.pop %v1866
  %v1868 = vmul.f32 1.0, %v1867
  %v1869 = vxor.u32 %v1768, 2147483648
  %v1870 = vmul.f32 %v1869, 1.442695
  %v1871 = vpow.pop %v1870
  %v1872 = vadd.f32 %v1871, 1.0
  %v1873 = vrcp.pop %v1872
  %v1874 = vmul.f32 1.0, %v1873
  %v1875 = vtanh.pop %v1769
  %v1876 = vxor.u32 %v1770, 2147483648
  %v1877 = vmul.f32 %v1876, 1.442695
  %v1878 = vpow.pop %v1877
  %v1879 = vadd.f32 %v1878, 1.0
  %v1880 = vrcp.pop %v1879
  %v1881 = vmul.f32 1.0, %v1880
  %v1882 = vmul.f32 %v1874, %v1647
  %v1883 = vmul.f32 %v1868, %v1875
  %v1884 = vadd.f32 %v1882, %v1883
  %v1885 = vtanh.pop %v1884
  %v1886 = vmul.f32 %v1881, %v1885
  %v1887 = vsel %vm1862, 1, 0
  %1888 = vset.pattern.permute.xlu0 0
  %1889 = vperm.xlu0 %1888, %v1887
  %v1890 = vpop.permute.xlu0 %1889
  %vm1891 = vcmp.eq.s32.totalorder %v1890, 1
  %v1892 = vsel %vm1891, %v1886, %v1646
  %v1893 = vsel %vm1891, %v1884, %v1647
  %vm1894 = vcmp.gt.s32.totalorder %v1115, 1
  %v1895 = vxor.u32 %v1858, 2147483648
  %v1896 = vmul.f32 %v1895, 1.442695
  %v1897 = vpow.pop %v1896
  %v1898 = vadd.f32 %v1897, 1.0
  %v1899 = vrcp.pop %v1898
  %v1900 = vmul.f32 1.0, %v1899
  %v1901 = vxor.u32 %v1859, 2147483648
  %v1902 = vmul.f32 %v1901, 1.442695
  %v1903 = vpow.pop %v1902
  %v1904 = vadd.f32 %v1903, 1.0
  %v1905 = vrcp.pop %v1904
  %v1906 = vmul.f32 1.0, %v1905
  %v1907 = vtanh.pop %v1860
  %v1908 = vxor.u32 %v1861, 2147483648
  %v1909 = vmul.f32 %v1908, 1.442695
  %v1910 = vpow.pop %v1909
  %v1911 = vadd.f32 %v1910, 1.0
  %v1912 = vrcp.pop %v1911
  %v1913 = vmul.f32 1.0, %v1912
  %v1914 = vmul.f32 %v1906, %v1679
  %v1915 = vmul.f32 %v1900, %v1907
  %v1916 = vadd.f32 %v1914, %v1915
  %v1917 = vtanh.pop %v1916
  %v1918 = vmul.f32 %v1913, %v1917
  %v1919 = vsel %vm1894, 1, 0
  %1920 = vset.pattern.permute.xlu0 0
  %1921 = vperm.xlu0 %1920, %v1919
  %v1922 = vpop.permute.xlu0 %1921
  %vm1923 = vcmp.eq.s32.totalorder %v1922, 1
  %v1924 = vsel %vm1923, %v1918, %v1678
  %v1925 = vsel %vm1923, %v1916, %v1679
  %v1926 = vld [vmem:[#allocation2 + $0x40] sm:$0xff]
  %v1927 = vld [vmem:[#allocation2 + $0x48] sm:$0xff]
  %v1928 = vld [vmem:[#allocation2 + $0x50] sm:$0xff]
  %v1929 = vld [vmem:[#allocation2 + $0x58] sm:$0xff]
  %v1930 = vpack.c.bf16 %v1892, %v1892
  %1931 = vmatprep.subr.bf16.mxu0 %v1217
  %1932 = vmatpush1.bf16.msra.mxu0 %v1216
  %1933 = vmatprep.subr.bf16.mxu0 %v1221
  %1934 = vmatpush1.bf16.msra.mxu0 %v1220
  %1935 = vmatprep.subr.bf16.mxu0 %v1225
  %1936 = vmatpush1.bf16.msra.mxu0 %v1224
  %1937 = vmatprep.subr.bf16.mxu0 %v1229
  %1938 = vmatpush1.bf16.msra.mxu0 %v1228
  %1939 = vmatprep.subr.bf16.mxu0 %v1233
  %1940 = vmatpush1.bf16.msra.mxu0 %v1232
  %1941 = vmatprep.subr.bf16.mxu0 %v1237
  %1942 = vmatpush1.bf16.msra.mxu0 %v1236
  %1943 = vmatprep.subr.bf16.mxu0 %v1241
  %1944 = vmatpush1.bf16.msra.mxu0 %v1240
  %1945 = vmatprep.subr.bf16.mxu0 %v1245
  %1946 = vmatpush1.bf16.msra.mxu0 %v1244
  %1947 = vmatprep.subr.bf16.mxu0 0
  %1948 = vmatpush1.bf16.msra.mxu0 0
  %1949 = vmatprep.subr.bf16.mxu0 0
  %1950 = vmatpush1.bf16.msra.mxu0 0
  %1951 = vmatprep.subr.bf16.mxu0 0
  %1952 = vmatpush1.bf16.msra.mxu0 0
  %1953 = vmatprep.subr.bf16.mxu0 0
  %1954 = vmatpush1.bf16.msra.mxu0 0
  %1955 = vmatprep.subr.bf16.mxu0 0
  %1956 = vmatpush1.bf16.msra.mxu0 0
  %1957 = vmatprep.subr.bf16.mxu0 0
  %1958 = vmatpush1.bf16.msra.mxu0 0
  %1959 = vmatprep.subr.bf16.mxu0 0
  %1960 = vmatpush1.bf16.msra.mxu0 0
  %1961 = vmatprep.subr.bf16.mxu0 0
  %1962 = vmatpush1.bf16.msra.mxu0 0
  %1963 = vmatprep.mubr.bf16.mxu0 0
  %1964 = vmatmul.mubr.bf16.gmra.mrb[0].mxu0 %v1930
  %v1965 = vpop.f32.mrb[0].mxu0
  %v1966 = vadd.f32 0.0, %v1965
  %v1967 = vpop.f32.mrb[0].mxu0
  %v1968 = vadd.f32 0.0, %v1967
  %v1969 = vpop.f32.mrb[0].mxu0
  %v1970 = vpop.f32.mrb[0].mxu0
  %1971 = vdwg.mxu0
  %1972 = vmatprep.subr.bf16.mxu0 %v1219
  %1973 = vmatpush1.bf16.msra.mxu0 %v1218
  %1974 = vmatprep.subr.bf16.mxu0 %v1223
  %1975 = vmatpush1.bf16.msra.mxu0 %v1222
  %1976 = vmatprep.subr.bf16.mxu0 %v1227
  %1977 = vmatpush1.bf16.msra.mxu0 %v1226
  %1978 = vmatprep.subr.bf16.mxu0 %v1231
  %1979 = vmatpush1.bf16.msra.mxu0 %v1230
  %1980 = vmatprep.subr.bf16.mxu0 %v1235
  %1981 = vmatpush1.bf16.msra.mxu0 %v1234
  %1982 = vmatprep.subr.bf16.mxu0 %v1239
  %1983 = vmatpush1.bf16.msra.mxu0 %v1238
  %1984 = vmatprep.subr.bf16.mxu0 %v1243
  %1985 = vmatpush1.bf16.msra.mxu0 %v1242
  %1986 = vmatprep.subr.bf16.mxu0 %v1247
  %1987 = vmatpush1.bf16.msra.mxu0 %v1246
  %1988 = vmatprep.subr.bf16.mxu0 0
  %1989 = vmatpush1.bf16.msra.mxu0 0
  %1990 = vmatprep.subr.bf16.mxu0 0
  %1991 = vmatpush1.bf16.msra.mxu0 0
  %1992 = vmatprep.subr.bf16.mxu0 0
  %1993 = vmatpush1.bf16.msra.mxu0 0
  %1994 = vmatprep.subr.bf16.mxu0 0
  %1995 = vmatpush1.bf16.msra.mxu0 0
  %1996 = vmatprep.subr.bf16.mxu0 0
  %1997 = vmatpush1.bf16.msra.mxu0 0
  %1998 = vmatprep.subr.bf16.mxu0 0
  %1999 = vmatpush1.bf16.msra.mxu0 0
  %2000 = vmatprep.subr.bf16.mxu0 0
  %2001 = vmatpush1.bf16.msra.mxu0 0
  %2002 = vmatprep.subr.bf16.mxu0 0
  %2003 = vmatpush1.bf16.msra.mxu0 0
  %2004 = vmatprep.mubr.bf16.mxu0 0
  %2005 = vmatmul.mubr.bf16.gmra.mrb[0].mxu0 %v1930
  %v2006 = vpop.f32.mrb[0].mxu0
  %v2007 = vadd.f32 0.0, %v2006
  %v2008 = vpop.f32.mrb[0].mxu0
  %v2009 = vadd.f32 0.0, %v2008
  %v2010 = vpop.f32.mrb[0].mxu0
  %v2011 = vpop.f32.mrb[0].mxu0
  %2012 = vdwg.mxu0
  %v2013 = vadd.f32 %v1926, %v1966
  %v2014 = vadd.f32 %v1927, %v1968
  %v2015 = vadd.f32 %v1928, %v2007
  %v2016 = vadd.f32 %v1929, %v2009
  %v2017 = vld [vmem:[#allocation3 + $0x40] sm:$0xff]
  %v2018 = vld [vmem:[#allocation3 + $0x48] sm:$0xff]
  %v2019 = vld [vmem:[#allocation3 + $0x50] sm:$0xff]
  %v2020 = vld [vmem:[#allocation3 + $0x58] sm:$0xff]
  %v2021 = vpack.c.bf16 %v1924, %v1924
  %2022 = vmatprep.subr.bf16.mxu0 %v1467
  %2023 = vmatpush1.bf16.msra.mxu0 %v1466
  %2024 = vmatprep.subr.bf16.mxu0 %v1471
  %2025 = vmatpush1.bf16.msra.mxu0 %v1470
  %2026 = vmatprep.subr.bf16.mxu0 %v1475
  %2027 = vmatpush1.bf16.msra.mxu0 %v1474
  %2028 = vmatprep.subr.bf16.mxu0 %v1479
  %2029 = vmatpush1.bf16.msra.mxu0 %v1478
  %2030 = vmatprep.subr.bf16.mxu0 %v1483
  %2031 = vmatpush1.bf16.msra.mxu0 %v1482
  %2032 = vmatprep.subr.bf16.mxu0 %v1487
  %2033 = vmatpush1.bf16.msra.mxu0 %v1486
  %2034 = vmatprep.subr.bf16.mxu0 %v1491
  %2035 = vmatpush1.bf16.msra.mxu0 %v1490
  %2036 = vmatprep.subr.bf16.mxu0 %v1495
  %2037 = vmatpush1.bf16.msra.mxu0 %v1494
  %2038 = vmatprep.subr.bf16.mxu0 0
  %2039 = vmatpush1.bf16.msra.mxu0 0
  %2040 = vmatprep.subr.bf16.mxu0 0
  %2041 = vmatpush1.bf16.msra.mxu0 0
  %2042 = vmatprep.subr.bf16.mxu0 0
  %2043 = vmatpush1.bf16.msra.mxu0 0
  %2044 = vmatprep.subr.bf16.mxu0 0
  %2045 = vmatpush1.bf16.msra.mxu0 0
  %2046 = vmatprep.subr.bf16.mxu0 0
  %2047 = vmatpush1.bf16.msra.mxu0 0
  %2048 = vmatprep.subr.bf16.mxu0 0
  %2049 = vmatpush1.bf16.msra.mxu0 0
  %2050 = vmatprep.subr.bf16.mxu0 0
  %2051 = vmatpush1.bf16.msra.mxu0 0
  %2052 = vmatprep.subr.bf16.mxu0 0
  %2053 = vmatpush1.bf16.msra.mxu0 0
  %2054 = vmatprep.mubr.bf16.mxu0 0
  %2055 = vmatmul.mubr.bf16.gmra.mrb[0].mxu0 %v2021
  %v2056 = vpop.f32.mrb[0].mxu0
  %v2057 = vadd.f32 0.0, %v2056
  %v2058 = vpop.f32.mrb[0].mxu0
  %v2059 = vadd.f32 0.0, %v2058
  %v2060 = vpop.f32.mrb[0].mxu0
  %v2061 = vpop.f32.mrb[0].mxu0
  %2062 = vdwg.mxu0
  %2063 = vmatprep.subr.bf16.mxu0 %v1469
  %2064 = vmatpush1.bf16.msra.mxu0 %v1468
  %2065 = vmatprep.subr.bf16.mxu0 %v1473
  %2066 = vmatpush1.bf16.msra.mxu0 %v1472
  %2067 = vmatprep.subr.bf16.mxu0 %v1477
  %2068 = vmatpush1.bf16.msra.mxu0 %v1476
  %2069 = vmatprep.subr.bf16.mxu0 %v1481
  %2070 = vmatpush1.bf16.msra.mxu0 %v1480
  %2071 = vmatprep.subr.bf16.mxu0 %v1485
  %2072 = vmatpush1.bf16.msra.mxu0 %v1484
  %2073 = vmatprep.subr.bf16.mxu0 %v1489
  %2074 = vmatpush1.bf16.msra.mxu0 %v1488
  %2075 = vmatprep.subr.bf16.mxu0 %v1493
  %2076 = vmatpush1.bf16.msra.mxu0 %v1492
  %2077 = vmatprep.subr.bf16.mxu0 %v1497
  %2078 = vmatpush1.bf16.msra.mxu0 %v1496
  %2079 = vmatprep.subr.bf16.mxu0 0
  %2080 = vmatpush1.bf16.msra.mxu0 0
  %2081 = vmatprep.subr.bf16.mxu0 0
  %2082 = vmatpush1.bf16.msra.mxu0 0
  %2083 = vmatprep.subr.bf16.mxu0 0
  %2084 = vmatpush1.bf16.msra.mxu0 0
  %2085 = vmatprep.subr.bf16.mxu0 0
  %2086 = vmatpush1.bf16.msra.mxu0 0
  %2087 = vmatprep.subr.bf16.mxu0 0
  %2088 = vmatpush1.bf16.msra.mxu0 0
  %2089 = vmatprep.subr.bf16.mxu0 0
  %2090 = vmatpush1.bf16.msra.mxu0 0
  %2091 = vmatprep.subr.bf16.mxu0 0
  %2092 = vmatpush1.bf16.msra.mxu0 0
  %2093 = vmatprep.subr.bf16.mxu0 0
  %2094 = vmatpush1.bf16.msra.mxu0 0
  %2095 = vmatprep.mubr.bf16.mxu0 0
  %2096 = vmatmul.mubr.bf16.gmra.mrb[0].mxu0 %v2021
  %v2097 = vpop.f32.mrb[0].mxu0
  %v2098 = vadd.f32 0.0, %v2097
  %v2099 = vpop.f32.mrb[0].mxu0
  %v2100 = vadd.f32 0.0, %v2099
  %v2101 = vpop.f32.mrb[0].mxu0
  %v2102 = vpop.f32.mrb[0].mxu0
  %2103 = vdwg.mxu0
  %v2104 = vadd.f32 %v2017, %v2057
  %v2105 = vadd.f32 %v2018, %v2059
  %v2106 = vadd.f32 %v2019, %v2098
  %v2107 = vadd.f32 %v2020, %v2100
  %vm2108 = vcmp.gt.s32.totalorder %v1114, 2
  %v2109 = vxor.u32 %v2013, 2147483648
  %v2110 = vmul.f32 %v2109, 1.442695
  %v2111 = vpow.pop %v2110
  %v2112 = vadd.f32 %v2111, 1.0
  %v2113 = vrcp.pop %v2112
  %v2114 = vmul.f32 1.0, %v2113
  %v2115 = vxor.u32 %v2014, 2147483648
  %v2116 = vmul.f32 %v2115, 1.442695
  %v2117 = vpow.pop %v2116
  %v2118 = vadd.f32 %v2117, 1.0
  %v2119 = vrcp.pop %v2118
  %v2120 = vmul.f32 1.0, %v2119
  %v2121 = vtanh.pop %v2015
  %v2122 = vxor.u32 %v2016, 2147483648
  %v2123 = vmul.f32 %v2122, 1.442695
  %v2124 = vpow.pop %v2123
  %v2125 = vadd.f32 %v2124, 1.0
  %v2126 = vrcp.pop %v2125
  %v2127 = vmul.f32 1.0, %v2126
  %v2128 = vmul.f32 %v2120, %v1893
  %v2129 = vmul.f32 %v2114, %v2121
  %v2130 = vadd.f32 %v2128, %v2129
  %v2131 = vtanh.pop %v2130
  %v2132 = vmul.f32 %v2127, %v2131
  %v2133 = vsel %vm2108, 1, 0
  %2134 = vset.pattern.permute.xlu0 0
  %2135 = vperm.xlu0 %2134, %v2133
  %v2136 = vpop.permute.xlu0 %2135
  %vm2137 = vcmp.eq.s32.totalorder %v2136, 1
  %v2138 = vsel %vm2137, %v2132, %v1892
  %v2139 = vsel %vm2137, %v2130, %v1893
  %vm2140 = vcmp.gt.s32.totalorder %v1115, 2
  %v2141 = vxor.u32 %v2104, 2147483648
  %v2142 = vmul.f32 %v2141, 1.442695
  %v2143 = vpow.pop %v2142
  %v2144 = vadd.f32 %v2143, 1.0
  %v2145 = vrcp.pop %v2144
  %v2146 = vmul.f32 1.0, %v2145
  %v2147 = vxor.u32 %v2105, 2147483648
  %v2148 = vmul.f32 %v2147, 1.442695
  %v2149 = vpow.pop %v2148
  %v2150 = vadd.f32 %v2149, 1.0
  %v2151 = vrcp.pop %v2150
  %v2152 = vmul.f32 1.0, %v2151
  %v2153 = vtanh.pop %v2106
  %v2154 = vxor.u32 %v2107, 2147483648
  %v2155 = vmul.f32 %v2154, 1.442695
  %v2156 = vpow.pop %v2155
  %v2157 = vadd.f32 %v2156, 1.0
  %v2158 = vrcp.pop %v2157
  %v2159 = vmul.f32 1.0, %v2158
  %v2160 = vmul.f32 %v2152, %v1925
  %v2161 = vmul.f32 %v2146, %v2153
  %v2162 = vadd.f32 %v2160, %v2161
  %v2163 = vtanh.pop %v2162
  %v2164 = vmul.f32 %v2159, %v2163
  %v2165 = vsel %vm2140, 1, 0
  %2166 = vset.pattern.permute.xlu0 0
  %2167 = vperm.xlu0 %2166, %v2165
  %v2168 = vpop.permute.xlu0 %2167
  %vm2169 = vcmp.eq.s32.totalorder %v2168, 1
  %v2170 = vsel %vm2169, %v2164, %v1924
  %v2171 = vsel %vm2169, %v2162, %v1925
  %v2172 = vld [vmem:[#allocation2 + $0x60] sm:$0xff]
  %v2173 = vld [vmem:[#allocation2 + $0x68] sm:$0xff]
  %v2174 = vld [vmem:[#allocation2 + $0x70] sm:$0xff]
  %v2175 = vld [vmem:[#allocation2 + $0x78] sm:$0xff]
  %v2176 = vpack.c.bf16 %v2138, %v2138
  %2177 = vmatprep.subr.bf16.mxu0 %v1217
  %2178 = vmatpush1.bf16.msra.mxu0 %v1216
  %2179 = vmatprep.subr.bf16.mxu0 %v1221
  %2180 = vmatpush1.bf16.msra.mxu0 %v1220
  %2181 = vmatprep.subr.bf16.mxu0 %v1225
  %2182 = vmatpush1.bf16.msra.mxu0 %v1224
  %2183 = vmatprep.subr.bf16.mxu0 %v1229
  %2184 = vmatpush1.bf16.msra.mxu0 %v1228
  %2185 = vmatprep.subr.bf16.mxu0 %v1233
  %2186 = vmatpush1.bf16.msra.mxu0 %v1232
  %2187 = vmatprep.subr.bf16.mxu0 %v1237
  %2188 = vmatpush1.bf16.msra.mxu0 %v1236
  %2189 = vmatprep.subr.bf16.mxu0 %v1241
  %2190 = vmatpush1.bf16.msra.mxu0 %v1240
  %2191 = vmatprep.subr.bf16.mxu0 %v1245
  %2192 = vmatpush1.bf16.msra.mxu0 %v1244
  %2193 = vmatprep.subr.bf16.mxu0 0
  %2194 = vmatpush1.bf16.msra.mxu0 0
  %2195 = vmatprep.subr.bf16.mxu0 0
  %2196 = vmatpush1.bf16.msra.mxu0 0
  %2197 = vmatprep.subr.bf16.mxu0 0
  %2198 = vmatpush1.bf16.msra.mxu0 0
  %2199 = vmatprep.subr.bf16.mxu0 0
  %2200 = vmatpush1.bf16.msra.mxu0 0
  %2201 = vmatprep.subr.bf16.mxu0 0
  %2202 = vmatpush1.bf16.msra.mxu0 0
  %2203 = vmatprep.subr.bf16.mxu0 0
  %2204 = vmatpush1.bf16.msra.mxu0 0
  %2205 = vmatprep.subr.bf16.mxu0 0
  %2206 = vmatpush1.bf16.msra.mxu0 0
  %2207 = vmatprep.subr.bf16.mxu0 0
  %2208 = vmatpush1.bf16.msra.mxu0 0
  %2209 = vmatprep.mubr.bf16.mxu0 0
  %2210 = vmatmul.mubr.bf16.gmra.mrb[0].mxu0 %v2176
  %v2211 = vpop.f32.mrb[0].mxu0
  %v2212 = vadd.f32 0.0, %v2211
  %v2213 = vpop.f32.mrb[0].mxu0
  %v2214 = vadd.f32 0.0, %v2213
  %v2215 = vpop.f32.mrb[0].mxu0
  %v2216 = vpop.f32.mrb[0].mxu0
  %2217 = vdwg.mxu0
  %2218 = vmatprep.subr.bf16.mxu0 %v1219
  %2219 = vmatpush1.bf16.msra.mxu0 %v1218
  %2220 = vmatprep.subr.bf16.mxu0 %v1223
  %2221 = vmatpush1.bf16.msra.mxu0 %v1222
  %2222 = vmatprep.subr.bf16.mxu0 %v1227
  %2223 = vmatpush1.bf16.msra.mxu0 %v1226
  %2224 = vmatprep.subr.bf16.mxu0 %v1231
  %2225 = vmatpush1.bf16.msra.mxu0 %v1230
  %2226 = vmatprep.subr.bf16.mxu0 %v1235
  %2227 = vmatpush1.bf16.msra.mxu0 %v1234
  %2228 = vmatprep.subr.bf16.mxu0 %v1239
  %2229 = vmatpush1.bf16.msra.mxu0 %v1238
  %2230 = vmatprep.subr.bf16.mxu0 %v1243
  %2231 = vmatpush1.bf16.msra.mxu0 %v1242
  %2232 = vmatprep.subr.bf16.mxu0 %v1247
  %2233 = vmatpush1.bf16.msra.mxu0 %v1246
  %2234 = vmatprep.subr.bf16.mxu0 0
  %2235 = vmatpush1.bf16.msra.mxu0 0
  %2236 = vmatprep.subr.bf16.mxu0 0
  %2237 = vmatpush1.bf16.msra.mxu0 0
  %2238 = vmatprep.subr.bf16.mxu0 0
  %2239 = vmatpush1.bf16.msra.mxu0 0
  %2240 = vmatprep.subr.bf16.mxu0 0
  %2241 = vmatpush1.bf16.msra.mxu0 0
  %2242 = vmatprep.subr.bf16.mxu0 0
  %2243 = vmatpush1.bf16.msra.mxu0 0
  %2244 = vmatprep.subr.bf16.mxu0 0
  %2245 = vmatpush1.bf16.msra.mxu0 0
  %2246 = vmatprep.subr.bf16.mxu0 0
  %2247 = vmatpush1.bf16.msra.mxu0 0
  %2248 = vmatprep.subr.bf16.mxu0 0
  %2249 = vmatpush1.bf16.msra.mxu0 0
  %2250 = vmatprep.mubr.bf16.mxu0 0
  %2251 = vmatmul.mubr.bf16.gmra.mrb[0].mxu0 %v2176
  %v2252 = vpop.f32.mrb[0].mxu0
  %v2253 = vadd.f32 0.0, %v2252
  %v2254 = vpop.f32.mrb[0].mxu0
  %v2255 = vadd.f32 0.0, %v2254
  %v2256 = vpop.f32.mrb[0].mxu0
  %v2257 = vpop.f32.mrb[0].mxu0
  %2258 = vdwg.mxu0
  %v2259 = vadd.f32 %v2172, %v2212
  %v2260 = vadd.f32 %v2173, %v2214
  %v2261 = vadd.f32 %v2174, %v2253
  %v2262 = vadd.f32 %v2175, %v2255
  %v2263 = vld [vmem:[#allocation3 + $0x60] sm:$0xff]
  %v2264 = vld [vmem:[#allocation3 + $0x68] sm:$0xff]
  %v2265 = vld [vmem:[#allocation3 + $0x70] sm:$0xff]
  %v2266 = vld [vmem:[#allocation3 + $0x78] sm:$0xff]
  %v2267 = vpack.c.bf16 %v2170, %v2170
  %2268 = vmatprep.subr.bf16.mxu0 %v1467
  %2269 = vmatpush1.bf16.msra.mxu0 %v1466
  %2270 = vmatprep.subr.bf16.mxu0 %v1471
  %2271 = vmatpush1.bf16.msra.mxu0 %v1470
  %2272 = vmatprep.subr.bf16.mxu0 %v1475
  %2273 = vmatpush1.bf16.msra.mxu0 %v1474
  %2274 = vmatprep.subr.bf16.mxu0 %v1479
  %2275 = vmatpush1.bf16.msra.mxu0 %v1478
  %2276 = vmatprep.subr.bf16.mxu0 %v1483
  %2277 = vmatpush1.bf16.msra.mxu0 %v1482
  %2278 = vmatprep.subr.bf16.mxu0 %v1487
  %2279 = vmatpush1.bf16.msra.mxu0 %v1486
  %2280 = vmatprep.subr.bf16.mxu0 %v1491
  %2281 = vmatpush1.bf16.msra.mxu0 %v1490
  %2282 = vmatprep.subr.bf16.mxu0 %v1495
  %2283 = vmatpush1.bf16.msra.mxu0 %v1494
  %2284 = vmatprep.subr.bf16.mxu0 0
  %2285 = vmatpush1.bf16.msra.mxu0 0
  %2286 = vmatprep.subr.bf16.mxu0 0
  %2287 = vmatpush1.bf16.msra.mxu0 0
  %2288 = vmatprep.subr.bf16.mxu0 0
  %2289 = vmatpush1.bf16.msra.mxu0 0
  %2290 = vmatprep.subr.bf16.mxu0 0
  %2291 = vmatpush1.bf16.msra.mxu0 0
  %2292 = vmatprep.subr.bf16.mxu0 0
  %2293 = vmatpush1.bf16.msra.mxu0 0
  %2294 = vmatprep.subr.bf16.mxu0 0
  %2295 = vmatpush1.bf16.msra.mxu0 0
  %2296 = vmatprep.subr.bf16.mxu0 0
  %2297 = vmatpush1.bf16.msra.mxu0 0
  %2298 = vmatprep.subr.bf16.mxu0 0
  %2299 = vmatpush1.bf16.msra.mxu0 0
  %2300 = vmatprep.mubr.bf16.mxu0 0
  %2301 = vmatmul.mubr.bf16.gmra.mrb[0].mxu0 %v2267
  %v2302 = vpop.f32.mrb[0].mxu0
  %v2303 = vadd.f32 0.0, %v2302
  %v2304 = vpop.f32.mrb[0].mxu0
  %v2305 = vadd.f32 0.0, %v2304
  %v2306 = vpop.f32.mrb[0].mxu0
  %v2307 = vpop.f32.mrb[0].mxu0
  %2308 = vdwg.mxu0
  %2309 = vmatprep.subr.bf16.mxu0 %v1469
  %2310 = vmatpush1.bf16.msra.mxu0 %v1468
  %2311 = vmatprep.subr.bf16.mxu0 %v1473
  %2312 = vmatpush1.bf16.msra.mxu0 %v1472
  %2313 = vmatprep.subr.bf16.mxu0 %v1477
  %2314 = vmatpush1.bf16.msra.mxu0 %v1476
  %2315 = vmatprep.subr.bf16.mxu0 %v1481
  %2316 = vmatpush1.bf16.msra.mxu0 %v1480
  %2317 = vmatprep.subr.bf16.mxu0 %v1485
  %2318 = vmatpush1.bf16.msra.mxu0 %v1484
  %2319 = vmatprep.subr.bf16.mxu0 %v1489
  %2320 = vmatpush1.bf16.msra.mxu0 %v1488
  %2321 = vmatprep.subr.bf16.mxu0 %v1493
  %2322 = vmatpush1.bf16.msra.mxu0 %v1492
  %2323 = vmatprep.subr.bf16.mxu0 %v1497
  %2324 = vmatpush1.bf16.msra.mxu0 %v1496
  %2325 = vmatprep.subr.bf16.mxu0 0
  %2326 = vmatpush1.bf16.msra.mxu0 0
  %2327 = vmatprep.subr.bf16.mxu0 0
  %2328 = vmatpush1.bf16.msra.mxu0 0
  %2329 = vmatprep.subr.bf16.mxu0 0
  %2330 = vmatpush1.bf16.msra.mxu0 0
  %2331 = vmatprep.subr.bf16.mxu0 0
  %2332 = vmatpush1.bf16.msra.mxu0 0
  %2333 = vmatprep.subr.bf16.mxu0 0
  %2334 = vmatpush1.bf16.msra.mxu0 0
  %2335 = vmatprep.subr.bf16.mxu0 0
  %2336 = vmatpush1.bf16.msra.mxu0 0
  %2337 = vmatprep.subr.bf16.mxu0 0
  %2338 = vmatpush1.bf16.msra.mxu0 0
  %2339 = vmatprep.subr.bf16.mxu0 0
  %2340 = vmatpush1.bf16.msra.mxu0 0
  %2341 = vmatprep.mubr.bf16.mxu0 0
  %2342 = vmatmul.mubr.bf16.gmra.mrb[0].mxu0 %v2267
  %v2343 = vpop.f32.mrb[0].mxu0
  %v2344 = vadd.f32 0.0, %v2343
  %v2345 = vpop.f32.mrb[0].mxu0
  %v2346 = vadd.f32 0.0, %v2345
  %v2347 = vpop.f32.mrb[0].mxu0
  %v2348 = vpop.f32.mrb[0].mxu0
  %2349 = vdwg.mxu0
  %v2350 = vadd.f32 %v2263, %v2303
  %v2351 = vadd.f32 %v2264, %v2305
  %v2352 = vadd.f32 %v2265, %v2344
  %v2353 = vadd.f32 %v2266, %v2346
  %vm2354 = vcmp.gt.s32.totalorder %v1114, 3
  %v2355 = vxor.u32 %v2259, 2147483648
  %v2356 = vmul.f32 %v2355, 1.442695
  %v2357 = vpow.pop %v2356
  %v2358 = vadd.f32 %v2357, 1.0
  %v2359 = vrcp.pop %v2358
  %v2360 = vmul.f32 1.0, %v2359
  %v2361 = vxor.u32 %v2260, 2147483648
  %v2362 = vmul.f32 %v2361, 1.442695
  %v2363 = vpow.pop %v2362
  %v2364 = vadd.f32 %v2363, 1.0
  %v2365 = vrcp.pop %v2364
  %v2366 = vmul.f32 1.0, %v2365
  %v2367 = vtanh.pop %v2261
  %v2368 = vxor.u32 %v2262, 2147483648
  %v2369 = vmul.f32 %v2368, 1.442695
  %v2370 = vpow.pop %v2369
  %v2371 = vadd.f32 %v2370, 1.0
  %v2372 = vrcp.pop %v2371
  %v2373 = vmul.f32 1.0, %v2372
  %v2374 = vmul.f32 %v2366, %v2139
  %v2375 = vmul.f32 %v2360, %v2367
  %v2376 = vadd.f32 %v2374, %v2375
  %v2377 = vtanh.pop %v2376
  %v2378 = vmul.f32 %v2373, %v2377
  %v2379 = vsel %vm2354, 1, 0
  %2380 = vset.pattern.permute.xlu0 0
  %2381 = vperm.xlu0 %2380, %v2379
  %v2382 = vpop.permute.xlu0 %2381
  %vm2383 = vcmp.eq.s32.totalorder %v2382, 1
  %v2384 = vsel %vm2383, %v2378, %v2138
  %v2385 = vsel %vm2383, %v2376, %v2139
  %vm2386 = vcmp.gt.s32.totalorder %v1115, 3
  %v2387 = vxor.u32 %v2350, 2147483648
  %v2388 = vmul.f32 %v2387, 1.442695
  %v2389 = vpow.pop %v2388
  %v2390 = vadd.f32 %v2389, 1.0
  %v2391 = vrcp.pop %v2390
  %v2392 = vmul.f32 1.0, %v2391
  %v2393 = vxor.u32 %v2351, 2147483648
  %v2394 = vmul.f32 %v2393, 1.442695
  %v2395 = vpow.pop %v2394
  %v2396 = vadd.f32 %v2395, 1.0
  %v2397 = vrcp.pop %v2396
  %v2398 = vmul.f32 1.0, %v2397
  %v2399 = vtanh.pop %v2352
  %v2400 = vxor.u32 %v2353, 2147483648
  %v2401 = vmul.f32 %v2400, 1.442695
  %v2402 = vpow.pop %v2401
  %v2403 = vadd.f32 %v2402, 1.0
  %v2404 = vrcp.pop %v2403
  %v2405 = vmul.f32 1.0, %v2404
  %v2406 = vmul.f32 %v2398, %v2171
  %v2407 = vmul.f32 %v2392, %v2399
  %v2408 = vadd.f32 %v2406, %v2407
  %v2409 = vtanh.pop %v2408
  %v2410 = vmul.f32 %v2405, %v2409
  %v2411 = vsel %vm2386, 1, 0
  %2412 = vset.pattern.permute.xlu0 0
  %2413 = vperm.xlu0 %2412, %v2411
  %v2414 = vpop.permute.xlu0 %2413
  %vm2415 = vcmp.eq.s32.totalorder %v2414, 1
  %v2416 = vsel %vm2415, %v2410, %v2170
  %v2417 = vsel %vm2415, %v2408, %v2171
  %v2418 = vld [vmem:[#allocation2 + $0x80] sm:$0xff]
  %v2419 = vld [vmem:[#allocation2 + $0x88] sm:$0xff]
  %v2420 = vld [vmem:[#allocation2 + $0x90] sm:$0xff]
  %v2421 = vld [vmem:[#allocation2 + $0x98] sm:$0xff]
  %v2422 = vpack.c.bf16 %v2384, %v2384
  %2423 = vmatprep.subr.bf16.mxu0 %v1217
  %2424 = vmatpush1.bf16.msra.mxu0 %v1216
  %2425 = vmatprep.subr.bf16.mxu0 %v1221
  %2426 = vmatpush1.bf16.msra.mxu0 %v1220
  %2427 = vmatprep.subr.bf16.mxu0 %v1225
  %2428 = vmatpush1.bf16.msra.mxu0 %v1224
  %2429 = vmatprep.subr.bf16.mxu0 %v1229
  %2430 = vmatpush1.bf16.msra.mxu0 %v1228
  %2431 = vmatprep.subr.bf16.mxu0 %v1233
  %2432 = vmatpush1.bf16.msra.mxu0 %v1232
  %2433 = vmatprep.subr.bf16.mxu0 %v1237
  %2434 = vmatpush1.bf16.msra.mxu0 %v1236
  %2435 = vmatprep.subr.bf16.mxu0 %v1241
  %2436 = vmatpush1.bf16.msra.mxu0 %v1240
  %2437 = vmatprep.subr.bf16.mxu0 %v1245
  %2438 = vmatpush1.bf16.msra.mxu0 %v1244
  %2439 = vmatprep.subr.bf16.mxu0 0
  %2440 = vmatpush1.bf16.msra.mxu0 0
  %2441 = vmatprep.subr.bf16.mxu0 0
  %2442 = vmatpush1.bf16.msra.mxu0 0
  %2443 = vmatprep.subr.bf16.mxu0 0
  %2444 = vmatpush1.bf16.msra.mxu0 0
  %2445 = vmatprep.subr.bf16.mxu0 0
  %2446 = vmatpush1.bf16.msra.mxu0 0
  %2447 = vmatprep.subr.bf16.mxu0 0
  %2448 = vmatpush1.bf16.msra.mxu0 0
  %2449 = vmatprep.subr.bf16.mxu0 0
  %2450 = vmatpush1.bf16.msra.mxu0 0
  %2451 = vmatprep.subr.bf16.mxu0 0
  %2452 = vmatpush1.bf16.msra.mxu0 0
  %2453 = vmatprep.subr.bf16.mxu0 0
  %2454 = vmatpush1.bf16.msra.mxu0 0
  %2455 = vmatprep.mubr.bf16.mxu0 0
  %2456 = vmatmul.mubr.bf16.gmra.mrb[0].mxu0 %v2422
  %v2457 = vpop.f32.mrb[0].mxu0
  %v2458 = vadd.f32 0.0, %v2457
  %v2459 = vpop.f32.mrb[0].mxu0
  %v2460 = vadd.f32 0.0, %v2459
  %v2461 = vpop.f32.mrb[0].mxu0
  %v2462 = vpop.f32.mrb[0].mxu0
  %2463 = vdwg.mxu0
  %2464 = vmatprep.subr.bf16.mxu0 %v1219
  %2465 = vmatpush1.bf16.msra.mxu0 %v1218
  %2466 = vmatprep.subr.bf16.mxu0 %v1223
  %2467 = vmatpush1.bf16.msra.mxu0 %v1222
  %2468 = vmatprep.subr.bf16.mxu0 %v1227
  %2469 = vmatpush1.bf16.msra.mxu0 %v1226
  %2470 = vmatprep.subr.bf16.mxu0 %v1231
  %2471 = vmatpush1.bf16.msra.mxu0 %v1230
  %2472 = vmatprep.subr.bf16.mxu0 %v1235
  %2473 = vmatpush1.bf16.msra.mxu0 %v1234
  %2474 = vmatprep.subr.bf16.mxu0 %v1239
  %2475 = vmatpush1.bf16.msra.mxu0 %v1238
  %2476 = vmatprep.subr.bf16.mxu0 %v1243
  %2477 = vmatpush1.bf16.msra.mxu0 %v1242
  %2478 = vmatprep.subr.bf16.mxu0 %v1247
  %2479 = vmatpush1.bf16.msra.mxu0 %v1246
  %2480 = vmatprep.subr.bf16.mxu0 0
  %2481 = vmatpush1.bf16.msra.mxu0 0
  %2482 = vmatprep.subr.bf16.mxu0 0
  %2483 = vmatpush1.bf16.msra.mxu0 0
  %2484 = vmatprep.subr.bf16.mxu0 0
  %2485 = vmatpush1.bf16.msra.mxu0 0
  %2486 = vmatprep.subr.bf16.mxu0 0
  %2487 = vmatpush1.bf16.msra.mxu0 0
  %2488 = vmatprep.subr.bf16.mxu0 0
  %2489 = vmatpush1.bf16.msra.mxu0 0
  %2490 = vmatprep.subr.bf16.mxu0 0
  %2491 = vmatpush1.bf16.msra.mxu0 0
  %2492 = vmatprep.subr.bf16.mxu0 0
  %2493 = vmatpush1.bf16.msra.mxu0 0
  %2494 = vmatprep.subr.bf16.mxu0 0
  %2495 = vmatpush1.bf16.msra.mxu0 0
  %2496 = vmatprep.mubr.bf16.mxu0 0
  %2497 = vmatmul.mubr.bf16.gmra.mrb[0].mxu0 %v2422
  %v2498 = vpop.f32.mrb[0].mxu0
  %v2499 = vadd.f32 0.0, %v2498
  %v2500 = vpop.f32.mrb[0].mxu0
  %v2501 = vadd.f32 0.0, %v2500
  %v2502 = vpop.f32.mrb[0].mxu0
  %v2503 = vpop.f32.mrb[0].mxu0
  %2504 = vdwg.mxu0
  %v2505 = vadd.f32 %v2418, %v2458
  %v2506 = vadd.f32 %v2419, %v2460
  %v2507 = vadd.f32 %v2420, %v2499
  %v2508 = vadd.f32 %v2421, %v2501
  %v2509 = vld [vmem:[#allocation3 + $0x80] sm:$0xff]
  %v2510 = vld [vmem:[#allocation3 + $0x88] sm:$0xff]
  %v2511 = vld [vmem:[#allocation3 + $0x90] sm:$0xff]
  %v2512 = vld [vmem:[#allocation3 + $0x98] sm:$0xff]
  %v2513 = vpack.c.bf16 %v2416, %v2416
  %2514 = vmatprep.subr.bf16.mxu0 %v1467
  %2515 = vmatpush1.bf16.msra.mxu0 %v1466
  %2516 = vmatprep.subr.bf16.mxu0 %v1471
  %2517 = vmatpush1.bf16.msra.mxu0 %v1470
  %2518 = vmatprep.subr.bf16.mxu0 %v1475
  %2519 = vmatpush1.bf16.msra.mxu0 %v1474
  %2520 = vmatprep.subr.bf16.mxu0 %v1479
  %2521 = vmatpush1.bf16.msra.mxu0 %v1478
  %2522 = vmatprep.subr.bf16.mxu0 %v1483
  %2523 = vmatpush1.bf16.msra.mxu0 %v1482
  %2524 = vmatprep.subr.bf16.mxu0 %v1487
  %2525 = vmatpush1.bf16.msra.mxu0 %v1486
  %2526 = vmatprep.subr.bf16.mxu0 %v1491
  %2527 = vmatpush1.bf16.msra.mxu0 %v1490
  %2528 = vmatprep.subr.bf16.mxu0 %v1495
  %2529 = vmatpush1.bf16.msra.mxu0 %v1494
  %2530 = vmatprep.subr.bf16.mxu0 0
  %2531 = vmatpush1.bf16.msra.mxu0 0
  %2532 = vmatprep.subr.bf16.mxu0 0
  %2533 = vmatpush1.bf16.msra.mxu0 0
  %2534 = vmatprep.subr.bf16.mxu0 0
  %2535 = vmatpush1.bf16.msra.mxu0 0
  %2536 = vmatprep.subr.bf16.mxu0 0
  %2537 = vmatpush1.bf16.msra.mxu0 0
  %2538 = vmatprep.subr.bf16.mxu0 0
  %2539 = vmatpush1.bf16.msra.mxu0 0
  %2540 = vmatprep.subr.bf16.mxu0 0
  %2541 = vmatpush1.bf16.msra.mxu0 0
  %2542 = vmatprep.subr.bf16.mxu0 0
  %2543 = vmatpush1.bf16.msra.mxu0 0
  %2544 = vmatprep.subr.bf16.mxu0 0
  %2545 = vmatpush1.bf16.msra.mxu0 0
  %2546 = vmatprep.mubr.bf16.mxu0 0
  %2547 = vmatmul.mubr.bf16.gmra.mrb[0].mxu0 %v2513
  %v2548 = vpop.f32.mrb[0].mxu0
  %v2549 = vadd.f32 0.0, %v2548
  %v2550 = vpop.f32.mrb[0].mxu0
  %v2551 = vadd.f32 0.0, %v2550
  %v2552 = vpop.f32.mrb[0].mxu0
  %v2553 = vpop.f32.mrb[0].mxu0
  %2554 = vdwg.mxu0
  %2555 = vmatprep.subr.bf16.mxu0 %v1469
  %2556 = vmatpush1.bf16.msra.mxu0 %v1468
  %2557 = vmatprep.subr.bf16.mxu0 %v1473
  %2558 = vmatpush1.bf16.msra.mxu0 %v1472
  %2559 = vmatprep.subr.bf16.mxu0 %v1477
  %2560 = vmatpush1.bf16.msra.mxu0 %v1476
  %2561 = vmatprep.subr.bf16.mxu0 %v1481
  %2562 = vmatpush1.bf16.msra.mxu0 %v1480
  %2563 = vmatprep.subr.bf16.mxu0 %v1485
  %2564 = vmatpush1.bf16.msra.mxu0 %v1484
  %2565 = vmatprep.subr.bf16.mxu0 %v1489
  %2566 = vmatpush1.bf16.msra.mxu0 %v1488
  %2567 = vmatprep.subr.bf16.mxu0 %v1493
  %2568 = vmatpush1.bf16.msra.mxu0 %v1492
  %2569 = vmatprep.subr.bf16.mxu0 %v1497
  %2570 = vmatpush1.bf16.msra.mxu0 %v1496
  %2571 = vmatprep.subr.bf16.mxu0 0
  %2572 = vmatpush1.bf16.msra.mxu0 0
  %2573 = vmatprep.subr.bf16.mxu0 0
  %2574 = vmatpush1.bf16.msra.mxu0 0
  %2575 = vmatprep.subr.bf16.mxu0 0
  %2576 = vmatpush1.bf16.msra.mxu0 0
  %2577 = vmatprep.subr.bf16.mxu0 0
  %2578 = vmatpush1.bf16.msra.mxu0 0
  %2579 = vmatprep.subr.bf16.mxu0 0
  %2580 = vmatpush1.bf16.msra.mxu0 0
  %2581 = vmatprep.subr.bf16.mxu0 0
  %2582 = vmatpush1.bf16.msra.mxu0 0
  %2583 = vmatprep.subr.bf16.mxu0 0
  %2584 = vmatpush1.bf16.msra.mxu0 0
  %2585 = vmatprep.subr.bf16.mxu0 0
  %2586 = vmatpush1.bf16.msra.mxu0 0
  %2587 = vmatprep.mubr.bf16.mxu0 0
  %2588 = vmatmul.mubr.bf16.gmra.mrb[0].mxu0 %v2513
  %v2589 = vpop.f32.mrb[0].mxu0
  %v2590 = vadd.f32 0.0, %v2589
  %v2591 = vpop.f32.mrb[0].mxu0
  %v2592 = vadd.f32 0.0, %v2591
  %v2593 = vpop.f32.mrb[0].mxu0
  %v2594 = vpop.f32.mrb[0].mxu0
  %2595 = vdwg.mxu0
  %v2596 = vadd.f32 %v2509, %v2549
  %v2597 = vadd.f32 %v2510, %v2551
  %v2598 = vadd.f32 %v2511, %v2590
  %v2599 = vadd.f32 %v2512, %v2592
  %vm2600 = vcmp.gt.s32.totalorder %v1114, 4
  %v2601 = vxor.u32 %v2505, 2147483648
  %v2602 = vmul.f32 %v2601, 1.442695
  %v2603 = vpow.pop %v2602
  %v2604 = vadd.f32 %v2603, 1.0
  %v2605 = vrcp.pop %v2604
  %v2606 = vmul.f32 1.0, %v2605
  %v2607 = vxor.u32 %v2506, 2147483648
  %v2608 = vmul.f32 %v2607, 1.442695
  %v2609 = vpow.pop %v2608
  %v2610 = vadd.f32 %v2609, 1.0
  %v2611 = vrcp.pop %v2610
  %v2612 = vmul.f32 1.0, %v2611
  %v2613 = vtanh.pop %v2507
  %v2614 = vxor.u32 %v2508, 2147483648
  %v2615 = vmul.f32 %v2614, 1.442695
  %v2616 = vpow.pop %v2615
  %v2617 = vadd.f32 %v2616, 1.0
  %v2618 = vrcp.pop %v2617
  %v2619 = vmul.f32 1.0, %v2618
  %v2620 = vmul.f32 %v2612, %v2385
  %v2621 = vmul.f32 %v2606, %v2613
  %v2622 = vadd.f32 %v2620, %v2621
  %v2623 = vtanh.pop %v2622
  %v2624 = vmul.f32 %v2619, %v2623
  %v2625 = vsel %vm2600, 1, 0
  %2626 = vset.pattern.permute.xlu0 0
  %2627 = vperm.xlu0 %2626, %v2625
  %v2628 = vpop.permute.xlu0 %2627
  %vm2629 = vcmp.eq.s32.totalorder %v2628, 1
  %v2630 = vsel %vm2629, %v2624, %v2384
  %v2631 = vsel %vm2629, %v2622, %v2385
  %vm2632 = vcmp.gt.s32.totalorder %v1115, 4
  %v2633 = vxor.u32 %v2596, 2147483648
  %v2634 = vmul.f32 %v2633, 1.442695
  %v2635 = vpow.pop %v2634
  %v2636 = vadd.f32 %v2635, 1.0
  %v2637 = vrcp.pop %v2636
  %v2638 = vmul.f32 1.0, %v2637
  %v2639 = vxor.u32 %v2597, 2147483648
  %v2640 = vmul.f32 %v2639, 1.442695
  %v2641 = vpow.pop %v2640
  %v2642 = vadd.f32 %v2641, 1.0
  %v2643 = vrcp.pop %v2642
  %v2644 = vmul.f32 1.0, %v2643
  %v2645 = vtanh.pop %v2598
  %v2646 = vxor.u32 %v2599, 2147483648
  %v2647 = vmul.f32 %v2646, 1.442695
  %v2648 = vpow.pop %v2647
  %v2649 = vadd.f32 %v2648, 1.0
  %v2650 = vrcp.pop %v2649
  %v2651 = vmul.f32 1.0, %v2650
  %v2652 = vmul.f32 %v2644, %v2417
  %v2653 = vmul.f32 %v2638, %v2645
  %v2654 = vadd.f32 %v2652, %v2653
  %v2655 = vtanh.pop %v2654
  %v2656 = vmul.f32 %v2651, %v2655
  %v2657 = vsel %vm2632, 1, 0
  %2658 = vset.pattern.permute.xlu0 0
  %2659 = vperm.xlu0 %2658, %v2657
  %v2660 = vpop.permute.xlu0 %2659
  %vm2661 = vcmp.eq.s32.totalorder %v2660, 1
  %v2662 = vsel %vm2661, %v2656, %v2416
  %v2663 = vsel %vm2661, %v2654, %v2417
  %v2664 = vld [vmem:[#allocation2 + $0xa0] sm:$0xff]
  %v2665 = vld [vmem:[#allocation2 + $0xa8] sm:$0xff]
  %v2666 = vld [vmem:[#allocation2 + $0xb0] sm:$0xff]
  %v2667 = vld [vmem:[#allocation2 + $0xb8] sm:$0xff]
  %v2668 = vpack.c.bf16 %v2630, %v2630
  %2669 = vmatprep.subr.bf16.mxu0 %v1217
  %2670 = vmatpush1.bf16.msra.mxu0 %v1216
  %2671 = vmatprep.subr.bf16.mxu0 %v1221
  %2672 = vmatpush1.bf16.msra.mxu0 %v1220
  %2673 = vmatprep.subr.bf16.mxu0 %v1225
  %2674 = vmatpush1.bf16.msra.mxu0 %v1224
  %2675 = vmatprep.subr.bf16.mxu0 %v1229
  %2676 = vmatpush1.bf16.msra.mxu0 %v1228
  %2677 = vmatprep.subr.bf16.mxu0 %v1233
  %2678 = vmatpush1.bf16.msra.mxu0 %v1232
  %2679 = vmatprep.subr.bf16.mxu0 %v1237
  %2680 = vmatpush1.bf16.msra.mxu0 %v1236
  %2681 = vmatprep.subr.bf16.mxu0 %v1241
  %2682 = vmatpush1.bf16.msra.mxu0 %v1240
  %2683 = vmatprep.subr.bf16.mxu0 %v1245
  %2684 = vmatpush1.bf16.msra.mxu0 %v1244
  %2685 = vmatprep.subr.bf16.mxu0 0
  %2686 = vmatpush1.bf16.msra.mxu0 0
  %2687 = vmatprep.subr.bf16.mxu0 0
  %2688 = vmatpush1.bf16.msra.mxu0 0
  %2689 = vmatprep.subr.bf16.mxu0 0
  %2690 = vmatpush1.bf16.msra.mxu0 0
  %2691 = vmatprep.subr.bf16.mxu0 0
  %2692 = vmatpush1.bf16.msra.mxu0 0
  %2693 = vmatprep.subr.bf16.mxu0 0
  %2694 = vmatpush1.bf16.msra.mxu0 0
  %2695 = vmatprep.subr.bf16.mxu0 0
  %2696 = vmatpush1.bf16.msra.mxu0 0
  %2697 = vmatprep.subr.bf16.mxu0 0
  %2698 = vmatpush1.bf16.msra.mxu0 0
  %2699 = vmatprep.subr.bf16.mxu0 0
  %2700 = vmatpush1.bf16.msra.mxu0 0
  %2701 = vmatprep.mubr.bf16.mxu0 0
  %2702 = vmatmul.mubr.bf16.gmra.mrb[0].mxu0 %v2668
  %v2703 = vpop.f32.mrb[0].mxu0
  %v2704 = vadd.f32 0.0, %v2703
  %v2705 = vpop.f32.mrb[0].mxu0
  %v2706 = vadd.f32 0.0, %v2705
  %v2707 = vpop.f32.mrb[0].mxu0
  %v2708 = vpop.f32.mrb[0].mxu0
  %2709 = vdwg.mxu0
  %2710 = vmatprep.subr.bf16.mxu0 %v1219
  %2711 = vmatpush1.bf16.msra.mxu0 %v1218
  %2712 = vmatprep.subr.bf16.mxu0 %v1223
  %2713 = vmatpush1.bf16.msra.mxu0 %v1222
  %2714 = vmatprep.subr.bf16.mxu0 %v1227
  %2715 = vmatpush1.bf16.msra.mxu0 %v1226
  %2716 = vmatprep.subr.bf16.mxu0 %v1231
  %2717 = vmatpush1.bf16.msra.mxu0 %v1230
  %2718 = vmatprep.subr.bf16.mxu0 %v1235
  %2719 = vmatpush1.bf16.msra.mxu0 %v1234
  %2720 = vmatprep.subr.bf16.mxu0 %v1239
  %2721 = vmatpush1.bf16.msra.mxu0 %v1238
  %2722 = vmatprep.subr.bf16.mxu0 %v1243
  %2723 = vmatpush1.bf16.msra.mxu0 %v1242
  %2724 = vmatprep.subr.bf16.mxu0 %v1247
  %2725 = vmatpush1.bf16.msra.mxu0 %v1246
  %2726 = vmatprep.subr.bf16.mxu0 0
  %2727 = vmatpush1.bf16.msra.mxu0 0
  %2728 = vmatprep.subr.bf16.mxu0 0
  %2729 = vmatpush1.bf16.msra.mxu0 0
  %2730 = vmatprep.subr.bf16.mxu0 0
  %2731 = vmatpush1.bf16.msra.mxu0 0
  %2732 = vmatprep.subr.bf16.mxu0 0
  %2733 = vmatpush1.bf16.msra.mxu0 0
  %2734 = vmatprep.subr.bf16.mxu0 0
  %2735 = vmatpush1.bf16.msra.mxu0 0
  %2736 = vmatprep.subr.bf16.mxu0 0
  %2737 = vmatpush1.bf16.msra.mxu0 0
  %2738 = vmatprep.subr.bf16.mxu0 0
  %2739 = vmatpush1.bf16.msra.mxu0 0
  %2740 = vmatprep.subr.bf16.mxu0 0
  %2741 = vmatpush1.bf16.msra.mxu0 0
  %2742 = vmatprep.mubr.bf16.mxu0 0
  %2743 = vmatmul.mubr.bf16.gmra.mrb[0].mxu0 %v2668
  %v2744 = vpop.f32.mrb[0].mxu0
  %v2745 = vadd.f32 0.0, %v2744
  %v2746 = vpop.f32.mrb[0].mxu0
  %v2747 = vadd.f32 0.0, %v2746
  %v2748 = vpop.f32.mrb[0].mxu0
  %v2749 = vpop.f32.mrb[0].mxu0
  %2750 = vdwg.mxu0
  %v2751 = vadd.f32 %v2664, %v2704
  %v2752 = vadd.f32 %v2665, %v2706
  %v2753 = vadd.f32 %v2666, %v2745
  %v2754 = vadd.f32 %v2667, %v2747
  %v2755 = vld [vmem:[#allocation3 + $0xa0] sm:$0xff]
  %v2756 = vld [vmem:[#allocation3 + $0xa8] sm:$0xff]
  %v2757 = vld [vmem:[#allocation3 + $0xb0] sm:$0xff]
  %v2758 = vld [vmem:[#allocation3 + $0xb8] sm:$0xff]
  %v2759 = vpack.c.bf16 %v2662, %v2662
  %2760 = vmatprep.subr.bf16.mxu0 %v1467
  %2761 = vmatpush1.bf16.msra.mxu0 %v1466
  %2762 = vmatprep.subr.bf16.mxu0 %v1471
  %2763 = vmatpush1.bf16.msra.mxu0 %v1470
  %2764 = vmatprep.subr.bf16.mxu0 %v1475
  %2765 = vmatpush1.bf16.msra.mxu0 %v1474
  %2766 = vmatprep.subr.bf16.mxu0 %v1479
  %2767 = vmatpush1.bf16.msra.mxu0 %v1478
  %2768 = vmatprep.subr.bf16.mxu0 %v1483
  %2769 = vmatpush1.bf16.msra.mxu0 %v1482
  %2770 = vmatprep.subr.bf16.mxu0 %v1487
  %2771 = vmatpush1.bf16.msra.mxu0 %v1486
  %2772 = vmatprep.subr.bf16.mxu0 %v1491
  %2773 = vmatpush1.bf16.msra.mxu0 %v1490
  %2774 = vmatprep.subr.bf16.mxu0 %v1495
  %2775 = vmatpush1.bf16.msra.mxu0 %v1494
  %2776 = vmatprep.subr.bf16.mxu0 0
  %2777 = vmatpush1.bf16.msra.mxu0 0
  %2778 = vmatprep.subr.bf16.mxu0 0
  %2779 = vmatpush1.bf16.msra.mxu0 0
  %2780 = vmatprep.subr.bf16.mxu0 0
  %2781 = vmatpush1.bf16.msra.mxu0 0
  %2782 = vmatprep.subr.bf16.mxu0 0
  %2783 = vmatpush1.bf16.msra.mxu0 0
  %2784 = vmatprep.subr.bf16.mxu0 0
  %2785 = vmatpush1.bf16.msra.mxu0 0
  %2786 = vmatprep.subr.bf16.mxu0 0
  %2787 = vmatpush1.bf16.msra.mxu0 0
  %2788 = vmatprep.subr.bf16.mxu0 0
  %2789 = vmatpush1.bf16.msra.mxu0 0
  %2790 = vmatprep.subr.bf16.mxu0 0
  %2791 = vmatpush1.bf16.msra.mxu0 0
  %2792 = vmatprep.mubr.bf16.mxu0 0
  %2793 = vmatmul.mubr.bf16.gmra.mrb[0].mxu0 %v2759
  %v2794 = vpop.f32.mrb[0].mxu0
  %v2795 = vadd.f32 0.0, %v2794
  %v2796 = vpop.f32.mrb[0].mxu0
  %v2797 = vadd.f32 0.0, %v2796
  %v2798 = vpop.f32.mrb[0].mxu0
  %v2799 = vpop.f32.mrb[0].mxu0
  %2800 = vdwg.mxu0
  %2801 = vmatprep.subr.bf16.mxu0 %v1469
  %2802 = vmatpush1.bf16.msra.mxu0 %v1468
  %2803 = vmatprep.subr.bf16.mxu0 %v1473
  %2804 = vmatpush1.bf16.msra.mxu0 %v1472
  %2805 = vmatprep.subr.bf16.mxu0 %v1477
  %2806 = vmatpush1.bf16.msra.mxu0 %v1476
  %2807 = vmatprep.subr.bf16.mxu0 %v1481
  %2808 = vmatpush1.bf16.msra.mxu0 %v1480
  %2809 = vmatprep.subr.bf16.mxu0 %v1485
  %2810 = vmatpush1.bf16.msra.mxu0 %v1484
  %2811 = vmatprep.subr.bf16.mxu0 %v1489
  %2812 = vmatpush1.bf16.msra.mxu0 %v1488
  %2813 = vmatprep.subr.bf16.mxu0 %v1493
  %2814 = vmatpush1.bf16.msra.mxu0 %v1492
  %2815 = vmatprep.subr.bf16.mxu0 %v1497
  %2816 = vmatpush1.bf16.msra.mxu0 %v1496
  %2817 = vmatprep.subr.bf16.mxu0 0
  %2818 = vmatpush1.bf16.msra.mxu0 0
  %2819 = vmatprep.subr.bf16.mxu0 0
  %2820 = vmatpush1.bf16.msra.mxu0 0
  %2821 = vmatprep.subr.bf16.mxu0 0
  %2822 = vmatpush1.bf16.msra.mxu0 0
  %2823 = vmatprep.subr.bf16.mxu0 0
  %2824 = vmatpush1.bf16.msra.mxu0 0
  %2825 = vmatprep.subr.bf16.mxu0 0
  %2826 = vmatpush1.bf16.msra.mxu0 0
  %2827 = vmatprep.subr.bf16.mxu0 0
  %2828 = vmatpush1.bf16.msra.mxu0 0
  %2829 = vmatprep.subr.bf16.mxu0 0
  %2830 = vmatpush1.bf16.msra.mxu0 0
  %2831 = vmatprep.subr.bf16.mxu0 0
  %2832 = vmatpush1.bf16.msra.mxu0 0
  %2833 = vmatprep.mubr.bf16.mxu0 0
  %2834 = vmatmul.mubr.bf16.gmra.mrb[0].mxu0 %v2759
  %v2835 = vpop.f32.mrb[0].mxu0
  %v2836 = vadd.f32 0.0, %v2835
  %v2837 = vpop.f32.mrb[0].mxu0
  %v2838 = vadd.f32 0.0, %v2837
  %v2839 = vpop.f32.mrb[0].mxu0
  %v2840 = vpop.f32.mrb[0].mxu0
  %2841 = vdwg.mxu0
  %v2842 = vadd.f32 %v2755, %v2795
  %v2843 = vadd.f32 %v2756, %v2797
  %v2844 = vadd.f32 %v2757, %v2836
  %v2845 = vadd.f32 %v2758, %v2838
  %vm2846 = vcmp.gt.s32.totalorder %v1114, 5
  %v2847 = vxor.u32 %v2751, 2147483648
  %v2848 = vmul.f32 %v2847, 1.442695
  %v2849 = vpow.pop %v2848
  %v2850 = vadd.f32 %v2849, 1.0
  %v2851 = vrcp.pop %v2850
  %v2852 = vmul.f32 1.0, %v2851
  %v2853 = vxor.u32 %v2752, 2147483648
  %v2854 = vmul.f32 %v2853, 1.442695
  %v2855 = vpow.pop %v2854
  %v2856 = vadd.f32 %v2855, 1.0
  %v2857 = vrcp.pop %v2856
  %v2858 = vmul.f32 1.0, %v2857
  %v2859 = vtanh.pop %v2753
  %v2860 = vxor.u32 %v2754, 2147483648
  %v2861 = vmul.f32 %v2860, 1.442695
  %v2862 = vpow.pop %v2861
  %v2863 = vadd.f32 %v2862, 1.0
  %v2864 = vrcp.pop %v2863
  %v2865 = vmul.f32 1.0, %v2864
  %v2866 = vmul.f32 %v2858, %v2631
  %v2867 = vmul.f32 %v2852, %v2859
  %v2868 = vadd.f32 %v2866, %v2867
  %v2869 = vtanh.pop %v2868
  %v2870 = vmul.f32 %v2865, %v2869
  %v2871 = vsel %vm2846, 1, 0
  %2872 = vset.pattern.permute.xlu0 0
  %2873 = vperm.xlu0 %2872, %v2871
  %v2874 = vpop.permute.xlu0 %2873
  %vm2875 = vcmp.eq.s32.totalorder %v2874, 1
  %v2876 = vsel %vm2875, %v2870, %v2630
  %v2877 = vsel %vm2875, %v2868, %v2631
  %vm2878 = vcmp.gt.s32.totalorder %v1115, 5
  %v2879 = vxor.u32 %v2842, 2147483648
  %v2880 = vmul.f32 %v2879, 1.442695
  %v2881 = vpow.pop %v2880
  %v2882 = vadd.f32 %v2881, 1.0
  %v2883 = vrcp.pop %v2882
  %v2884 = vmul.f32 1.0, %v2883
  %v2885 = vxor.u32 %v2843, 2147483648
  %v2886 = vmul.f32 %v2885, 1.442695
  %v2887 = vpow.pop %v2886
  %v2888 = vadd.f32 %v2887, 1.0
  %v2889 = vrcp.pop %v2888
  %v2890 = vmul.f32 1.0, %v2889
  %v2891 = vtanh.pop %v2844
  %v2892 = vxor.u32 %v2845, 2147483648
  %v2893 = vmul.f32 %v2892, 1.442695
  %v2894 = vpow.pop %v2893
  %v2895 = vadd.f32 %v2894, 1.0
  %v2896 = vrcp.pop %v2895
  %v2897 = vmul.f32 1.0, %v2896
  %v2898 = vmul.f32 %v2890, %v2663
  %v2899 = vmul.f32 %v2884, %v2891
  %v2900 = vadd.f32 %v2898, %v2899
  %v2901 = vtanh.pop %v2900
  %v2902 = vmul.f32 %v2897, %v2901
  %v2903 = vsel %vm2878, 1, 0
  %2904 = vset.pattern.permute.xlu0 0
  %2905 = vperm.xlu0 %2904, %v2903
  %v2906 = vpop.permute.xlu0 %2905
  %vm2907 = vcmp.eq.s32.totalorder %v2906, 1
  %v2908 = vsel %vm2907, %v2902, %v2662
  %v2909 = vsel %vm2907, %v2900, %v2663
  %v2910 = vld [vmem:[#allocation2 + $0xc0] sm:$0xff]
  %v2911 = vld [vmem:[#allocation2 + $0xc8] sm:$0xff]
  %v2912 = vld [vmem:[#allocation2 + $0xd0] sm:$0xff]
  %v2913 = vld [vmem:[#allocation2 + $0xd8] sm:$0xff]
  %v2914 = vpack.c.bf16 %v2876, %v2876
  %2915 = vmatprep.subr.bf16.mxu0 %v1217
  %2916 = vmatpush1.bf16.msra.mxu0 %v1216
  %2917 = vmatprep.subr.bf16.mxu0 %v1221
  %2918 = vmatpush1.bf16.msra.mxu0 %v1220
  %2919 = vmatprep.subr.bf16.mxu0 %v1225
  %2920 = vmatpush1.bf16.msra.mxu0 %v1224
  %2921 = vmatprep.subr.bf16.mxu0 %v1229
  %2922 = vmatpush1.bf16.msra.mxu0 %v1228
  %2923 = vmatprep.subr.bf16.mxu0 %v1233
  %2924 = vmatpush1.bf16.msra.mxu0 %v1232
  %2925 = vmatprep.subr.bf16.mxu0 %v1237
  %2926 = vmatpush1.bf16.msra.mxu0 %v1236
  %2927 = vmatprep.subr.bf16.mxu0 %v1241
  %2928 = vmatpush1.bf16.msra.mxu0 %v1240
  %2929 = vmatprep.subr.bf16.mxu0 %v1245
  %2930 = vmatpush1.bf16.msra.mxu0 %v1244
  %2931 = vmatprep.subr.bf16.mxu0 0
  %2932 = vmatpush1.bf16.msra.mxu0 0
  %2933 = vmatprep.subr.bf16.mxu0 0
  %2934 = vmatpush1.bf16.msra.mxu0 0
  %2935 = vmatprep.subr.bf16.mxu0 0
  %2936 = vmatpush1.bf16.msra.mxu0 0
  %2937 = vmatprep.subr.bf16.mxu0 0
  %2938 = vmatpush1.bf16.msra.mxu0 0
  %2939 = vmatprep.subr.bf16.mxu0 0
  %2940 = vmatpush1.bf16.msra.mxu0 0
  %2941 = vmatprep.subr.bf16.mxu0 0
  %2942 = vmatpush1.bf16.msra.mxu0 0
  %2943 = vmatprep.subr.bf16.mxu0 0
  %2944 = vmatpush1.bf16.msra.mxu0 0
  %2945 = vmatprep.subr.bf16.mxu0 0
  %2946 = vmatpush1.bf16.msra.mxu0 0
  %2947 = vmatprep.mubr.bf16.mxu0 0
  %2948 = vmatmul.mubr.bf16.gmra.mrb[0].mxu0 %v2914
  %v2949 = vpop.f32.mrb[0].mxu0
  %v2950 = vadd.f32 0.0, %v2949
  %v2951 = vpop.f32.mrb[0].mxu0
  %v2952 = vadd.f32 0.0, %v2951
  %v2953 = vpop.f32.mrb[0].mxu0
  %v2954 = vpop.f32.mrb[0].mxu0
  %2955 = vdwg.mxu0
  %2956 = vmatprep.subr.bf16.mxu0 %v1219
  %2957 = vmatpush1.bf16.msra.mxu0 %v1218
  %2958 = vmatprep.subr.bf16.mxu0 %v1223
  %2959 = vmatpush1.bf16.msra.mxu0 %v1222
  %2960 = vmatprep.subr.bf16.mxu0 %v1227
  %2961 = vmatpush1.bf16.msra.mxu0 %v1226
  %2962 = vmatprep.subr.bf16.mxu0 %v1231
  %2963 = vmatpush1.bf16.msra.mxu0 %v1230
  %2964 = vmatprep.subr.bf16.mxu0 %v1235
  %2965 = vmatpush1.bf16.msra.mxu0 %v1234
  %2966 = vmatprep.subr.bf16.mxu0 %v1239
  %2967 = vmatpush1.bf16.msra.mxu0 %v1238
  %2968 = vmatprep.subr.bf16.mxu0 %v1243
  %2969 = vmatpush1.bf16.msra.mxu0 %v1242
  %2970 = vmatprep.subr.bf16.mxu0 %v1247
  %2971 = vmatpush1.bf16.msra.mxu0 %v1246
  %2972 = vmatprep.subr.bf16.mxu0 0
  %2973 = vmatpush1.bf16.msra.mxu0 0
  %2974 = vmatprep.subr.bf16.mxu0 0
  %2975 = vmatpush1.bf16.msra.mxu0 0
  %2976 = vmatprep.subr.bf16.mxu0 0
  %2977 = vmatpush1.bf16.msra.mxu0 0
  %2978 = vmatprep.subr.bf16.mxu0 0
  %2979 = vmatpush1.bf16.msra.mxu0 0
  %2980 = vmatprep.subr.bf16.mxu0 0
  %2981 = vmatpush1.bf16.msra.mxu0 0
  %2982 = vmatprep.subr.bf16.mxu0 0
  %2983 = vmatpush1.bf16.msra.mxu0 0
  %2984 = vmatprep.subr.bf16.mxu0 0
  %2985 = vmatpush1.bf16.msra.mxu0 0
  %2986 = vmatprep.subr.bf16.mxu0 0
  %2987 = vmatpush1.bf16.msra.mxu0 0
  %2988 = vmatprep.mubr.bf16.mxu0 0
  %2989 = vmatmul.mubr.bf16.gmra.mrb[0].mxu0 %v2914
  %v2990 = vpop.f32.mrb[0].mxu0
  %v2991 = vadd.f32 0.0, %v2990
  %v2992 = vpop.f32.mrb[0].mxu0
  %v2993 = vadd.f32 0.0, %v2992
  %v2994 = vpop.f32.mrb[0].mxu0
  %v2995 = vpop.f32.mrb[0].mxu0
  %2996 = vdwg.mxu0
  %v2997 = vadd.f32 %v2910, %v2950
  %v2998 = vadd.f32 %v2911, %v2952
  %v2999 = vadd.f32 %v2912, %v2991
  %v3000 = vadd.f32 %v2913, %v2993
  %v3001 = vld [vmem:[#allocation3 + $0xc0] sm:$0xff]
  %v3002 = vld [vmem:[#allocation3 + $0xc8] sm:$0xff]
  %v3003 = vld [vmem:[#allocation3 + $0xd0] sm:$0xff]
  %v3004 = vld [vmem:[#allocation3 + $0xd8] sm:$0xff]
  %v3005 = vpack.c.bf16 %v2908, %v2908
  %3006 = vmatprep.subr.bf16.mxu0 %v1467
  %3007 = vmatpush1.bf16.msra.mxu0 %v1466
  %3008 = vmatprep.subr.bf16.mxu0 %v1471
  %3009 = vmatpush1.bf16.msra.mxu0 %v1470
  %3010 = vmatprep.subr.bf16.mxu0 %v1475
  %3011 = vmatpush1.bf16.msra.mxu0 %v1474
  %3012 = vmatprep.subr.bf16.mxu0 %v1479
  %3013 = vmatpush1.bf16.msra.mxu0 %v1478
  %3014 = vmatprep.subr.bf16.mxu0 %v1483
  %3015 = vmatpush1.bf16.msra.mxu0 %v1482
  %3016 = vmatprep.subr.bf16.mxu0 %v1487
  %3017 = vmatpush1.bf16.msra.mxu0 %v1486
  %3018 = vmatprep.subr.bf16.mxu0 %v1491
  %3019 = vmatpush1.bf16.msra.mxu0 %v1490
  %3020 = vmatprep.subr.bf16.mxu0 %v1495
  %3021 = vmatpush1.bf16.msra.mxu0 %v1494
  %3022 = vmatprep.subr.bf16.mxu0 0
  %3023 = vmatpush1.bf16.msra.mxu0 0
  %3024 = vmatprep.subr.bf16.mxu0 0
  %3025 = vmatpush1.bf16.msra.mxu0 0
  %3026 = vmatprep.subr.bf16.mxu0 0
  %3027 = vmatpush1.bf16.msra.mxu0 0
  %3028 = vmatprep.subr.bf16.mxu0 0
  %3029 = vmatpush1.bf16.msra.mxu0 0
  %3030 = vmatprep.subr.bf16.mxu0 0
  %3031 = vmatpush1.bf16.msra.mxu0 0
  %3032 = vmatprep.subr.bf16.mxu0 0
  %3033 = vmatpush1.bf16.msra.mxu0 0
  %3034 = vmatprep.subr.bf16.mxu0 0
  %3035 = vmatpush1.bf16.msra.mxu0 0
  %3036 = vmatprep.subr.bf16.mxu0 0
  %3037 = vmatpush1.bf16.msra.mxu0 0
  %3038 = vmatprep.mubr.bf16.mxu0 0
  %3039 = vmatmul.mubr.bf16.gmra.mrb[0].mxu0 %v3005
  %v3040 = vpop.f32.mrb[0].mxu0
  %v3041 = vadd.f32 0.0, %v3040
  %v3042 = vpop.f32.mrb[0].mxu0
  %v3043 = vadd.f32 0.0, %v3042
  %v3044 = vpop.f32.mrb[0].mxu0
  %v3045 = vpop.f32.mrb[0].mxu0
  %3046 = vdwg.mxu0
  %3047 = vmatprep.subr.bf16.mxu0 %v1469
  %3048 = vmatpush1.bf16.msra.mxu0 %v1468
  %3049 = vmatprep.subr.bf16.mxu0 %v1473
  %3050 = vmatpush1.bf16.msra.mxu0 %v1472
  %3051 = vmatprep.subr.bf16.mxu0 %v1477
  %3052 = vmatpush1.bf16.msra.mxu0 %v1476
  %3053 = vmatprep.subr.bf16.mxu0 %v1481
  %3054 = vmatpush1.bf16.msra.mxu0 %v1480
  %3055 = vmatprep.subr.bf16.mxu0 %v1485
  %3056 = vmatpush1.bf16.msra.mxu0 %v1484
  %3057 = vmatprep.subr.bf16.mxu0 %v1489
  %3058 = vmatpush1.bf16.msra.mxu0 %v1488
  %3059 = vmatprep.subr.bf16.mxu0 %v1493
  %3060 = vmatpush1.bf16.msra.mxu0 %v1492
  %3061 = vmatprep.subr.bf16.mxu0 %v1497
  %3062 = vmatpush1.bf16.msra.mxu0 %v1496
  %3063 = vmatprep.subr.bf16.mxu0 0
  %3064 = vmatpush1.bf16.msra.mxu0 0
  %3065 = vmatprep.subr.bf16.mxu0 0
  %3066 = vmatpush1.bf16.msra.mxu0 0
  %3067 = vmatprep.subr.bf16.mxu0 0
  %3068 = vmatpush1.bf16.msra.mxu0 0
  %3069 = vmatprep.subr.bf16.mxu0 0
  %3070 = vmatpush1.bf16.msra.mxu0 0
  %3071 = vmatprep.subr.bf16.mxu0 0
  %3072 = vmatpush1.bf16.msra.mxu0 0
  %3073 = vmatprep.subr.bf16.mxu0 0
  %3074 = vmatpush1.bf16.msra.mxu0 0
  %3075 = vmatprep.subr.bf16.mxu0 0
  %3076 = vmatpush1.bf16.msra.mxu0 0
  %3077 = vmatprep.subr.bf16.mxu0 0
  %3078 = vmatpush1.bf16.msra.mxu0 0
  %3079 = vmatprep.mubr.bf16.mxu0 0
  %3080 = vmatmul.mubr.bf16.gmra.mrb[0].mxu0 %v3005
  %v3081 = vpop.f32.mrb[0].mxu0
  %v3082 = vadd.f32 0.0, %v3081
  %v3083 = vpop.f32.mrb[0].mxu0
  %v3084 = vadd.f32 0.0, %v3083
  %v3085 = vpop.f32.mrb[0].mxu0
  %v3086 = vpop.f32.mrb[0].mxu0
  %3087 = vdwg.mxu0
  %v3088 = vadd.f32 %v3001, %v3041
  %v3089 = vadd.f32 %v3002, %v3043
  %v3090 = vadd.f32 %v3003, %v3082
  %v3091 = vadd.f32 %v3004, %v3084
  %vm3092 = vcmp.gt.s32.totalorder %v1114, 6
  %v3093 = vxor.u32 %v2997, 2147483648
  %v3094 = vmul.f32 %v3093, 1.442695
  %v3095 = vpow.pop %v3094
  %v3096 = vadd.f32 %v3095, 1.0
  %v3097 = vrcp.pop %v3096
  %v3098 = vmul.f32 1.0, %v3097
  %v3099 = vxor.u32 %v2998, 2147483648
  %v3100 = vmul.f32 %v3099, 1.442695
  %v3101 = vpow.pop %v3100
  %v3102 = vadd.f32 %v3101, 1.0
  %v3103 = vrcp.pop %v3102
  %v3104 = vmul.f32 1.0, %v3103
  %v3105 = vtanh.pop %v2999
  %v3106 = vxor.u32 %v3000, 2147483648
  %v3107 = vmul.f32 %v3106, 1.442695
  %v3108 = vpow.pop %v3107
  %v3109 = vadd.f32 %v3108, 1.0
  %v3110 = vrcp.pop %v3109
  %v3111 = vmul.f32 1.0, %v3110
  %v3112 = vmul.f32 %v3104, %v2877
  %v3113 = vmul.f32 %v3098, %v3105
  %v3114 = vadd.f32 %v3112, %v3113
  %v3115 = vtanh.pop %v3114
  %v3116 = vmul.f32 %v3111, %v3115
  %v3117 = vsel %vm3092, 1, 0
  %3118 = vset.pattern.permute.xlu0 0
  %3119 = vperm.xlu0 %3118, %v3117
  %v3120 = vpop.permute.xlu0 %3119
  %vm3121 = vcmp.eq.s32.totalorder %v3120, 1
  %v3122 = vsel %vm3121, %v3116, %v2876
  %v3123 = vsel %vm3121, %v3114, %v2877
  %vm3124 = vcmp.gt.s32.totalorder %v1115, 6
  %v3125 = vxor.u32 %v3088, 2147483648
  %v3126 = vmul.f32 %v3125, 1.442695
  %v3127 = vpow.pop %v3126
  %v3128 = vadd.f32 %v3127, 1.0
  %v3129 = vrcp.pop %v3128
  %v3130 = vmul.f32 1.0, %v3129
  %v3131 = vxor.u32 %v3089, 2147483648
  %v3132 = vmul.f32 %v3131, 1.442695
  %v3133 = vpow.pop %v3132
  %v3134 = vadd.f32 %v3133, 1.0
  %v3135 = vrcp.pop %v3134
  %v3136 = vmul.f32 1.0, %v3135
  %v3137 = vtanh.pop %v3090
  %v3138 = vxor.u32 %v3091, 2147483648
  %v3139 = vmul.f32 %v3138, 1.442695
  %v3140 = vpow.pop %v3139
  %v3141 = vadd.f32 %v3140, 1.0
  %v3142 = vrcp.pop %v3141
  %v3143 = vmul.f32 1.0, %v3142
  %v3144 = vmul.f32 %v3136, %v2909
  %v3145 = vmul.f32 %v3130, %v3137
  %v3146 = vadd.f32 %v3144, %v3145
  %v3147 = vtanh.pop %v3146
  %v3148 = vmul.f32 %v3143, %v3147
  %v3149 = vsel %vm3124, 1, 0
  %3150 = vset.pattern.permute.xlu0 0
  %3151 = vperm.xlu0 %3150, %v3149
  %v3152 = vpop.permute.xlu0 %3151
  %vm3153 = vcmp.eq.s32.totalorder %v3152, 1
  %v3154 = vsel %vm3153, %v3148, %v2908
  %v3155 = vsel %vm3153, %v3146, %v2909
  %v3156 = vld [vmem:[#allocation2 + $0xe0] sm:$0xff]
  %v3157 = vld [vmem:[#allocation2 + $0xe8] sm:$0xff]
  %v3158 = vld [vmem:[#allocation2 + $0xf0] sm:$0xff]
  %v3159 = vld [vmem:[#allocation2 + $0xf8] sm:$0xff]
  %v3160 = vpack.c.bf16 %v3122, %v3122
  %3161 = vmatprep.subr.bf16.mxu0 %v1217
  %3162 = vmatpush1.bf16.msra.mxu0 %v1216
  %3163 = vmatprep.subr.bf16.mxu0 %v1221
  %3164 = vmatpush1.bf16.msra.mxu0 %v1220
  %3165 = vmatprep.subr.bf16.mxu0 %v1225
  %3166 = vmatpush1.bf16.msra.mxu0 %v1224
  %3167 = vmatprep.subr.bf16.mxu0 %v1229
  %3168 = vmatpush1.bf16.msra.mxu0 %v1228
  %3169 = vmatprep.subr.bf16.mxu0 %v1233
  %3170 = vmatpush1.bf16.msra.mxu0 %v1232
  %3171 = vmatprep.subr.bf16.mxu0 %v1237
  %3172 = vmatpush1.bf16.msra.mxu0 %v1236
  %3173 = vmatprep.subr.bf16.mxu0 %v1241
  %3174 = vmatpush1.bf16.msra.mxu0 %v1240
  %3175 = vmatprep.subr.bf16.mxu0 %v1245
  %3176 = vmatpush1.bf16.msra.mxu0 %v1244
  %3177 = vmatprep.subr.bf16.mxu0 0
  %3178 = vmatpush1.bf16.msra.mxu0 0
  %3179 = vmatprep.subr.bf16.mxu0 0
  %3180 = vmatpush1.bf16.msra.mxu0 0
  %3181 = vmatprep.subr.bf16.mxu0 0
  %3182 = vmatpush1.bf16.msra.mxu0 0
  %3183 = vmatprep.subr.bf16.mxu0 0
  %3184 = vmatpush1.bf16.msra.mxu0 0
  %3185 = vmatprep.subr.bf16.mxu0 0
  %3186 = vmatpush1.bf16.msra.mxu0 0
  %3187 = vmatprep.subr.bf16.mxu0 0
  %3188 = vmatpush1.bf16.msra.mxu0 0
  %3189 = vmatprep.subr.bf16.mxu0 0
  %3190 = vmatpush1.bf16.msra.mxu0 0
  %3191 = vmatprep.subr.bf16.mxu0 0
  %3192 = vmatpush1.bf16.msra.mxu0 0
  %3193 = vmatprep.mubr.bf16.mxu0 0
  %3194 = vmatmul.mubr.bf16.gmra.mrb[0].mxu0 %v3160
  %v3195 = vpop.f32.mrb[0].mxu0
  %v3196 = vadd.f32 0.0, %v3195
  %v3197 = vpop.f32.mrb[0].mxu0
  %v3198 = vadd.f32 0.0, %v3197
  %v3199 = vpop.f32.mrb[0].mxu0
  %v3200 = vpop.f32.mrb[0].mxu0
  %3201 = vdwg.mxu0
  %3202 = vmatprep.subr.bf16.mxu0 %v1219
  %3203 = vmatpush1.bf16.msra.mxu0 %v1218
  %3204 = vmatprep.subr.bf16.mxu0 %v1223
  %3205 = vmatpush1.bf16.msra.mxu0 %v1222
  %3206 = vmatprep.subr.bf16.mxu0 %v1227
  %3207 = vmatpush1.bf16.msra.mxu0 %v1226
  %3208 = vmatprep.subr.bf16.mxu0 %v1231
  %3209 = vmatpush1.bf16.msra.mxu0 %v1230
  %3210 = vmatprep.subr.bf16.mxu0 %v1235
  %3211 = vmatpush1.bf16.msra.mxu0 %v1234
  %3212 = vmatprep.subr.bf16.mxu0 %v1239
  %3213 = vmatpush1.bf16.msra.mxu0 %v1238
  %3214 = vmatprep.subr.bf16.mxu0 %v1243
  %3215 = vmatpush1.bf16.msra.mxu0 %v1242
  %3216 = vmatprep.subr.bf16.mxu0 %v1247
  %3217 = vmatpush1.bf16.msra.mxu0 %v1246
  %3218 = vmatprep.subr.bf16.mxu0 0
  %3219 = vmatpush1.bf16.msra.mxu0 0
  %3220 = vmatprep.subr.bf16.mxu0 0
  %3221 = vmatpush1.bf16.msra.mxu0 0
  %3222 = vmatprep.subr.bf16.mxu0 0
  %3223 = vmatpush1.bf16.msra.mxu0 0
  %3224 = vmatprep.subr.bf16.mxu0 0
  %3225 = vmatpush1.bf16.msra.mxu0 0
  %3226 = vmatprep.subr.bf16.mxu0 0
  %3227 = vmatpush1.bf16.msra.mxu0 0
  %3228 = vmatprep.subr.bf16.mxu0 0
  %3229 = vmatpush1.bf16.msra.mxu0 0
  %3230 = vmatprep.subr.bf16.mxu0 0
  %3231 = vmatpush1.bf16.msra.mxu0 0
  %3232 = vmatprep.subr.bf16.mxu0 0
  %3233 = vmatpush1.bf16.msra.mxu0 0
  %3234 = vmatprep.mubr.bf16.mxu0 0
  %3235 = vmatmul.mubr.bf16.gmra.mrb[0].mxu0 %v3160
  %v3236 = vpop.f32.mrb[0].mxu0
  %v3237 = vadd.f32 0.0, %v3236
  %v3238 = vpop.f32.mrb[0].mxu0
  %v3239 = vadd.f32 0.0, %v3238
  %v3240 = vpop.f32.mrb[0].mxu0
  %v3241 = vpop.f32.mrb[0].mxu0
  %3242 = vdwg.mxu0
  %v3243 = vadd.f32 %v3156, %v3196
  %v3244 = vadd.f32 %v3157, %v3198
  %v3245 = vadd.f32 %v3158, %v3237
  %v3246 = vadd.f32 %v3159, %v3239
  %v3247 = vld [vmem:[#allocation3 + $0xe0] sm:$0xff]
  %v3248 = vld [vmem:[#allocation3 + $0xe8] sm:$0xff]
  %v3249 = vld [vmem:[#allocation3 + $0xf0] sm:$0xff]
  %v3250 = vld [vmem:[#allocation3 + $0xf8] sm:$0xff]
  %v3251 = vpack.c.bf16 %v3154, %v3154
  %3252 = vmatprep.subr.bf16.mxu0 %v1467
  %3253 = vmatpush1.bf16.msra.mxu0 %v1466
  %3254 = vmatprep.subr.bf16.mxu0 %v1471
  %3255 = vmatpush1.bf16.msra.mxu0 %v1470
  %3256 = vmatprep.subr.bf16.mxu0 %v1475
  %3257 = vmatpush1.bf16.msra.mxu0 %v1474
  %3258 = vmatprep.subr.bf16.mxu0 %v1479
  %3259 = vmatpush1.bf16.msra.mxu0 %v1478
  %3260 = vmatprep.subr.bf16.mxu0 %v1483
  %3261 = vmatpush1.bf16.msra.mxu0 %v1482
  %3262 = vmatprep.subr.bf16.mxu0 %v1487
  %3263 = vmatpush1.bf16.msra.mxu0 %v1486
  %3264 = vmatprep.subr.bf16.mxu0 %v1491
  %3265 = vmatpush1.bf16.msra.mxu0 %v1490
  %3266 = vmatprep.subr.bf16.mxu0 %v1495
  %3267 = vmatpush1.bf16.msra.mxu0 %v1494
  %3268 = vmatprep.subr.bf16.mxu0 0
  %3269 = vmatpush1.bf16.msra.mxu0 0
  %3270 = vmatprep.subr.bf16.mxu0 0
  %3271 = vmatpush1.bf16.msra.mxu0 0
  %3272 = vmatprep.subr.bf16.mxu0 0
  %3273 = vmatpush1.bf16.msra.mxu0 0
  %3274 = vmatprep.subr.bf16.mxu0 0
  %3275 = vmatpush1.bf16.msra.mxu0 0
  %3276 = vmatprep.subr.bf16.mxu0 0
  %3277 = vmatpush1.bf16.msra.mxu0 0
  %3278 = vmatprep.subr.bf16.mxu0 0
  %3279 = vmatpush1.bf16.msra.mxu0 0
  %3280 = vmatprep.subr.bf16.mxu0 0
  %3281 = vmatpush1.bf16.msra.mxu0 0
  %3282 = vmatprep.subr.bf16.mxu0 0
  %3283 = vmatpush1.bf16.msra.mxu0 0
  %3284 = vmatprep.mubr.bf16.mxu0 0
  %3285 = vmatmul.mubr.bf16.gmra.mrb[0].mxu0 %v3251
  %v3286 = vpop.f32.mrb[0].mxu0
  %v3287 = vadd.f32 0.0, %v3286
  %v3288 = vpop.f32.mrb[0].mxu0
  %v3289 = vadd.f32 0.0, %v3288
  %v3290 = vpop.f32.mrb[0].mxu0
  %v3291 = vpop.f32.mrb[0].mxu0
  %3292 = vdwg.mxu0
  %3293 = vmatprep.subr.bf16.mxu0 %v1469
  %3294 = vmatpush1.bf16.msra.mxu0 %v1468
  %3295 = vmatprep.subr.bf16.mxu0 %v1473
  %3296 = vmatpush1.bf16.msra.mxu0 %v1472
  %3297 = vmatprep.subr.bf16.mxu0 %v1477
  %3298 = vmatpush1.bf16.msra.mxu0 %v1476
  %3299 = vmatprep.subr.bf16.mxu0 %v1481
  %3300 = vmatpush1.bf16.msra.mxu0 %v1480
  %3301 = vmatprep.subr.bf16.mxu0 %v1485
  %3302 = vmatpush1.bf16.msra.mxu0 %v1484
  %3303 = vmatprep.subr.bf16.mxu0 %v1489
  %3304 = vmatpush1.bf16.msra.mxu0 %v1488
  %3305 = vmatprep.subr.bf16.mxu0 %v1493
  %3306 = vmatpush1.bf16.msra.mxu0 %v1492
  %3307 = vmatprep.subr.bf16.mxu0 %v1497
  %3308 = vmatpush1.bf16.msra.mxu0 %v1496
  %3309 = vmatprep.subr.bf16.mxu0 0
  %3310 = vmatpush1.bf16.msra.mxu0 0
  %3311 = vmatprep.subr.bf16.mxu0 0
  %3312 = vmatpush1.bf16.msra.mxu0 0
  %3313 = vmatprep.subr.bf16.mxu0 0
  %3314 = vmatpush1.bf16.msra.mxu0 0
  %3315 = vmatprep.subr.bf16.mxu0 0
  %3316 = vmatpush1.bf16.msra.mxu0 0
  %3317 = vmatprep.subr.bf16.mxu0 0
  %3318 = vmatpush1.bf16.msra.mxu0 0
  %3319 = vmatprep.subr.bf16.mxu0 0
  %3320 = vmatpush1.bf16.msra.mxu0 0
  %3321 = vmatprep.subr.bf16.mxu0 0
  %3322 = vmatpush1.bf16.msra.mxu0 0
  %3323 = vmatprep.subr.bf16.mxu0 0
  %3324 = vmatpush1.bf16.msra.mxu0 0
  %3325 = vmatprep.mubr.bf16.mxu0 0
  %3326 = vmatmul.mubr.bf16.gmra.mrb[0].mxu0 %v3251
  %v3327 = vpop.f32.mrb[0].mxu0
  %v3328 = vadd.f32 0.0, %v3327
  %v3329 = vpop.f32.mrb[0].mxu0
  %v3330 = vadd.f32 0.0, %v3329
  %v3331 = vpop.f32.mrb[0].mxu0
  %v3332 = vpop.f32.mrb[0].mxu0
  %3333 = vdwg.mxu0
  %v3334 = vadd.f32 %v3247, %v3287
  %v3335 = vadd.f32 %v3248, %v3289
  %v3336 = vadd.f32 %v3249, %v3328
  %v3337 = vadd.f32 %v3250, %v3330
  %vm3338 = vcmp.gt.s32.totalorder %v1114, 7
  %v3339 = vxor.u32 %v3243, 2147483648
  %v3340 = vmul.f32 %v3339, 1.442695
  %v3341 = vpow.pop %v3340
  %v3342 = vadd.f32 %v3341, 1.0
  %v3343 = vrcp.pop %v3342
  %v3344 = vmul.f32 1.0, %v3343
  %v3345 = vxor.u32 %v3244, 2147483648
  %v3346 = vmul.f32 %v3345, 1.442695
  %v3347 = vpow.pop %v3346
  %v3348 = vadd.f32 %v3347, 1.0
  %v3349 = vrcp.pop %v3348
  %v3350 = vmul.f32 1.0, %v3349
  %v3351 = vtanh.pop %v3245
  %v3352 = vxor.u32 %v3246, 2147483648
  %v3353 = vmul.f32 %v3352, 1.442695
  %v3354 = vpow.pop %v3353
  %v3355 = vadd.f32 %v3354, 1.0
  %v3356 = vrcp.pop %v3355
  %v3357 = vmul.f32 1.0, %v3356
  %v3358 = vmul.f32 %v3350, %v3123
  %v3359 = vmul.f32 %v3344, %v3351
  %v3360 = vadd.f32 %v3358, %v3359
  %v3361 = vtanh.pop %v3360
  %v3362 = vmul.f32 %v3357, %v3361
  %v3363 = vsel %vm3338, 1, 0
  %3364 = vset.pattern.permute.xlu0 0
  %3365 = vperm.xlu0 %3364, %v3363
  %v3366 = vpop.permute.xlu0 %3365
  %vm3367 = vcmp.eq.s32.totalorder %v3366, 1
  %v3368 = vsel %vm3367, %v3362, %v3122
  %vm3369 = vcmp.gt.s32.totalorder %v1115, 7
  %v3370 = vxor.u32 %v3334, 2147483648
  %v3371 = vmul.f32 %v3370, 1.442695
  %v3372 = vpow.pop %v3371
  %v3373 = vadd.f32 %v3372, 1.0
  %v3374 = vrcp.pop %v3373
  %v3375 = vmul.f32 1.0, %v3374
  %v3376 = vxor.u32 %v3335, 2147483648
  %v3377 = vmul.f32 %v3376, 1.442695
  %v3378 = vpow.pop %v3377
  %v3379 = vadd.f32 %v3378, 1.0
  %v3380 = vrcp.pop %v3379
  %v3381 = vmul.f32 1.0, %v3380
  %v3382 = vtanh.pop %v3336
  %v3383 = vxor.u32 %v3337, 2147483648
  %v3384 = vmul.f32 %v3383, 1.442695
  %v3385 = vpow.pop %v3384
  %v3386 = vadd.f32 %v3385, 1.0
  %v3387 = vrcp.pop %v3386
  %v3388 = vmul.f32 1.0, %v3387
  %v3389 = vmul.f32 %v3381, %v3155
  %v3390 = vmul.f32 %v3375, %v3382
  %v3391 = vadd.f32 %v3389, %v3390
  %v3392 = vtanh.pop %v3391
  %v3393 = vmul.f32 %v3388, %v3392
  %v3394 = vsel %vm3369, 1, 0
  %3395 = vset.pattern.permute.xlu0 0
  %3396 = vperm.xlu0 %3395, %v3394
  %v3397 = vpop.permute.xlu0 %3396
  %vm3398 = vcmp.eq.s32.totalorder %v3397, 1
  %v3399 = vsel %vm3398, %v3393, %v3154
  %v3400 = vlaneseq
  %v3401 = vshrl.u32 %v3400, 7
  %v3402 = vld [vmem:[%s4] sm:$0x1]
  %v3403 = vlaneseq
  %v3404 = vshrl.u32 %v3403, 7
  %v3405 = vsub.s32 0, %v3404
  %v3406 = vrot.slane %v3402, %v3405
  %vm3407 = vcmp.eq.s32.totalorder %v3401, %v3406
  %v3408 = vsel %vm3407, 1, 0
  %v3409 = vcvt.s32.f32 %v3408
  %v3410 = vld [vmem:[%s5] sm:$0x1]
  %v3411 = vlaneseq
  %v3412 = vshrl.u32 %v3411, 7
  %v3413 = vsub.s32 0, %v3412
  %v3414 = vrot.slane %v3410, %v3413
  %vm3415 = vcmp.eq.s32.totalorder %v3401, %v3414
  %v3416 = vsel %vm3415, 1, 0
  %v3417 = vcvt.s32.f32 %v3416
  %vm3418 = vcmask 64512
  %v3420 = vsel %vm3418, %v3409, 0
  %3422 = vmatprep.subr.mxu0 0.0
  %3423 = vmatpush1.msra.mxu0 %v3368
  %3424 = vmatprep.subr.mxu0 0.0
  %3425 = vmatpush1.msra.mxu0 0.0
  %3426 = vmatprep.subr.mxu0 0.0
  %3427 = vmatpush1.msra.mxu0 0.0
  %3428 = vmatprep.subr.mxu0 0.0
  %3429 = vmatpush1.msra.mxu0 0.0
  %3430 = vmatprep.subr.mxu0 0.0
  %3431 = vmatpush1.msra.mxu0 0.0
  %3432 = vmatprep.subr.mxu0 0.0
  %3433 = vmatpush1.msra.mxu0 0.0
  %3434 = vmatprep.subr.mxu0 0.0
  %3435 = vmatpush1.msra.mxu0 0.0
  %3436 = vmatprep.subr.mxu0 0.0
  %3437 = vmatpush1.msra.mxu0 0.0
  %3438 = vmatprep.subr.mxu0 0.0
  %3439 = vmatpush1.msra.mxu0 0.0
  %3440 = vmatprep.subr.mxu0 0.0
  %3441 = vmatpush1.msra.mxu0 0.0
  %3442 = vmatprep.subr.mxu0 0.0
  %3443 = vmatpush1.msra.mxu0 0.0
  %3444 = vmatprep.subr.mxu0 0.0
  %3445 = vmatpush1.msra.mxu0 0.0
  %3446 = vmatprep.subr.mxu0 0.0
  %3447 = vmatpush1.msra.mxu0 0.0
  %3448 = vmatprep.subr.mxu0 0.0
  %3449 = vmatpush1.msra.mxu0 0.0
  %3450 = vmatprep.subr.mxu0 0.0
  %3451 = vmatpush1.msra.mxu0 0.0
  %3452 = vmatprep.subr.mxu0 0.0
  %3453 = vmatpush1.msra.mxu0 0.0
  %3454 = vmatprep.subr.mxu0 0.0
  %3455 = vmatpush1.msra.mxu0 0.0
  %3456 = vmatprep.subr.mxu0 0.0
  %3457 = vmatpush1.msra.mxu0 0.0
  %3458 = vmatprep.subr.mxu0 0.0
  %3459 = vmatpush1.msra.mxu0 0.0
  %3460 = vmatprep.subr.mxu0 0.0
  %3461 = vmatpush1.msra.mxu0 0.0
  %3462 = vmatprep.subr.mxu0 0.0
  %3463 = vmatpush1.msra.mxu0 0.0
  %3464 = vmatprep.subr.mxu0 0.0
  %3465 = vmatpush1.msra.mxu0 0.0
  %3466 = vmatprep.subr.mxu0 0.0
  %3467 = vmatpush1.msra.mxu0 0.0
  %3468 = vmatprep.subr.mxu0 0.0
  %3469 = vmatpush1.msra.mxu0 0.0
  %3470 = vmatprep.subr.mxu0 0.0
  %3471 = vmatpush1.msra.mxu0 0.0
  %3472 = vmatprep.subr.mxu0 0.0
  %3473 = vmatpush1.msra.mxu0 0.0
  %3474 = vmatprep.subr.mxu0 0.0
  %3475 = vmatpush1.msra.mxu0 0.0
  %3476 = vmatprep.subr.mxu0 0.0
  %3477 = vmatpush1.msra.mxu0 0.0
  %3478 = vmatprep.subr.mxu0 0.0
  %3479 = vmatpush1.msra.mxu0 0.0
  %3480 = vmatprep.subr.mxu0 0.0
  %3481 = vmatpush1.msra.mxu0 0.0
  %3482 = vmatprep.subr.mxu0 0.0
  %3483 = vmatpush1.msra.mxu0 0.0
  %3484 = vmatprep.subr.mxu0 0.0
  %3485 = vmatpush1.msra.mxu0 0.0
  %3486 = vmatprep.mubr.f32.mxu0 0.0
  %3487 = vmatmul.mubr.f32.gmra.mrb[0].mxu0 %v3420
  %v3488 = vpop.f32.mrb[0].mxu0
  %v3489 = vadd.f32 0.0, %v3488
  %v3490 = vpop.f32.mrb[0].mxu0
  %3491 = vdwg.mxu0
  %v3493 = vsel %vm3418, %v3417, 0
  %3495 = vmatprep.subr.mxu0 0.0
  %3496 = vmatpush1.msra.mxu0 %v3399
  %3497 = vmatprep.subr.mxu0 0.0
  %3498 = vmatpush1.msra.mxu0 0.0
  %3499 = vmatprep.subr.mxu0 0.0
  %3500 = vmatpush1.msra.mxu0 0.0
  %3501 = vmatprep.subr.mxu0 0.0
  %3502 = vmatpush1.msra.mxu0 0.0
  %3503 = vmatprep.subr.mxu0 0.0
  %3504 = vmatpush1.msra.mxu0 0.0
  %3505 = vmatprep.subr.mxu0 0.0
  %3506 = vmatpush1.msra.mxu0 0.0
  %3507 = vmatprep.subr.mxu0 0.0
  %3508 = vmatpush1.msra.mxu0 0.0
  %3509 = vmatprep.subr.mxu0 0.0
  %3510 = vmatpush1.msra.mxu0 0.0
  %3511 = vmatprep.subr.mxu0 0.0
  %3512 = vmatpush1.msra.mxu0 0.0
  %3513 = vmatprep.subr.mxu0 0.0
  %3514 = vmatpush1.msra.mxu0 0.0
  %3515 = vmatprep.subr.mxu0 0.0
  %3516 = vmatpush1.msra.mxu0 0.0
  %3517 = vmatprep.subr.mxu0 0.0
  %3518 = vmatpush1.msra.mxu0 0.0
  %3519 = vmatprep.subr.mxu0 0.0
  %3520 = vmatpush1.msra.mxu0 0.0
  %3521 = vmatprep.subr.mxu0 0.0
  %3522 = vmatpush1.msra.mxu0 0.0
  %3523 = vmatprep.subr.mxu0 0.0
  %3524 = vmatpush1.msra.mxu0 0.0
  %3525 = vmatprep.subr.mxu0 0.0
  %3526 = vmatpush1.msra.mxu0 0.0
  %3527 = vmatprep.subr.mxu0 0.0
  %3528 = vmatpush1.msra.mxu0 0.0
  %3529 = vmatprep.subr.mxu0 0.0
  %3530 = vmatpush1.msra.mxu0 0.0
  %3531 = vmatprep.subr.mxu0 0.0
  %3532 = vmatpush1.msra.mxu0 0.0
  %3533 = vmatprep.subr.mxu0 0.0
  %3534 = vmatpush1.msra.mxu0 0.0
  %3535 = vmatprep.subr.mxu0 0.0
  %3536 = vmatpush1.msra.mxu0 0.0
  %3537 = vmatprep.subr.mxu0 0.0
  %3538 = vmatpush1.msra.mxu0 0.0
  %3539 = vmatprep.subr.mxu0 0.0
  %3540 = vmatpush1.msra.mxu0 0.0
  %3541 = vmatprep.subr.mxu0 0.0
  %3542 = vmatpush1.msra.mxu0 0.0
  %3543 = vmatprep.subr.mxu0 0.0
  %3544 = vmatpush1.msra.mxu0 0.0
  %3545 = vmatprep.subr.mxu0 0.0
  %3546 = vmatpush1.msra.mxu0 0.0
  %3547 = vmatprep.subr.mxu0 0.0
  %3548 = vmatpush1.msra.mxu0 0.0
  %3549 = vmatprep.subr.mxu0 0.0
  %3550 = vmatpush1.msra.mxu0 0.0
  %3551 = vmatprep.subr.mxu0 0.0
  %3552 = vmatpush1.msra.mxu0 0.0
  %3553 = vmatprep.subr.mxu0 0.0
  %3554 = vmatpush1.msra.mxu0 0.0
  %3555 = vmatprep.subr.mxu0 0.0
  %3556 = vmatpush1.msra.mxu0 0.0
  %3557 = vmatprep.subr.mxu0 0.0
  %3558 = vmatpush1.msra.mxu0 0.0
  %3559 = vmatprep.mubr.f32.mxu0 0.0
  %3560 = vmatmul.mubr.f32.gmra.mrb[0].mxu0 %v3493
  %v3561 = vpop.f32.mrb[0].mxu0
  %v3562 = vadd.f32 0.0, %v3561
  %v3563 = vpop.f32.mrb[0].mxu0
  %3564 = vdwg.mxu0
  %v3565 = vld [vmem:[%s13] sm:$0xff]
  %v3566 = vld [vmem:[%s14] sm:$0xf]
  %v3567 = vld [vmem:[%s15] sm:$0x1]
  %v3569 = vlaneseq
  %v3570 = vshrl.u32 %v3569, 7
  %v3571 = vsub.s32 0, %v3570
  %v3572 = vrot.slane %v3567, %v3571
  %vm3574 = vcmask 31744
  %v3576 = vsel %vm3574, %v3565, 0
  %vm3578 = vcmask 1043456
  %v3580 = vsel %vm3578, %v3566, 0
  %3582 = vmatprep.subr.mxu0 0.0
  %3583 = vmatpush1.msra.mxu0 %v3580
  %3584 = vmatprep.subr.mxu0 0.0
  %3585 = vmatpush1.msra.mxu0 0.0
  %3586 = vmatprep.subr.mxu0 0.0
  %3587 = vmatpush1.msra.mxu0 0.0
  %3588 = vmatprep.subr.mxu0 0.0
  %3589 = vmatpush1.msra.mxu0 0.0
  %3590 = vmatprep.subr.mxu0 0.0
  %3591 = vmatpush1.msra.mxu0 0.0
  %3592 = vmatprep.subr.mxu0 0.0
  %3593 = vmatpush1.msra.mxu0 0.0
  %3594 = vmatprep.subr.mxu0 0.0
  %3595 = vmatpush1.msra.mxu0 0.0
  %3596 = vmatprep.subr.mxu0 0.0
  %3597 = vmatpush1.msra.mxu0 0.0
  %3598 = vmatprep.subr.mxu0 0.0
  %3599 = vmatpush1.msra.mxu0 0.0
  %3600 = vmatprep.subr.mxu0 0.0
  %3601 = vmatpush1.msra.mxu0 0.0
  %3602 = vmatprep.subr.mxu0 0.0
  %3603 = vmatpush1.msra.mxu0 0.0
  %3604 = vmatprep.subr.mxu0 0.0
  %3605 = vmatpush1.msra.mxu0 0.0
  %3606 = vmatprep.subr.mxu0 0.0
  %3607 = vmatpush1.msra.mxu0 0.0
  %3608 = vmatprep.subr.mxu0 0.0
  %3609 = vmatpush1.msra.mxu0 0.0
  %3610 = vmatprep.subr.mxu0 0.0
  %3611 = vmatpush1.msra.mxu0 0.0
  %3612 = vmatprep.subr.mxu0 0.0
  %3613 = vmatpush1.msra.mxu0 0.0
  %3614 = vmatprep.subr.mxu0 0.0
  %3615 = vmatpush1.msra.mxu0 0.0
  %3616 = vmatprep.subr.mxu0 0.0
  %3617 = vmatpush1.msra.mxu0 0.0
  %3618 = vmatprep.subr.mxu0 0.0
  %3619 = vmatpush1.msra.mxu0 0.0
  %3620 = vmatprep.subr.mxu0 0.0
  %3621 = vmatpush1.msra.mxu0 0.0
  %3622 = vmatprep.subr.mxu0 0.0
  %3623 = vmatpush1.msra.mxu0 0.0
  %3624 = vmatprep.subr.mxu0 0.0
  %3625 = vmatpush1.msra.mxu0 0.0
  %3626 = vmatprep.subr.mxu0 0.0
  %3627 = vmatpush1.msra.mxu0 0.0
  %3628 = vmatprep.subr.mxu0 0.0
  %3629 = vmatpush1.msra.mxu0 0.0
  %3630 = vmatprep.subr.mxu0 0.0
  %3631 = vmatpush1.msra.mxu0 0.0
  %3632 = vmatprep.subr.mxu0 0.0
  %3633 = vmatpush1.msra.mxu0 0.0
  %3634 = vmatprep.subr.mxu0 0.0
  %3635 = vmatpush1.msra.mxu0 0.0
  %3636 = vmatprep.subr.mxu0 0.0
  %3637 = vmatpush1.msra.mxu0 0.0
  %3638 = vmatprep.subr.mxu0 0.0
  %3639 = vmatpush1.msra.mxu0 0.0
  %3640 = vmatprep.subr.mxu0 0.0
  %3641 = vmatpush1.msra.mxu0 0.0
  %3642 = vmatprep.subr.mxu0 0.0
  %3643 = vmatpush1.msra.mxu0 0.0
  %3644 = vmatprep.subr.mxu0 0.0
  %3645 = vmatpush1.msra.mxu0 0.0
  %3646 = vmatprep.mubr.f32.mxu0 0.0
  %3647 = vmatmul.mubr.f32.gmra.mrb[0].mxu0 %v3576
  %v3648 = vpop.f32.mrb[0].mxu0
  %v3649 = vadd.f32 %v3572, %v3648
  %v3650 = vpop.f32.mrb[0].mxu0
  %3651 = vdwg.mxu0
  %s3652 = smul.u32 4, 32
  %s3653 = smul.u32 %s3652, 1
  %s3654 = sshll.u32 %s3653, 4
  %3655 = dma.done [#allocation6], %s3654
  %s3656 = smul.u32 4, 16
  %s3657 = smul.u32 %s3656, 1
  %s3658 = sshll.u32 %s3657, 4
  %3659 = dma.done %s131, %s3658
  %v3660 = vpack.c.bf16 %v3489, %v3489
  %v3661 = vpack.c.bf16 %v3649, %v3649
  %v3662 = vld [vmem:[#allocation4] sm:$0xff]
  %v3663 = vld [vmem:[#allocation4 + $0x8] sm:$0xff]
  %v3664 = vld [vmem:[#allocation4 + $0x10] sm:$0xff]
  %v3665 = vld [vmem:[#allocation4 + $0x18] sm:$0xff]
  %v3666 = vld [vmem:[#allocation4 + $0x20] sm:$0xff]
  %v3667 = vld [vmem:[#allocation4 + $0x28] sm:$0xff]
  %v3668 = vld [vmem:[#allocation4 + $0x30] sm:$0xff]
  %v3669 = vld [vmem:[#allocation4 + $0x38] sm:$0xff]
  %v3670 = vld [vmem:[#allocation4 + $0x40] sm:$0xff]
  %v3671 = vld [vmem:[#allocation4 + $0x48] sm:$0xff]
  %v3672 = vld [vmem:[#allocation4 + $0x50] sm:$0xff]
  %v3673 = vld [vmem:[#allocation4 + $0x58] sm:$0xff]
  %v3674 = vld [vmem:[#allocation4 + $0x60] sm:$0xff]
  %v3675 = vld [vmem:[#allocation4 + $0x68] sm:$0xff]
  %v3676 = vld [vmem:[#allocation4 + $0x70] sm:$0xff]
  %v3677 = vld [vmem:[#allocation4 + $0x78] sm:$0xff]
  %v3678 = vld [vmem:[%s16] sm:$0x1]
  %v3680 = vlaneseq
  %v3681 = vshrl.u32 %v3680, 7
  %v3682 = vsub.s32 0, %v3681
  %v3683 = vrot.slane %v3678, %v3682
  %3685 = vmatprep.subr.bf16.mxu0 0
  %3686 = vmatpush1.bf16.msra.mxu0 %v3662
  %3687 = vmatprep.subr.bf16.mxu0 0
  %3688 = vmatpush1.bf16.msra.mxu0 %v3663
  %3689 = vmatprep.subr.bf16.mxu0 0
  %3690 = vmatpush1.bf16.msra.mxu0 %v3664
  %3691 = vmatprep.subr.bf16.mxu0 0
  %3692 = vmatpush1.bf16.msra.mxu0 %v3665
  %3693 = vmatprep.subr.bf16.mxu0 0
  %3694 = vmatpush1.bf16.msra.mxu0 %v3666
  %3695 = vmatprep.subr.bf16.mxu0 0
  %3696 = vmatpush1.bf16.msra.mxu0 %v3667
  %3697 = vmatprep.subr.bf16.mxu0 0
  %3698 = vmatpush1.bf16.msra.mxu0 %v3668
  %3699 = vmatprep.subr.bf16.mxu0 0
  %3700 = vmatpush1.bf16.msra.mxu0 %v3669
  %3701 = vmatprep.subr.bf16.mxu0 0
  %3702 = vmatpush1.bf16.msra.mxu0 %v3670
  %3703 = vmatprep.subr.bf16.mxu0 0
  %3704 = vmatpush1.bf16.msra.mxu0 %v3671
  %3705 = vmatprep.subr.bf16.mxu0 0
  %3706 = vmatpush1.bf16.msra.mxu0 %v3672
  %3707 = vmatprep.subr.bf16.mxu0 0
  %3708 = vmatpush1.bf16.msra.mxu0 %v3673
  %3709 = vmatprep.subr.bf16.mxu0 0
  %3710 = vmatpush1.bf16.msra.mxu0 %v3674
  %3711 = vmatprep.subr.bf16.mxu0 0
  %3712 = vmatpush1.bf16.msra.mxu0 %v3675
  %3713 = vmatprep.subr.bf16.mxu0 0
  %3714 = vmatpush1.bf16.msra.mxu0 %v3676
  %3715 = vmatprep.subr.bf16.mxu0 0
  %3716 = vmatpush1.bf16.msra.mxu0 %v3677
  %3717 = vmatprep.mubr.bf16.mxu0 %v3661
  %3718 = vmatmul.mubr.bf16.gmra.mrb[0].mxu0 %v3660
  %v3719 = vpop.f32.mrb[0].mxu0
  %v3720 = vadd.f32 %v3683, %v3719
  %v3721 = vpop.f32.mrb[0].mxu0
  %v3722 = vpop.f32.mrb[0].mxu0
  %v3723 = vpop.f32.mrb[0].mxu0
  %3724 = vdwg.mxu0
  %v3725 = vpack.c.bf16 %v3720, %v3720
  %v3726 = vld [vmem:[#allocation5] sm:$0xff]
  %v3727 = vld [vmem:[#allocation5 + $0x8] sm:$0xff]
  %v3728 = vld [vmem:[#allocation5 + $0x10] sm:$0xff]
  %v3729 = vld [vmem:[#allocation5 + $0x18] sm:$0xff]
  %v3730 = vld [vmem:[#allocation5 + $0x20] sm:$0xff]
  %v3731 = vld [vmem:[#allocation5 + $0x28] sm:$0xff]
  %v3732 = vld [vmem:[#allocation5 + $0x30] sm:$0xff]
  %v3733 = vld [vmem:[#allocation5 + $0x38] sm:$0xff]
  %3734 = vmatprep.subr.bf16.mxu0 0
  %3735 = vmatpush1.bf16.msra.mxu0 %v3726
  %3736 = vmatprep.subr.bf16.mxu0 0
  %3737 = vmatpush1.bf16.msra.mxu0 %v3727
  %3738 = vmatprep.subr.bf16.mxu0 0
  %3739 = vmatpush1.bf16.msra.mxu0 %v3728
  %3740 = vmatprep.subr.bf16.mxu0 0
  %3741 = vmatpush1.bf16.msra.mxu0 %v3729
  %3742 = vmatprep.subr.bf16.mxu0 0
  %3743 = vmatpush1.bf16.msra.mxu0 %v3730
  %3744 = vmatprep.subr.bf16.mxu0 0
  %3745 = vmatpush1.bf16.msra.mxu0 %v3731
  %3746 = vmatprep.subr.bf16.mxu0 0
  %3747 = vmatpush1.bf16.msra.mxu0 %v3732
  %3748 = vmatprep.subr.bf16.mxu0 0
  %3749 = vmatpush1.bf16.msra.mxu0 %v3733
  %3750 = vmatprep.subr.bf16.mxu0 0
  %3751 = vmatpush1.bf16.msra.mxu0 0
  %3752 = vmatprep.subr.bf16.mxu0 0
  %3753 = vmatpush1.bf16.msra.mxu0 0
  %3754 = vmatprep.subr.bf16.mxu0 0
  %3755 = vmatpush1.bf16.msra.mxu0 0
  %3756 = vmatprep.subr.bf16.mxu0 0
  %3757 = vmatpush1.bf16.msra.mxu0 0
  %3758 = vmatprep.subr.bf16.mxu0 0
  %3759 = vmatpush1.bf16.msra.mxu0 0
  %3760 = vmatprep.subr.bf16.mxu0 0
  %3761 = vmatpush1.bf16.msra.mxu0 0
  %3762 = vmatprep.subr.bf16.mxu0 0
  %3763 = vmatpush1.bf16.msra.mxu0 0
  %3764 = vmatprep.subr.bf16.mxu0 0
  %3765 = vmatpush1.bf16.msra.mxu0 0
  %3766 = vmatprep.mubr.bf16.mxu0 0
  %3767 = vmatmul.mubr.bf16.gmra.mrb[0].mxu0 %v3725
  %v3768 = vpop.f32.mrb[0].mxu0
  %v3769 = vadd.f32 0.0, %v3768
  %v3770 = vpop.f32.mrb[0].mxu0
  %v3771 = vpop.f32.mrb[0].mxu0
  %v3772 = vpop.f32.mrb[0].mxu0
  %3773 = vdwg.mxu0
  %v3774 = vmul.f32 %v3769, %v3562
  %3775 = vadd.xlane.f32.xlu0 %v3774
  %v3776 = vpop.xlane.xlu0 %3775
  %v3777 = vxor.u32 %v3776, 2147483648
  %v3778 = vmul.f32 %v3777, 1.442695
  %v3779 = vpow.pop %v3778
  %v3780 = vadd.f32 %v3779, 1.0
  %v3781 = vrcp.pop %v3780
  %v3782 = vmul.f32 1.0, %v3781
  %vm3783 = vcmask 7168
  %3784 = vst.msk [vmem:[%s19] sm:$0xff] %vm3783, %v3782
  // Predicated region
  $region138: #{text_image_lstm_encoder_forward.1} parent=0 // pred_check
    _
  $region139: #{text_image_lstm_encoder_forward.1} parent=0 // pred_check_branch
    %3786 = sbr.rel (0) target = $region141
  $region140: #{text_image_lstm_encoder_forward.1} parent=0 // pred_region
    _
  $region141: #{text_image_lstm_encoder_forward.1} parent=0 // pred_fallthru
    _
  // Predicated region
  $region142: #{text_image_lstm_encoder_forward.1} parent=0 // pred_check
    _
  $region143: #{text_image_lstm_encoder_forward.1} parent=0 // pred_check_branch
    %3788 = sbr.rel (0) target = $region145
  $region144: #{text_image_lstm_encoder_forward.1} parent=0 // pred_region
    _
  $region145: #{text_image_lstm_encoder_forward.1} parent=0 // pred_fallthru
    _
  %3789 = vsyncmov [#allocation6]
  %s3790 = vpop.sfrf %3789
  %p3791 = scmp.eq.s32.totalorder %s3790, 0
  %p3792 = pneg %p3791
  %3794 = shalt.err (%p3792)
  %s3795 = scalar_lea.sflag [#allocation6], 1
  %3796 = vsyncmov %s3795
  %s3797 = vpop.sfrf %3796
  %p3798 = scmp.eq.s32.totalorder %s3797, 0
  %p3799 = pneg %p3798
  %3801 = shalt.err (%p3799)

</llo_original>
